<compile_context>
chip_gen: v7x
topology: tpu7x:2x2x1
jax: 0.10.0
libtpu: 0.0.40
codegen_flags: <defaults>
</compile_context>

<pallas_src>
import functools

import jax
import jax.numpy as jnp
from jax.experimental import pallas as pl
from jax.experimental.pallas import tpu as pltpu

_EPS = 1e-5  # torch.nn.LayerNorm default


# ----------------------------------------------------------------------------- helpers
def _round_up(x, m):
    return ((x + m - 1) // m) * m


def _pick_divisor(total, target):
    t = max(1, min(int(target), int(total)))
    while total % t:
        t -= 1
    return t


# ----------------------------------------------------------------------------- kernels
def _norm_proj_kernel(x_ref, g_ref, b_ref,
                      wlv_ref, wrv_ref, wlg_ref, wrg_ref, wog_ref,
                      left_ref, right_ref, gate_ref):
    """LayerNorm(dim) + 5 projections + GLU / sigmoid gating, per row-block."""
    x = x_ref[...].astype(jnp.float32)
    mean = jnp.mean(x, axis=-1, keepdims=True)
    xc = x - mean
    var = jnp.mean(xc * xc, axis=-1, keepdims=True)
    xn32 = xc * jax.lax.rsqrt(var + _EPS) * g_ref[...] + b_ref[...]

    # Feed the MXU in the weight dtype (bf16-friendly); accumulate in f32.
    xn = xn32.astype(wlv_ref.dtype)
    lv = jnp.dot(xn, wlv_ref[...], preferred_element_type=jnp.float32)
    rv = jnp.dot(xn, wrv_ref[...], preferred_element_type=jnp.float32)
    lg = jnp.dot(xn, wlg_ref[...], preferred_element_type=jnp.float32)
    rg = jnp.dot(xn, wrg_ref[...], preferred_element_type=jnp.float32)
    og = jnp.dot(xn, wog_ref[...], preferred_element_type=jnp.float32)

    left_ref[...] = (lv * jax.nn.sigmoid(lg)).astype(left_ref.dtype)
    right_ref[...] = (rv * jax.nn.sigmoid(rg)).astype(right_ref.dtype)
    gate_ref[...] = jax.nn.sigmoid(og).astype(gate_ref.dtype)


def _mix_kernel(a_ref, b_ref, o_ref):
    """Batched plain matmul over a block of feature channels:
       o[g, i, j] = sum_k a[g, i, k] * b[g, k, j]   (one (n,n)@(n,n) per channel)."""
    o_ref[...] = jax.lax.dot_general(
        a_ref[...], b_ref[...],
        dimension_numbers=(((2,), (1,)), ((0,), (0,))),
        preferred_element_type=jnp.float32,
    ).astype(o_ref.dtype)


def _out_norm_gate_proj_kernel(y_ref, gate_ref, g_ref, b_ref, wout_ref, o_ref):
    """LayerNorm(dh) + output gate + final projection, per row-block."""
    y = y_ref[...].astype(jnp.float32)
    mean = jnp.mean(y, axis=-1, keepdims=True)
    yc = y - mean
    var = jnp.mean(yc * yc, axis=-1, keepdims=True)
    yn = yc * jax.lax.rsqrt(var + _EPS) * g_ref[...] + b_ref[...]
    yg = (yn * gate_ref[...].astype(jnp.float32)).astype(wout_ref.dtype)
    o_ref[...] = jnp.dot(yg, wout_ref[...],
                         preferred_element_type=jnp.float32).astype(o_ref.dtype)


# ----------------------------------------------------------------------------- wrapper
def triangle_multiplication(x, params, *, mask=None, mix="incoming",
                            tile_m=256, tile_g=None):
    """x: (b, n, n, dim) pairwise representation.  Weights are pre-transposed
    relative to torch.nn.Linear (y = x @ W)."""
    b, n_i, n_j, dim = x.shape
    assert n_i == n_j, "pairwise input (b, n, n, dim) expected"
    n = n_i
    dh = params["w_og"].shape[1]
    dtype = x.dtype
    itemsize = jnp.dtype(dtype).itemsize

    # Split W_lr (dim, 4*dh) into the four (dim, dh) pieces implied by GLU + chunk:
    #   left  = h[:, :dh]       * sigmoid(h[:, 2dh:3dh])
    #   right = h[:, dh:2dh]    * sigmoid(h[:, 3dh:4dh])
    w_lr = params["w_lr"]
    w_lv, w_rv = w_lr[:, :dh], w_lr[:, dh:2 * dh]
    w_lg, w_rg = w_lr[:, 2 * dh:3 * dh], w_lr[:, 3 * dh:]
    w_og, w_out = params["w_og"], params["w_out"]

    g1 = params["norm_gamma"].reshape(1, dim).astype(jnp.float32)
    b1 = params["norm_beta"].reshape(1, dim).astype(jnp.float32)
    g2 = params["onorm_gamma"].reshape(1, dh).astype(jnp.float32)
    b2 = params["onorm_beta"].reshape(1, dh).astype(jnp.float32)

    M = b * n * n
    tm = max(8, (min(tile_m, _round_up(M, 8)) // 8) * 8)
    M_pad = _round_up(M, tm)
    pad_rows = M_pad - M

    x2d = x.reshape(M, dim)
    if pad_rows:
        # TODO(synk): replace zero-padding of the ragged last tile with an in-kernel mask.
        x2d = jnp.pad(x2d, ((0, pad_rows), (0, 0)))

    cparams = pltpu.CompilerParams(
        dimension_semantics=("parallel",),
        vmem_limit_bytes=48 * 1024 * 1024,
    )

    # ---- Kernel 1: LayerNorm + projections ---------------------------------
    cost1 = pl.CostEstimate(
        flops=2 * M_pad * dim * dh * 5,
        transcendentals=3 * M_pad * dh,
        bytes_accessed=itemsize * (M_pad * dim + 5 * dim * dh + 3 * M_pad * dh) + 8 * dim,
    )
    left2d, right2d, gate2d = pl.pallas_call(
        _norm_proj_kernel,
        out_shape=(
            jax.ShapeDtypeStruct((M_pad, dh), dtype),
            jax.ShapeDtypeStruct((M_pad, dh), dtype),
            jax.ShapeDtypeStruct((M_pad, dh), dtype),
        ),
        grid_spec=pltpu.PrefetchScalarGridSpec(
            num_scalar_prefetch=0,
            grid=(M_pad // tm,),
            in_specs=[
                pl.BlockSpec((tm, dim), lambda i: (i, 0)),
                pl.BlockSpec((1, dim), lambda i: (0, 0)),
                pl.BlockSpec((1, dim), lambda i: (0, 0)),
                pl.BlockSpec((dim, dh), lambda i: (0, 0)),
                pl.BlockSpec((dim, dh), lambda i: (0, 0)),
                pl.BlockSpec((dim, dh), lambda i: (0, 0)),
                pl.BlockSpec((dim, dh), lambda i: (0, 0)),
                pl.BlockSpec((dim, dh), lambda i: (0, 0)),
            ],
            out_specs=(
                pl.BlockSpec((tm, dh), lambda i: (i, 0)),
                pl.BlockSpec((tm, dh), lambda i: (i, 0)),
                pl.BlockSpec((tm, dh), lambda i: (i, 0)),
            ),
        ),
        compiler_params=cparams,
        cost_estimate=cost1,
    )(x2d, g1, b1, w_lv, w_rv, w_lg, w_rg, w_og)

    left4 = left2d[:M].reshape(b, n, n, dh)
    right4 = right2d[:M].reshape(b, n, n, dh)

    if mask is not None:  # optional pairwise mask (plain JAX, elementwise)
        pm = (mask[:, :, None] & mask[:, None, :])[..., None].astype(left4.dtype)
        left4 = left4 * pm
        right4 = right4 * pm

    # ---- Kernel 2: triangle mix as channel-major batched matmul ------------
    if mix == "outgoing":
        # out[b,i,j,d] = sum_k left[b,i,k,d] * right[b,j,k,d]
        a_cm = jnp.transpose(left4, (0, 3, 1, 2))     # (b, dh, i, k)
        b_cm = jnp.transpose(right4, (0, 3, 2, 1))    # (b, dh, k, j)
    else:  # incoming
        # out[b,i,j,d] = sum_k left[b,k,j,d] * right[b,k,i,d]
        a_cm = jnp.transpose(right4, (0, 3, 2, 1))    # (b, dh, i, k)
        b_cm = jnp.transpose(left4, (0, 3, 1, 2))     # (b, dh, k, j)

    G = b * dh
    a_cm = a_cm.reshape(G, n, n)
    b_cm = b_cm.reshape(G, n, n)

    if tile_g is None:
        # 2 input blocks (input dtype) + 1 output block (f32), each double-buffered.
        budget = 12 * 1024 * 1024
        per_channel = n * n * (2 * itemsize + 4) * 2
        tile_g = max(1, budget // per_channel)
    tg = _pick_divisor(G, tile_g)

    cost2 = pl.CostEstimate(
        flops=2 * G * n * n * n,
        transcendentals=0,
        bytes_accessed=2 * itemsize * G * n * n + 4 * G * n * n,
    )
    mixed_cm = pl.pallas_call(
        _mix_kernel,
        out_shape=jax.ShapeDtypeStruct((G, n, n), jnp.float32),
        grid_spec=pltpu.PrefetchScalarGridSpec(
            num_scalar_prefetch=0,
            grid=(G // tg,),
            in_specs=[
                pl.BlockSpec((tg, n, n), lambda g: (g, 0, 0)),
                pl.BlockSpec((tg, n, n), lambda g: (g, 0, 0)),
            ],
            out_specs=pl.BlockSpec((tg, n, n), lambda g: (g, 0, 0)),
        ),
        compiler_params=cparams,
        cost_estimate=cost2,
    )(a_cm, b_cm)

    mixed4 = jnp.transpose(mixed_cm.reshape(b, dh, n, n), (0, 2, 3, 1))  # (b, i, j, dh)
    mixed2d = mixed4.reshape(M, dh)

    if pad_rows:
        mixed2d = jnp.pad(mixed2d, ((0, pad_rows), (0, 0)))
    gate_flat = gate2d  # already (M_pad, dh); padded rows are garbage but sliced off below

    # ---- Kernel 3: output LayerNorm + gate + final projection --------------
    cost3 = pl.CostEstimate(
        flops=2 * M_pad * dh * dim + 8 * M_pad * dh,
        transcendentals=M_pad,
        bytes_accessed=4 * M_pad * dh + itemsize * (M_pad * dh + dh * dim + M_pad * dim) + 8 * dh,
    )
    out2d = pl.pallas_call(
        _out_norm_gate_proj_kernel,
        out_shape=jax.ShapeDtypeStruct((M_pad, dim), dtype),
        grid_spec=pltpu.PrefetchScalarGridSpec(
            num_scalar_prefetch=0,
            grid=(M_pad // tm,),
            in_specs=[
                pl.BlockSpec((tm, dh), lambda i: (i, 0)),
                pl.BlockSpec((tm, dh), lambda i: (i, 0)),
                pl.BlockSpec((1, dh), lambda i: (0, 0)),
                pl.BlockSpec((1, dh), lambda i: (0, 0)),
                pl.BlockSpec((dh, dim), lambda i: (0, 0)),
            ],
            out_specs=pl.BlockSpec((tm, dim), lambda i: (i, 0)),
        ),
        compiler_params=cparams,
        cost_estimate=cost3,
    )(mixed2d, gate_flat, g2, b2, w_out)

    if pad_rows:
        out2d = out2d[:M]
    # TODO(synk): Dropout (train-mode stochastic masking) not implemented; eval = identity.
    return out2d.reshape(b, n, n, dim)


# ----------------------------------------------------------------------------- reference
def _layernorm_ref(x, gamma, beta, eps=_EPS):
    x = x.astype(jnp.float32)
    mean = jnp.mean(x, axis=-1, keepdims=True)
    var = jnp.mean(jnp.square(x - mean), axis=-1, keepdims=True)
    return (x - mean) * jax.lax.rsqrt(var + eps) * gamma + beta


def triangle_multiplication_ref(x, params, *, mix="incoming"):
    ein = functools.partial(jnp.einsum, precision=jax.lax.Precision.HIGHEST)
    dh = params["w_og"].shape[1]
    xn = _layernorm_ref(x, params["norm_gamma"], params["norm_beta"])
    h = ein("...d,de->...e", xn, params["w_lr"].astype(jnp.float32))
    value, gates = h[..., :2 * dh], h[..., 2 * dh:]
    glu = value * jax.nn.sigmoid(gates)
    left, right = glu[..., :dh], glu[..., dh:]
    if mix == "outgoing":
        out = ein("bikd,bjkd->bijd", left, right)
    else:
        out = ein("bkjd,bkid->bijd", left, right)
    out = _layernorm_ref(out, params["onorm_gamma"], params["onorm_beta"])
    gate = jax.nn.sigmoid(ein("...d,de->...e", xn, params["w_og"].astype(jnp.float32)))
    out = out * gate
    return ein("...e,ed->...d", out, params["w_out"].astype(jnp.float32)).astype(x.dtype)


# ----------------------------------------------------------------------------- test
if __name__ == "__main__":
    key = jax.random.PRNGKey(0)
    ks = jax.random.split(key, 8)

    batch, n, dim = 2, 16, 32
    dh = dim  # default dim_hidden = dim

    x = jax.random.normal(ks[0], (batch, n, n, dim), jnp.float32)
    params = dict(
        norm_gamma=1.0 + 0.1 * jax.random.normal(ks[1], (dim,), jnp.float32),
        norm_beta=0.1 * jax.random.normal(ks[2], (dim,), jnp.float32),
        w_lr=(jax.random.uniform(ks[3], (dim, 4 * dh), jnp.float32) - 0.5) * (2.0 / jnp.sqrt(dim)),
        w_og=(jax.random.uniform(ks[4], (dim, dh), jnp.float32) - 0.5) * (2.0 / jnp.sqrt(dim)),
        onorm_gamma=1.0 + 0.1 * jax.random.normal(ks[5], (dh,), jnp.float32),
        onorm_beta=0.1 * jax.random.normal(ks[6], (dh,), jnp.float32),
        w_out=(jax.random.uniform(ks[7], (dh, dim), jnp.float32) - 0.5) * (2.0 / jnp.sqrt(dh)),
    )

    for mix in ("incoming", "outgoing"):
        out = triangle_multiplication(x, params, mix=mix)
        out = jax.block_until_ready(out)
        ref = triangle_multiplication_ref(x, params, mix=mix)
        assert out.shape == (batch, n, n, dim), out.shape
        err = float(jnp.max(jnp.abs(out.astype(jnp.float32) - ref.astype(jnp.float32))))
        assert err < 2e-2, (mix, err)

    print("KERNEL_OK")
</pallas_src>

<mosaic_0001>
module attributes {stable_mosaic.version = 11 : i64} {
  func.func @_norm_proj_kernel(%arg0: i32, %arg1: memref<256x32xf32, #tpu.memory_space<vmem>>, %arg2: memref<1x32xf32, #tpu.memory_space<vmem>>, %arg3: memref<1x32xf32, #tpu.memory_space<vmem>>, %arg4: memref<32x32xf32, #tpu.memory_space<vmem>>, %arg5: memref<32x32xf32, #tpu.memory_space<vmem>>, %arg6: memref<32x32xf32, #tpu.memory_space<vmem>>, %arg7: memref<32x32xf32, #tpu.memory_space<vmem>>, %arg8: memref<32x32xf32, #tpu.memory_space<vmem>>, %arg9: memref<256x32xf32, #tpu.memory_space<vmem>>, %arg10: memref<256x32xf32, #tpu.memory_space<vmem>>, %arg11: memref<256x32xf32, #tpu.memory_space<vmem>>) attributes {dimension_semantics = [#tpu.dimension_semantics<parallel>], iteration_bounds = array<i64: 2>, scalar_prefetch = 0 : i64, scratch_operands = 0 : i64, tpu.core_type = #tpu.core_type<tc>, window_params = [{transform_indices = @transform_0, window_bounds = array<i64: 256, 32>}, {pipeline_mode = #tpu.pipeline_mode<synchronous>, transform_indices = @transform_1, window_bounds = array<i64: 1, 32>}, {pipeline_mode = #tpu.pipeline_mode<synchronous>, transform_indices = @transform_2, window_bounds = array<i64: 1, 32>}, {pipeline_mode = #tpu.pipeline_mode<synchronous>, transform_indices = @transform_3, window_bounds = array<i64: 32, 32>}, {pipeline_mode = #tpu.pipeline_mode<synchronous>, transform_indices = @transform_4, window_bounds = array<i64: 32, 32>}, {pipeline_mode = #tpu.pipeline_mode<synchronous>, transform_indices = @transform_5, window_bounds = array<i64: 32, 32>}, {pipeline_mode = #tpu.pipeline_mode<synchronous>, transform_indices = @transform_6, window_bounds = array<i64: 32, 32>}, {pipeline_mode = #tpu.pipeline_mode<synchronous>, transform_indices = @transform_7, window_bounds = array<i64: 32, 32>}, {transform_indices = @transform_8, window_bounds = array<i64: 256, 32>}, {transform_indices = @transform_9, window_bounds = array<i64: 256, 32>}, {transform_indices = @transform_10, window_bounds = array<i64: 256, 32>}]} {
    %c0 = arith.constant 0 : index
    %c0_0 = arith.constant 0 : index
    %0 = vector.load %arg1[%c0, %c0_0] : memref<256x32xf32, #tpu.memory_space<vmem>>, vector<256x32xf32>
    %cst = arith.constant dense<0.000000e+00> : vector<256xf32>
    %1 = vector.multi_reduction <add>, %0, %cst [1] : vector<256x32xf32> to vector<256xf32>
    %2 = vector.shape_cast %1 : vector<256xf32> to vector<256x1xf32>
    %cst_1 = arith.constant 3.200000e+01 : f32
    %3 = vector.broadcast %cst_1 : f32 to vector<256x1xf32>
    %4 = arith.divf %2, %3 : vector<256x1xf32>
    %5 = vector.broadcast %4 : vector<256x1xf32> to vector<256x32xf32>
    %6 = arith.subf %0, %5 : vector<256x32xf32>
    %7 = arith.mulf %6, %6 : vector<256x32xf32>
    %cst_2 = arith.constant dense<0.000000e+00> : vector<256xf32>
    %8 = vector.multi_reduction <add>, %7, %cst_2 [1] : vector<256x32xf32> to vector<256xf32>
    %9 = vector.shape_cast %8 : vector<256xf32> to vector<256x1xf32>
    %cst_3 = arith.constant 3.200000e+01 : f32
    %10 = vector.broadcast %cst_3 : f32 to vector<256x1xf32>
    %11 = arith.divf %9, %10 : vector<256x1xf32>
    %cst_4 = arith.constant 9.99999974E-6 : f32
    %12 = vector.broadcast %cst_4 : f32 to vector<256x1xf32>
    %13 = arith.addf %11, %12 : vector<256x1xf32>
    %14 = math.rsqrt %13 : vector<256x1xf32>
    %15 = vector.broadcast %14 : vector<256x1xf32> to vector<256x32xf32>
    %16 = arith.mulf %6, %15 : vector<256x32xf32>
    %c0_5 = arith.constant 0 : index
    %c0_6 = arith.constant 0 : index
    %17 = vector.load %arg2[%c0_5, %c0_6] : memref<1x32xf32, #tpu.memory_space<vmem>>, vector<1x32xf32>
    %18 = vector.broadcast %17 : vector<1x32xf32> to vector<256x32xf32>
    %19 = arith.mulf %16, %18 : vector<256x32xf32>
    %c0_7 = arith.constant 0 : index
    %c0_8 = arith.constant 0 : index
    %20 = vector.load %arg3[%c0_7, %c0_8] : memref<1x32xf32, #tpu.memory_space<vmem>>, vector<1x32xf32>
    %21 = vector.broadcast %20 : vector<1x32xf32> to vector<256x32xf32>
    %22 = arith.addf %19, %21 : vector<256x32xf32>
    %c0_9 = arith.constant 0 : index
    %c0_10 = arith.constant 0 : index
    %23 = vector.load %arg4[%c0_9, %c0_10] : memref<32x32xf32, #tpu.memory_space<vmem>>, vector<32x32xf32>
    %cst_11 = arith.constant dense<0.000000e+00> : vector<256x32xf32>
    %24 = tpu.matmul %22, %23, %cst_11 {dimension_numbers = #tpu.dot_dimension_numbers<[1], [0], [0], [1], [0, 0, 1, 1], [], []>} : vector<256x32xf32>, vector<32x32xf32>, vector<256x32xf32> -> vector<256x32xf32>
    %c0_12 = arith.constant 0 : index
    %c0_13 = arith.constant 0 : index
    %25 = vector.load %arg5[%c0_12, %c0_13] : memref<32x32xf32, #tpu.memory_space<vmem>>, vector<32x32xf32>
    %cst_14 = arith.constant dense<0.000000e+00> : vector<256x32xf32>
    %26 = tpu.matmul %22, %25, %cst_14 {dimension_numbers = #tpu.dot_dimension_numbers<[1], [0], [0], [1], [0, 0, 1, 1], [], []>} : vector<256x32xf32>, vector<32x32xf32>, vector<256x32xf32> -> vector<256x32xf32>
    %c0_15 = arith.constant 0 : index
    %c0_16 = arith.constant 0 : index
    %27 = vector.load %arg6[%c0_15, %c0_16] : memref<32x32xf32, #tpu.memory_space<vmem>>, vector<32x32xf32>
    %cst_17 = arith.constant dense<0.000000e+00> : vector<256x32xf32>
    %28 = tpu.matmul %22, %27, %cst_17 {dimension_numbers = #tpu.dot_dimension_numbers<[1], [0], [0], [1], [0, 0, 1, 1], [], []>} : vector<256x32xf32>, vector<32x32xf32>, vector<256x32xf32> -> vector<256x32xf32>
    %c0_18 = arith.constant 0 : index
    %c0_19 = arith.constant 0 : index
    %29 = vector.load %arg7[%c0_18, %c0_19] : memref<32x32xf32, #tpu.memory_space<vmem>>, vector<32x32xf32>
    %cst_20 = arith.constant dense<0.000000e+00> : vector<256x32xf32>
    %30 = tpu.matmul %22, %29, %cst_20 {dimension_numbers = #tpu.dot_dimension_numbers<[1], [0], [0], [1], [0, 0, 1, 1], [], []>} : vector<256x32xf32>, vector<32x32xf32>, vector<256x32xf32> -> vector<256x32xf32>
    %c0_21 = arith.constant 0 : index
    %c0_22 = arith.constant 0 : index
    %31 = vector.load %arg8[%c0_21, %c0_22] : memref<32x32xf32, #tpu.memory_space<vmem>>, vector<32x32xf32>
    %cst_23 = arith.constant dense<0.000000e+00> : vector<256x32xf32>
    %32 = tpu.matmul %22, %31, %cst_23 {dimension_numbers = #tpu.dot_dimension_numbers<[1], [0], [0], [1], [0, 0, 1, 1], [], []>} : vector<256x32xf32>, vector<32x32xf32>, vector<256x32xf32> -> vector<256x32xf32>
    %33 = arith.negf %28 : vector<256x32xf32>
    %34 = math.exp %33 : vector<256x32xf32>
    %cst_24 = arith.constant 1.000000e+00 : f32
    %35 = vector.broadcast %cst_24 : f32 to vector<256x32xf32>
    %36 = arith.addf %35, %34 : vector<256x32xf32>
    %37 = arith.divf %35, %36 : vector<256x32xf32>
    %38 = arith.mulf %24, %37 : vector<256x32xf32>
    %c0_25 = arith.constant 0 : index
    %c0_26 = arith.constant 0 : index
    %39 = vector.load %arg9[%c0_25, %c0_26] : memref<256x32xf32, #tpu.memory_space<vmem>>, vector<256x32xf32>
    tpu.vector_store %arg9[%c0_25, %c0_26], %38 {strides = array<i32>} : memref<256x32xf32, #tpu.memory_space<vmem>>, vector<256x32xf32>,
    %40 = arith.negf %30 : vector<256x32xf32>
    %41 = math.exp %40 : vector<256x32xf32>
    %cst_27 = arith.constant 1.000000e+00 : f32
    %42 = vector.broadcast %cst_27 : f32 to vector<256x32xf32>
    %43 = arith.addf %42, %41 : vector<256x32xf32>
    %44 = arith.divf %42, %43 : vector<256x32xf32>
    %45 = arith.mulf %26, %44 : vector<256x32xf32>
    %c0_28 = arith.constant 0 : index
    %c0_29 = arith.constant 0 : index
    %46 = vector.load %arg10[%c0_28, %c0_29] : memref<256x32xf32, #tpu.memory_space<vmem>>, vector<256x32xf32>
    tpu.vector_store %arg10[%c0_28, %c0_29], %45 {strides = array<i32>} : memref<256x32xf32, #tpu.memory_space<vmem>>, vector<256x32xf32>,
    %47 = arith.negf %32 : vector<256x32xf32>
    %48 = math.exp %47 : vector<256x32xf32>
    %cst_30 = arith.constant 1.000000e+00 : f32
    %49 = vector.broadcast %cst_30 : f32 to vector<256x32xf32>
    %50 = arith.addf %49, %48 : vector<256x32xf32>
    %51 = arith.divf %49, %50 : vector<256x32xf32>
    %c0_31 = arith.constant 0 : index
    %c0_32 = arith.constant 0 : index
    %52 = vector.load %arg11[%c0_31, %c0_32] : memref<256x32xf32, #tpu.memory_space<vmem>>, vector<256x32xf32>
    tpu.vector_store %arg11[%c0_31, %c0_32], %51 {strides = array<i32>} : memref<256x32xf32, #tpu.memory_space<vmem>>, vector<256x32xf32>,
    return
  }
  func.func @transform_0(%arg0: i32) -> (i32, i32) {
    %c0_i32 = arith.constant 0 : i32
    %c0_i32_0 = arith.constant 0 : i32
    return %arg0, %c0_i32 : i32, i32
  }
  func.func @transform_1(%arg0: i32) -> (i32, i32) {
    %c0_i32 = arith.constant 0 : i32
    %c0_i32_0 = arith.constant 0 : i32
    %c0_i32_1 = arith.constant 0 : i32
    return %c0_i32, %c0_i32_0 : i32, i32
  }
  func.func @transform_2(%arg0: i32) -> (i32, i32) {
    %c0_i32 = arith.constant 0 : i32
    %c0_i32_0 = arith.constant 0 : i32
    %c0_i32_1 = arith.constant 0 : i32
    return %c0_i32, %c0_i32_0 : i32, i32
  }
  func.func @transform_3(%arg0: i32) -> (i32, i32) {
    %c0_i32 = arith.constant 0 : i32
    %c0_i32_0 = arith.constant 0 : i32
    %c0_i32_1 = arith.constant 0 : i32
    return %c0_i32, %c0_i32_0 : i32, i32
  }
  func.func @transform_4(%arg0: i32) -> (i32, i32) {
    %c0_i32 = arith.constant 0 : i32
    %c0_i32_0 = arith.constant 0 : i32
    %c0_i32_1 = arith.constant 0 : i32
    return %c0_i32, %c0_i32_0 : i32, i32
  }
  func.func @transform_5(%arg0: i32) -> (i32, i32) {
    %c0_i32 = arith.constant 0 : i32
    %c0_i32_0 = arith.constant 0 : i32
    %c0_i32_1 = arith.constant 0 : i32
    return %c0_i32, %c0_i32_0 : i32, i32
  }
  func.func @transform_6(%arg0: i32) -> (i32, i32) {
    %c0_i32 = arith.constant 0 : i32
    %c0_i32_0 = arith.constant 0 : i32
    %c0_i32_1 = arith.constant 0 : i32
    return %c0_i32, %c0_i32_0 : i32, i32
  }
  func.func @transform_7(%arg0: i32) -> (i32, i32) {
    %c0_i32 = arith.constant 0 : i32
    %c0_i32_0 = arith.constant 0 : i32
    %c0_i32_1 = arith.constant 0 : i32
    return %c0_i32, %c0_i32_0 : i32, i32
  }
  func.func @transform_8(%arg0: i32) -> (i32, i32) {
    %c0_i32 = arith.constant 0 : i32
    %c0_i32_0 = arith.constant 0 : i32
    return %arg0, %c0_i32 : i32, i32
  }
  func.func @transform_9(%arg0: i32) -> (i32, i32) {
    %c0_i32 = arith.constant 0 : i32
    %c0_i32_0 = arith.constant 0 : i32
    return %arg0, %c0_i32 : i32, i32
  }
  func.func @transform_10(%arg0: i32) -> (i32, i32) {
    %c0_i32 = arith.constant 0 : i32
    %c0_i32_0 = arith.constant 0 : i32
    return %arg0, %c0_i32 : i32, i32
  }
}

</mosaic_0001>

<llo_original>
// kernel: tpu_custom_call.1
$region0: #{tpu_custom_call.1}
  #allocation0 [shape = 'u32[]', space=smem, size = 0x4, offset = 0x4, fixed_abs, tag = 'smem constant byte address 0x4 - core index']
  #allocation1 [shape = 'u32[144,128]{1,0:T(1,128)}', space=vmem, size = 0x12000, scoped, tag = 'internal scratch']
  %s0 = inlined_call_operand.vmem [shape: f32[512,32], index: 0, kind: input, shape index: {}]
  %s1 = inlined_call_operand.vmem [shape: f32[1,32], index: 1, kind: input, shape index: {}]
  %s2 = inlined_call_operand.vmem [shape: f32[1,32], index: 2, kind: input, shape index: {}]
  %s3 = inlined_call_operand.vmem [shape: f32[32,32], index: 3, kind: input, shape index: {}]
  %s4 = inlined_call_operand.vmem [shape: f32[32,32], index: 4, kind: input, shape index: {}]
  %s5 = inlined_call_operand.vmem [shape: f32[32,32], index: 5, kind: input, shape index: {}]
  %s6 = inlined_call_operand.vmem [shape: f32[32,32], index: 6, kind: input, shape index: {}]
  %s7 = inlined_call_operand.vmem [shape: f32[32,32], index: 7, kind: input, shape index: {}]
  %s8 = inlined_call_operand.vmem [shape: f32[512,32], index: 8, kind: output, shape index: {0}]
  %s9 = inlined_call_operand.vmem [shape: f32[512,32], index: 9, kind: output, shape index: {1}]
  %s10 = inlined_call_operand.vmem [shape: f32[512,32], index: 10, kind: output, shape index: {2}]
  %11 = xla_tuple %s8, %s9, %s10
  %s12 = sld [smem:[#allocation0]]
  $region81: #{tpu_custom_call.1} parent=0
    _
  %s14 = ssub.s32 1, %s12
  %s15 = scalar_select 0, %s14, %s12
  loop: start=0, step=1, limit=4
  $region2: #{tpu_custom_call.1} parent=0 // loop_pre_header
    _
  $region3: #{tpu_custom_call.1} parent=0 // loop_header
    %s17 = sphi 0, %s21
    %p18 = scmp.ge.s32.totalorder %s17, 4
    %s27 = sphi 0, %s29
    %s30 = sphi 0, %s27
    %s31 = sphi 0, %s30
    %s47 = sphi 0, %s31
    %s51 = sphi 0, %s51
    %s53 = sphi 0, %s51
    %s54 = sphi 0, %s53
    %s68 = sphi 0, %s54
    %s72 = sphi 0, %s72
    %s74 = sphi 0, %s72
    %s75 = sphi 0, %s74
    %s89 = sphi 0, %s75
    %s93 = sphi 0, %s93
    %s95 = sphi 0, %s93
    %s96 = sphi 0, %s95
    %s110 = sphi 0, %s96
    %s114 = sphi 0, %s114
    %s116 = sphi 0, %s114
    %s117 = sphi 0, %s116
    %s131 = sphi 0, %s117
    %s135 = sphi 0, %s135
    %s137 = sphi 0, %s135
    %s138 = sphi 0, %s137
    %s152 = sphi 0, %s138
    %s156 = sphi 0, %s156
    %s158 = sphi 0, %s156
    %s159 = sphi 0, %s158
    %s173 = sphi 0, %s159
    %s177 = sphi 0, %s177
    %s179 = sphi 0, %s177
    %s180 = sphi 0, %s179
    %s194 = sphi 0, %s180
    %s200 = sphi 0, %s202
    %s203 = sphi 0, %s200
    %s204 = sphi 0, %s203
    %s220 = sphi 0, %s204
    %s226 = sphi 0, %s228
    %s229 = sphi 0, %s226
    %s230 = sphi 0, %s229
    %s246 = sphi 0, %s230
    %s252 = sphi 0, %s254
    %s255 = sphi 0, %s252
    %s256 = sphi 0, %s255
    %s272 = sphi 0, %s256
  $region4: #{tpu_custom_call.1} parent=0 // loop_header_branch
    %20 = sbr.rel (%p18) target = $region8
  $region5: #{tpu_custom_call.1} parent=0 // loop_body
    %s22 = ssub.s32 %s17, 1
    %s23 = ssub.s32 %s17, 2
    %s24 = sadd.s32 %s17, 1
    %s25 = ssub.s32 %s17, %s24
    %p26 = scmp.eq.s32.totalorder %s25, 0
    %s28 = sadd.s32 %s27, 1
    %s29 = scalar_select %p26, %s27, %s28
    %p32 = pneg %p26
    %p33 = scmp.eq.s32.totalorder %s17, 1
    %p34 = por %p32, %p33
    %p35 = scmp.ne.s32.totalorder %s27, %s30
    %p36 = scmp.eq.s32.totalorder %s17, 0
    %p37 = por %p35, %p36
    %p38 = scmp.ne.s32.totalorder %s27, %s30
    %p39 = scmp.eq.s32.totalorder %s22, 1
    %p40 = por %p38, %p39
    %p41 = scmp.ne.s32.totalorder %s30, %s31
    %p42 = scmp.eq.s32.totalorder %s22, 0
    %p43 = por %p41, %p42
    %p44 = scmp.ne.s32.totalorder %s30, %s31
    %p45 = scmp.eq.s32.totalorder %s23, 1
    %p46 = por %p44, %p45
    %p48 = scmp.ne.s32.totalorder %s31, %s47
    %p49 = scmp.eq.s32.totalorder %s23, 0
    %p50 = por %p48, %p49
    %s52 = sadd.s32 %s51, 1
    %p55 = scmp.eq.s32.totalorder %s17, 1
    %p56 = scmp.ne.s32.totalorder %s51, %s53
    %p57 = scmp.eq.s32.totalorder %s17, 0
    %p58 = por %p56, %p57
    %p59 = scmp.ne.s32.totalorder %s51, %s53
    %p60 = scmp.eq.s32.totalorder %s22, 1
    %p61 = por %p59, %p60
    %p62 = scmp.ne.s32.totalorder %s53, %s54
    %p63 = scmp.eq.s32.totalorder %s22, 0
    %p64 = por %p62, %p63
    %p65 = scmp.ne.s32.totalorder %s53, %s54
    %p66 = scmp.eq.s32.totalorder %s23, 1
    %p67 = por %p65, %p66
    %p69 = scmp.ne.s32.totalorder %s54, %s68
    %p70 = scmp.eq.s32.totalorder %s23, 0
    %p71 = por %p69, %p70
    %s73 = sadd.s32 %s72, 1
    %p76 = scmp.eq.s32.totalorder %s17, 1
    %p77 = scmp.ne.s32.totalorder %s72, %s74
    %p78 = scmp.eq.s32.totalorder %s17, 0
    %p79 = por %p77, %p78
    %p80 = scmp.ne.s32.totalorder %s72, %s74
    %p81 = scmp.eq.s32.totalorder %s22, 1
    %p82 = por %p80, %p81
    %p83 = scmp.ne.s32.totalorder %s74, %s75
    %p84 = scmp.eq.s32.totalorder %s22, 0
    %p85 = por %p83, %p84
    %p86 = scmp.ne.s32.totalorder %s74, %s75
    %p87 = scmp.eq.s32.totalorder %s23, 1
    %p88 = por %p86, %p87
    %p90 = scmp.ne.s32.totalorder %s75, %s89
    %p91 = scmp.eq.s32.totalorder %s23, 0
    %p92 = por %p90, %p91
    %s94 = sadd.s32 %s93, 1
    %p97 = scmp.eq.s32.totalorder %s17, 1
    %p98 = scmp.ne.s32.totalorder %s93, %s95
    %p99 = scmp.eq.s32.totalorder %s17, 0
    %p100 = por %p98, %p99
    %p101 = scmp.ne.s32.totalorder %s93, %s95
    %p102 = scmp.eq.s32.totalorder %s22, 1
    %p103 = por %p101, %p102
    %p104 = scmp.ne.s32.totalorder %s95, %s96
    %p105 = scmp.eq.s32.totalorder %s22, 0
    %p106 = por %p104, %p105
    %p107 = scmp.ne.s32.totalorder %s95, %s96
    %p108 = scmp.eq.s32.totalorder %s23, 1
    %p109 = por %p107, %p108
    %p111 = scmp.ne.s32.totalorder %s96, %s110
    %p112 = scmp.eq.s32.totalorder %s23, 0
    %p113 = por %p111, %p112
    %s115 = sadd.s32 %s114, 1
    %p118 = scmp.eq.s32.totalorder %s17, 1
    %p119 = scmp.ne.s32.totalorder %s114, %s116
    %p120 = scmp.eq.s32.totalorder %s17, 0
    %p121 = por %p119, %p120
    %p122 = scmp.ne.s32.totalorder %s114, %s116
    %p123 = scmp.eq.s32.totalorder %s22, 1
    %p124 = por %p122, %p123
    %p125 = scmp.ne.s32.totalorder %s116, %s117
    %p126 = scmp.eq.s32.totalorder %s22, 0
    %p127 = por %p125, %p126
    %p128 = scmp.ne.s32.totalorder %s116, %s117
    %p129 = scmp.eq.s32.totalorder %s23, 1
    %p130 = por %p128, %p129
    %p132 = scmp.ne.s32.totalorder %s117, %s131
    %p133 = scmp.eq.s32.totalorder %s23, 0
    %p134 = por %p132, %p133
    %s136 = sadd.s32 %s135, 1
    %p139 = scmp.eq.s32.totalorder %s17, 1
    %p140 = scmp.ne.s32.totalorder %s135, %s137
    %p141 = scmp.eq.s32.totalorder %s17, 0
    %p142 = por %p140, %p141
    %p143 = scmp.ne.s32.totalorder %s135, %s137
    %p144 = scmp.eq.s32.totalorder %s22, 1
    %p145 = por %p143, %p144
    %p146 = scmp.ne.s32.totalorder %s137, %s138
    %p147 = scmp.eq.s32.totalorder %s22, 0
    %p148 = por %p146, %p147
    %p149 = scmp.ne.s32.totalorder %s137, %s138
    %p150 = scmp.eq.s32.totalorder %s23, 1
    %p151 = por %p149, %p150
    %p153 = scmp.ne.s32.totalorder %s138, %s152
    %p154 = scmp.eq.s32.totalorder %s23, 0
    %p155 = por %p153, %p154
    %s157 = sadd.s32 %s156, 1
    %p160 = scmp.eq.s32.totalorder %s17, 1
    %p161 = scmp.ne.s32.totalorder %s156, %s158
    %p162 = scmp.eq.s32.totalorder %s17, 0
    %p163 = por %p161, %p162
    %p164 = scmp.ne.s32.totalorder %s156, %s158
    %p165 = scmp.eq.s32.totalorder %s22, 1
    %p166 = por %p164, %p165
    %p167 = scmp.ne.s32.totalorder %s158, %s159
    %p168 = scmp.eq.s32.totalorder %s22, 0
    %p169 = por %p167, %p168
    %p170 = scmp.ne.s32.totalorder %s158, %s159
    %p171 = scmp.eq.s32.totalorder %s23, 1
    %p172 = por %p170, %p171
    %p174 = scmp.ne.s32.totalorder %s159, %s173
    %p175 = scmp.eq.s32.totalorder %s23, 0
    %p176 = por %p174, %p175
    %s178 = sadd.s32 %s177, 1
    %p181 = scmp.eq.s32.totalorder %s17, 1
    %p182 = scmp.ne.s32.totalorder %s177, %s179
    %p183 = scmp.eq.s32.totalorder %s17, 0
    %p184 = por %p182, %p183
    %p185 = scmp.ne.s32.totalorder %s177, %s179
    %p186 = scmp.eq.s32.totalorder %s22, 1
    %p187 = por %p185, %p186
    %p188 = scmp.ne.s32.totalorder %s179, %s180
    %p189 = scmp.eq.s32.totalorder %s22, 0
    %p190 = por %p188, %p189
    %p191 = scmp.ne.s32.totalorder %s179, %s180
    %p192 = scmp.eq.s32.totalorder %s23, 1
    %p193 = por %p191, %p192
    %p195 = scmp.ne.s32.totalorder %s180, %s194
    %p196 = scmp.eq.s32.totalorder %s23, 0
    %p197 = por %p195, %p196
    %s198 = ssub.s32 %s17, %s24
    %p199 = scmp.eq.s32.totalorder %s198, 0
    %s201 = sadd.s32 %s200, 1
    %s202 = scalar_select %p199, %s200, %s201
    %p205 = pneg %p199
    %p206 = scmp.eq.s32.totalorder %s17, 1
    %p207 = por %p205, %p206
    %p208 = scmp.ne.s32.totalorder %s200, %s203
    %p209 = scmp.eq.s32.totalorder %s17, 0
    %p210 = por %p208, %p209
    %p211 = scmp.ne.s32.totalorder %s200, %s203
    %p212 = scmp.eq.s32.totalorder %s22, 1
    %p213 = por %p211, %p212
    %p214 = scmp.ne.s32.totalorder %s203, %s204
    %p215 = scmp.eq.s32.totalorder %s22, 0
    %p216 = por %p214, %p215
    %p217 = scmp.ne.s32.totalorder %s203, %s204
    %p218 = scmp.eq.s32.totalorder %s23, 1
    %p219 = por %p217, %p218
    %p221 = scmp.ne.s32.totalorder %s204, %s220
    %p222 = scmp.eq.s32.totalorder %s23, 0
    %p223 = por %p221, %p222
    %s224 = ssub.s32 %s17, %s24
    %p225 = scmp.eq.s32.totalorder %s224, 0
    %s227 = sadd.s32 %s226, 1
    %s228 = scalar_select %p225, %s226, %s227
    %p231 = pneg %p225
    %p232 = scmp.eq.s32.totalorder %s17, 1
    %p233 = por %p231, %p232
    %p234 = scmp.ne.s32.totalorder %s226, %s229
    %p235 = scmp.eq.s32.totalorder %s17, 0
    %p236 = por %p234, %p235
    %p237 = scmp.ne.s32.totalorder %s226, %s229
    %p238 = scmp.eq.s32.totalorder %s22, 1
    %p239 = por %p237, %p238
    %p240 = scmp.ne.s32.totalorder %s229, %s230
    %p241 = scmp.eq.s32.totalorder %s22, 0
    %p242 = por %p240, %p241
    %p243 = scmp.ne.s32.totalorder %s229, %s230
    %p244 = scmp.eq.s32.totalorder %s23, 1
    %p245 = por %p243, %p244
    %p247 = scmp.ne.s32.totalorder %s230, %s246
    %p248 = scmp.eq.s32.totalorder %s23, 0
    %p249 = por %p247, %p248
    %s250 = ssub.s32 %s17, %s24
    %p251 = scmp.eq.s32.totalorder %s250, 0
    %s253 = sadd.s32 %s252, 1
    %s254 = scalar_select %p251, %s252, %s253
    %p257 = pneg %p251
    %p258 = scmp.eq.s32.totalorder %s17, 1
    %p259 = por %p257, %p258
    %p260 = scmp.ne.s32.totalorder %s252, %s255
    %p261 = scmp.eq.s32.totalorder %s17, 0
    %p262 = por %p260, %p261
    %p263 = scmp.ne.s32.totalorder %s252, %s255
    %p264 = scmp.eq.s32.totalorder %s22, 1
    %p265 = por %p263, %p264
    %p266 = scmp.ne.s32.totalorder %s255, %s256
    %p267 = scmp.eq.s32.totalorder %s22, 0
    %p268 = por %p266, %p267
    %p269 = scmp.ne.s32.totalorder %s255, %s256
    %p270 = scmp.eq.s32.totalorder %s23, 1
    %p271 = por %p269, %p270
    %p273 = scmp.ne.s32.totalorder %s256, %s272
    %p274 = scmp.eq.s32.totalorder %s23, 0
    %p275 = por %p273, %p274
    %p276 = scmp.le.s32.totalorder 1, %s17
    %p277 = scmp.lt.s32.totalorder %s17, 3
    %p278 = pnand %p276, %p277
    %p279 = pneg %p278
    // Predicated region
    $region9: #{tpu_custom_call.1} parent=5 // pred_check
      _
    $region10: #{tpu_custom_call.1} parent=5 // pred_check_branch
      %281 = sbr.rel (%p278) target = $region12
    $region11: #{tpu_custom_call.1} parent=5 // pred_region
      %s282 = ssub.s32 %s17, 1
      // Predicated region
      $region13: #{tpu_custom_call.1} parent=11 // pred_check
        %p283 = pneg %p64
      $region14: #{tpu_custom_call.1} parent=11 // pred_check_branch
        %285 = sbr.rel (%p283) target = $region16
      $region15: #{tpu_custom_call.1} parent=11 // pred_region
        _
      $region16: #{tpu_custom_call.1} parent=11 // pred_fallthru
        _
      // Predicated region
      $region17: #{tpu_custom_call.1} parent=11 // pred_check
        %p286 = pneg %p85
      $region18: #{tpu_custom_call.1} parent=11 // pred_check_branch
        %288 = sbr.rel (%p286) target = $region20
      $region19: #{tpu_custom_call.1} parent=11 // pred_region
        _
      $region20: #{tpu_custom_call.1} parent=11 // pred_fallthru
        _
      // Predicated region
      $region21: #{tpu_custom_call.1} parent=11 // pred_check
        %p289 = pneg %p106
      $region22: #{tpu_custom_call.1} parent=11 // pred_check_branch
        %291 = sbr.rel (%p289) target = $region24
      $region23: #{tpu_custom_call.1} parent=11 // pred_region
        _
      $region24: #{tpu_custom_call.1} parent=11 // pred_fallthru
        _
      // Predicated region
      $region25: #{tpu_custom_call.1} parent=11 // pred_check
        %p292 = pneg %p127
      $region26: #{tpu_custom_call.1} parent=11 // pred_check_branch
        %294 = sbr.rel (%p292) target = $region28
      $region27: #{tpu_custom_call.1} parent=11 // pred_region
        _
      $region28: #{tpu_custom_call.1} parent=11 // pred_fallthru
        _
      // Predicated region
      $region29: #{tpu_custom_call.1} parent=11 // pred_check
        %p295 = pneg %p148
      $region30: #{tpu_custom_call.1} parent=11 // pred_check_branch
        %297 = sbr.rel (%p295) target = $region32
      $region31: #{tpu_custom_call.1} parent=11 // pred_region
        _
      $region32: #{tpu_custom_call.1} parent=11 // pred_fallthru
        _
      // Predicated region
      $region33: #{tpu_custom_call.1} parent=11 // pred_check
        %p298 = pneg %p169
      $region34: #{tpu_custom_call.1} parent=11 // pred_check_branch
        %300 = sbr.rel (%p298) target = $region36
      $region35: #{tpu_custom_call.1} parent=11 // pred_region
        _
      $region36: #{tpu_custom_call.1} parent=11 // pred_fallthru
        _
      // Predicated region
      $region37: #{tpu_custom_call.1} parent=11 // pred_check
        %p301 = pneg %p190
      $region38: #{tpu_custom_call.1} parent=11 // pred_check_branch
        %303 = sbr.rel (%p301) target = $region40
      $region39: #{tpu_custom_call.1} parent=11 // pred_region
        _
      $region40: #{tpu_custom_call.1} parent=11 // pred_fallthru
        _
    $region12: #{tpu_custom_call.1} parent=5 // pred_fallthru
      _
    %p304 = scmp.lt.s32.totalorder %s17, 2
    // Predicated region
    $region41: #{tpu_custom_call.1} parent=5 // pred_check
      %p305 = pneg %p304
    $region42: #{tpu_custom_call.1} parent=5 // pred_check_branch
      %307 = sbr.rel (%p305) target = $region44
    $region43: #{tpu_custom_call.1} parent=5 // pred_region
      // Predicated region
      $region45: #{tpu_custom_call.1} parent=43 // pred_check
        %p308 = pneg %p37
      $region46: #{tpu_custom_call.1} parent=43 // pred_check_branch
        %310 = sbr.rel (%p308) target = $region48
      $region47: #{tpu_custom_call.1} parent=43 // pred_region
        %s311 = smul.u32 32, %s17
        %p312 = scmp.lt.s32.totalorder %s311, 63
        %s313 = scalar_select %p312, %s311, 63
        %s314 = smul.addr %s313, 8
        %s315 = scalar_lea.vmem %s0, %s314
        %s316 = smul.u32 32, %s17
      $region48: #{tpu_custom_call.1} parent=43 // pred_fallthru
        _
    $region44: #{tpu_custom_call.1} parent=5 // pred_fallthru
      _
    %p317 = scmp.le.s32.totalorder 1, %s17
    %p318 = scmp.lt.s32.totalorder %s17, 3
    %p319 = pnand %p317, %p318
    %p320 = pneg %p319
    // Predicated region
    $region49: #{tpu_custom_call.1} parent=5 // pred_check
      _
    $region50: #{tpu_custom_call.1} parent=5 // pred_check_branch
      %322 = sbr.rel (%p319) target = $region52
    $region51: #{tpu_custom_call.1} parent=5 // pred_region
      %s323 = ssub.s32 %s17, 1
      %s324 = smul.u32 32, %s22
      %p325 = scmp.lt.s32.totalorder %s324, 63
      %s326 = scalar_select %p325, %s324, 63
      %s327 = smul.addr %s326, 8
      %s328 = scalar_lea.vmem %s0, %s327
      %p329 = pneg %p43
      %p330 = pneg %p40
      %p331 = pneg %p64
      %p332 = pneg %p61
      %p333 = pneg %p85
      %p334 = pneg %p82
      %p335 = pneg %p106
      %p336 = pneg %p103
      %p337 = pneg %p127
      %p338 = pneg %p124
      %p339 = pneg %p148
      %p340 = pneg %p145
      %p341 = pneg %p169
      %p342 = pneg %p166
      %p343 = pneg %p190
      %p344 = pneg %p187
      %p345 = pneg %p216
      %p346 = pneg %p213
      %s347 = smul.u32 32, %s22
      %p348 = scmp.lt.s32.totalorder %s347, 63
      %s349 = scalar_select %p348, %s347, 63
      %s350 = smul.addr %s349, 8
      %s351 = scalar_lea.vmem %s8, %s350
      %p352 = pneg %p242
      %p353 = pneg %p239
      %s354 = smul.u32 32, %s22
      %p355 = scmp.lt.s32.totalorder %s354, 63
      %s356 = scalar_select %p355, %s354, 63
      %s357 = smul.addr %s356, 8
      %s358 = scalar_lea.vmem %s9, %s357
      %p359 = pneg %p268
      %p360 = pneg %p265
      %s361 = smul.u32 32, %s22
      %p362 = scmp.lt.s32.totalorder %s361, 63
      %s363 = scalar_select %p362, %s361, 63
      %s364 = smul.addr %s363, 8
      %s365 = scalar_lea.vmem %s10, %s364
      %s366 = smul.u32 32, %s22
      %p367 = scmp.lt.s32.totalorder %s366, 63
      %s368 = scalar_select %p367, %s366, 63
      %s369 = smul.addr %s368, 8
      %s370 = scalar_lea.vmem %s0, %s369
      %s371 = smul.u32 32, %s22
      %s372 = smul.u32 32, %s22
      %p373 = scmp.lt.s32.totalorder %s372, 63
      %s374 = scalar_select %p373, %s372, 63
      %s375 = smul.addr %s374, 8
      %s376 = scalar_lea.vmem %s8, %s375
      %s377 = smul.u32 32, %s22
      %s378 = smul.u32 32, %s22
      %p379 = scmp.lt.s32.totalorder %s378, 63
      %s380 = scalar_select %p379, %s378, 63
      %s381 = smul.addr %s380, 8
      %s382 = scalar_lea.vmem %s9, %s381
      %s383 = smul.u32 32, %s22
      %s384 = smul.u32 32, %s22
      %p385 = scmp.lt.s32.totalorder %s384, 63
      %s386 = scalar_select %p385, %s384, 63
      %s387 = smul.addr %s386, 8
      %s388 = scalar_lea.vmem %s10, %s387
      %s389 = smul.u32 32, %s22
      %v390 = vld [vmem:[%s370] sm:$0xff]
      %v391 = vld [vmem:[%s370 + $0x8] sm:$0xff]
      %v392 = vld [vmem:[%s370 + $0x10] sm:$0xff]
      %v393 = vld [vmem:[%s370 + $0x18] sm:$0xff]
      %v394 = vld [vmem:[%s370 + $0x20] sm:$0xff]
      %v395 = vld [vmem:[%s370 + $0x28] sm:$0xff]
      %v396 = vld [vmem:[%s370 + $0x30] sm:$0xff]
      %v397 = vld [vmem:[%s370 + $0x38] sm:$0xff]
      %v398 = vld [vmem:[%s370 + $0x40] sm:$0xff]
      %v399 = vld [vmem:[%s370 + $0x48] sm:$0xff]
      %v400 = vld [vmem:[%s370 + $0x50] sm:$0xff]
      %v401 = vld [vmem:[%s370 + $0x58] sm:$0xff]
      %v402 = vld [vmem:[%s370 + $0x60] sm:$0xff]
      %v403 = vld [vmem:[%s370 + $0x68] sm:$0xff]
      %v404 = vld [vmem:[%s370 + $0x70] sm:$0xff]
      %v405 = vld [vmem:[%s370 + $0x78] sm:$0xff]
      %v406 = vld [vmem:[%s370 + $0x80] sm:$0xff]
      %v407 = vld [vmem:[%s370 + $0x88] sm:$0xff]
      %v408 = vld [vmem:[%s370 + $0x90] sm:$0xff]
      %v409 = vld [vmem:[%s370 + $0x98] sm:$0xff]
      %v410 = vld [vmem:[%s370 + $0xa0] sm:$0xff]
      %v411 = vld [vmem:[%s370 + $0xa8] sm:$0xff]
      %v412 = vld [vmem:[%s370 + $0xb0] sm:$0xff]
      %v413 = vld [vmem:[%s370 + $0xb8] sm:$0xff]
      %v414 = vld [vmem:[%s370 + $0xc0] sm:$0xff]
      %v415 = vld [vmem:[%s370 + $0xc8] sm:$0xff]
      %v416 = vld [vmem:[%s370 + $0xd0] sm:$0xff]
      %v417 = vld [vmem:[%s370 + $0xd8] sm:$0xff]
      %v418 = vld [vmem:[%s370 + $0xe0] sm:$0xff]
      %v419 = vld [vmem:[%s370 + $0xe8] sm:$0xff]
      %v420 = vld [vmem:[%s370 + $0xf0] sm:$0xff]
      %v421 = vld [vmem:[%s370 + $0xf8] sm:$0xff]
      %vm422 = vcmask 261120
      %v423 = vsel %vm422, %v390, 0.0
      %424 = vadd.xlane.f32.xlu0 %v423
      %v425 = vpop.xlane.xlu0 %424
      %v426 = vsel %vm422, %v391, 0.0
      %427 = vadd.xlane.f32.xlu0 %v426
      %v428 = vpop.xlane.xlu0 %427
      %v429 = vsel %vm422, %v392, 0.0
      %430 = vadd.xlane.f32.xlu0 %v429
      %v431 = vpop.xlane.xlu0 %430
      %v432 = vsel %vm422, %v393, 0.0
      %433 = vadd.xlane.f32.xlu0 %v432
      %v434 = vpop.xlane.xlu0 %433
      %v435 = vsel %vm422, %v394, 0.0
      %436 = vadd.xlane.f32.xlu0 %v435
      %v437 = vpop.xlane.xlu0 %436
      %v438 = vsel %vm422, %v395, 0.0
      %439 = vadd.xlane.f32.xlu0 %v438
      %v440 = vpop.xlane.xlu0 %439
      %v441 = vsel %vm422, %v396, 0.0
      %442 = vadd.xlane.f32.xlu0 %v441
      %v443 = vpop.xlane.xlu0 %442
      %v444 = vsel %vm422, %v397, 0.0
      %445 = vadd.xlane.f32.xlu0 %v444
      %v446 = vpop.xlane.xlu0 %445
      %v447 = vsel %vm422, %v398, 0.0
      %448 = vadd.xlane.f32.xlu0 %v447
      %v449 = vpop.xlane.xlu0 %448
      %v450 = vsel %vm422, %v399, 0.0
      %451 = vadd.xlane.f32.xlu0 %v450
      %v452 = vpop.xlane.xlu0 %451
      %v453 = vsel %vm422, %v400, 0.0
      %454 = vadd.xlane.f32.xlu0 %v453
      %v455 = vpop.xlane.xlu0 %454
      %v456 = vsel %vm422, %v401, 0.0
      %457 = vadd.xlane.f32.xlu0 %v456
      %v458 = vpop.xlane.xlu0 %457
      %v459 = vsel %vm422, %v402, 0.0
      %460 = vadd.xlane.f32.xlu0 %v459
      %v461 = vpop.xlane.xlu0 %460
      %v462 = vsel %vm422, %v403, 0.0
      %463 = vadd.xlane.f32.xlu0 %v462
      %v464 = vpop.xlane.xlu0 %463
      %v465 = vsel %vm422, %v404, 0.0
      %466 = vadd.xlane.f32.xlu0 %v465
      %v467 = vpop.xlane.xlu0 %466
      %v468 = vsel %vm422, %v405, 0.0
      %469 = vadd.xlane.f32.xlu0 %v468
      %v470 = vpop.xlane.xlu0 %469
      %v471 = vsel %vm422, %v406, 0.0
      %472 = vadd.xlane.f32.xlu0 %v471
      %v473 = vpop.xlane.xlu0 %472
      %v474 = vsel %vm422, %v407, 0.0
      %475 = vadd.xlane.f32.xlu0 %v474
      %v476 = vpop.xlane.xlu0 %475
      %v477 = vsel %vm422, %v408, 0.0
      %478 = vadd.xlane.f32.xlu0 %v477
      %v479 = vpop.xlane.xlu0 %478
      %v480 = vsel %vm422, %v409, 0.0
      %481 = vadd.xlane.f32.xlu0 %v480
      %v482 = vpop.xlane.xlu0 %481
      %v483 = vsel %vm422, %v410, 0.0
      %484 = vadd.xlane.f32.xlu0 %v483
      %v485 = vpop.xlane.xlu0 %484
      %v486 = vsel %vm422, %v411, 0.0
      %487 = vadd.xlane.f32.xlu0 %v486
      %v488 = vpop.xlane.xlu0 %487
      %v489 = vsel %vm422, %v412, 0.0
      %490 = vadd.xlane.f32.xlu0 %v489
      %v491 = vpop.xlane.xlu0 %490
      %v492 = vsel %vm422, %v413, 0.0
      %493 = vadd.xlane.f32.xlu0 %v492
      %v494 = vpop.xlane.xlu0 %493
      %v495 = vsel %vm422, %v414, 0.0
      %496 = vadd.xlane.f32.xlu0 %v495
      %v497 = vpop.xlane.xlu0 %496
      %v498 = vsel %vm422, %v415, 0.0
      %499 = vadd.xlane.f32.xlu0 %v498
      %v500 = vpop.xlane.xlu0 %499
      %v501 = vsel %vm422, %v416, 0.0
      %502 = vadd.xlane.f32.xlu0 %v501
      %v503 = vpop.xlane.xlu0 %502
      %v504 = vsel %vm422, %v417, 0.0
      %505 = vadd.xlane.f32.xlu0 %v504
      %v506 = vpop.xlane.xlu0 %505
      %v507 = vsel %vm422, %v418, 0.0
      %508 = vadd.xlane.f32.xlu0 %v507
      %v509 = vpop.xlane.xlu0 %508
      %v510 = vsel %vm422, %v419, 0.0
      %511 = vadd.xlane.f32.xlu0 %v510
      %v512 = vpop.xlane.xlu0 %511
      %v513 = vsel %vm422, %v420, 0.0
      %514 = vadd.xlane.f32.xlu0 %v513
      %v515 = vpop.xlane.xlu0 %514
      %v516 = vsel %vm422, %v421, 0.0
      %517 = vadd.xlane.f32.xlu0 %v516
      %v518 = vpop.xlane.xlu0 %517
      %v519 = vrcp.pop 32.0
      %v520 = vmul.f32 %v425, %v519
      %v521 = vmul.f32 %v428, %v519
      %v522 = vmul.f32 %v431, %v519
      %v523 = vmul.f32 %v434, %v519
      %v524 = vmul.f32 %v437, %v519
      %v525 = vmul.f32 %v440, %v519
      %v526 = vmul.f32 %v443, %v519
      %v527 = vmul.f32 %v446, %v519
      %v528 = vmul.f32 %v449, %v519
      %v529 = vmul.f32 %v452, %v519
      %v530 = vmul.f32 %v455, %v519
      %v531 = vmul.f32 %v458, %v519
      %v532 = vmul.f32 %v461, %v519
      %v533 = vmul.f32 %v464, %v519
      %v534 = vmul.f32 %v467, %v519
      %v535 = vmul.f32 %v470, %v519
      %v536 = vmul.f32 %v473, %v519
      %v537 = vmul.f32 %v476, %v519
      %v538 = vmul.f32 %v479, %v519
      %v539 = vmul.f32 %v482, %v519
      %v540 = vmul.f32 %v485, %v519
      %v541 = vmul.f32 %v488, %v519
      %v542 = vmul.f32 %v491, %v519
      %v543 = vmul.f32 %v494, %v519
      %v544 = vmul.f32 %v497, %v519
      %v545 = vmul.f32 %v500, %v519
      %v546 = vmul.f32 %v503, %v519
      %v547 = vmul.f32 %v506, %v519
      %v548 = vmul.f32 %v509, %v519
      %v549 = vmul.f32 %v512, %v519
      %v550 = vmul.f32 %v515, %v519
      %v551 = vmul.f32 %v518, %v519
      %v552 = vsub.f32 %v390, %v520
      %v553 = vsub.f32 %v391, %v521
      %v554 = vsub.f32 %v392, %v522
      %v555 = vsub.f32 %v393, %v523
      %v556 = vsub.f32 %v394, %v524
      %v557 = vsub.f32 %v395, %v525
      %v558 = vsub.f32 %v396, %v526
      %v559 = vsub.f32 %v397, %v527
      %v560 = vsub.f32 %v398, %v528
      %v561 = vsub.f32 %v399, %v529
      %v562 = vsub.f32 %v400, %v530
      %v563 = vsub.f32 %v401, %v531
      %v564 = vsub.f32 %v402, %v532
      %v565 = vsub.f32 %v403, %v533
      %v566 = vsub.f32 %v404, %v534
      %v567 = vsub.f32 %v405, %v535
      %v568 = vsub.f32 %v406, %v536
      %v569 = vsub.f32 %v407, %v537
      %v570 = vsub.f32 %v408, %v538
      %v571 = vsub.f32 %v409, %v539
      %v572 = vsub.f32 %v410, %v540
      %v573 = vsub.f32 %v411, %v541
      %v574 = vsub.f32 %v412, %v542
      %v575 = vsub.f32 %v413, %v543
      %v576 = vsub.f32 %v414, %v544
      %v577 = vsub.f32 %v415, %v545
      %v578 = vsub.f32 %v416, %v546
      %v579 = vsub.f32 %v417, %v547
      %v580 = vsub.f32 %v418, %v548
      %v581 = vsub.f32 %v419, %v549
      %v582 = vsub.f32 %v420, %v550
      %v583 = vsub.f32 %v421, %v551
      %v584 = vmul.f32 %v552, %v552
      %v585 = vmul.f32 %v553, %v553
      %v586 = vmul.f32 %v554, %v554
      %v587 = vmul.f32 %v555, %v555
      %v588 = vmul.f32 %v556, %v556
      %v589 = vmul.f32 %v557, %v557
      %v590 = vmul.f32 %v558, %v558
      %v591 = vmul.f32 %v559, %v559
      %v592 = vmul.f32 %v560, %v560
      %v593 = vmul.f32 %v561, %v561
      %v594 = vmul.f32 %v562, %v562
      %v595 = vmul.f32 %v563, %v563
      %v596 = vmul.f32 %v564, %v564
      %v597 = vmul.f32 %v565, %v565
      %v598 = vmul.f32 %v566, %v566
      %v599 = vmul.f32 %v567, %v567
      %v600 = vmul.f32 %v568, %v568
      %v601 = vmul.f32 %v569, %v569
      %v602 = vmul.f32 %v570, %v570
      %v603 = vmul.f32 %v571, %v571
      %v604 = vmul.f32 %v572, %v572
      %v605 = vmul.f32 %v573, %v573
      %v606 = vmul.f32 %v574, %v574
      %v607 = vmul.f32 %v575, %v575
      %v608 = vmul.f32 %v576, %v576
      %v609 = vmul.f32 %v577, %v577
      %v610 = vmul.f32 %v578, %v578
      %v611 = vmul.f32 %v579, %v579
      %v612 = vmul.f32 %v580, %v580
      %v613 = vmul.f32 %v581, %v581
      %v614 = vmul.f32 %v582, %v582
      %v615 = vmul.f32 %v583, %v583
      %v616 = vsel %vm422, %v584, 0.0
      %617 = vadd.xlane.f32.xlu0 %v616
      %v618 = vpop.xlane.xlu0 %617
      %v619 = vsel %vm422, %v585, 0.0
      %620 = vadd.xlane.f32.xlu0 %v619
      %v621 = vpop.xlane.xlu0 %620
      %v622 = vsel %vm422, %v586, 0.0
      %623 = vadd.xlane.f32.xlu0 %v622
      %v624 = vpop.xlane.xlu0 %623
      %v625 = vsel %vm422, %v587, 0.0
      %626 = vadd.xlane.f32.xlu0 %v625
      %v627 = vpop.xlane.xlu0 %626
      %v628 = vsel %vm422, %v588, 0.0
      %629 = vadd.xlane.f32.xlu0 %v628
      %v630 = vpop.xlane.xlu0 %629
      %v631 = vsel %vm422, %v589, 0.0
      %632 = vadd.xlane.f32.xlu0 %v631
      %v633 = vpop.xlane.xlu0 %632
      %v634 = vsel %vm422, %v590, 0.0
      %635 = vadd.xlane.f32.xlu0 %v634
      %v636 = vpop.xlane.xlu0 %635
      %v637 = vsel %vm422, %v591, 0.0
      %638 = vadd.xlane.f32.xlu0 %v637
      %v639 = vpop.xlane.xlu0 %638
      %v640 = vsel %vm422, %v592, 0.0
      %641 = vadd.xlane.f32.xlu0 %v640
      %v642 = vpop.xlane.xlu0 %641
      %v643 = vsel %vm422, %v593, 0.0
      %644 = vadd.xlane.f32.xlu0 %v643
      %v645 = vpop.xlane.xlu0 %644
      %v646 = vsel %vm422, %v594, 0.0
      %647 = vadd.xlane.f32.xlu0 %v646
      %v648 = vpop.xlane.xlu0 %647
      %v649 = vsel %vm422, %v595, 0.0
      %650 = vadd.xlane.f32.xlu0 %v649
      %v651 = vpop.xlane.xlu0 %650
      %v652 = vsel %vm422, %v596, 0.0
      %653 = vadd.xlane.f32.xlu0 %v652
      %v654 = vpop.xlane.xlu0 %653
      %v655 = vsel %vm422, %v597, 0.0
      %656 = vadd.xlane.f32.xlu0 %v655
      %v657 = vpop.xlane.xlu0 %656
      %v658 = vsel %vm422, %v598, 0.0
      %659 = vadd.xlane.f32.xlu0 %v658
      %v660 = vpop.xlane.xlu0 %659
      %v661 = vsel %vm422, %v599, 0.0
      %662 = vadd.xlane.f32.xlu0 %v661
      %v663 = vpop.xlane.xlu0 %662
      %v664 = vsel %vm422, %v600, 0.0
      %665 = vadd.xlane.f32.xlu0 %v664
      %v666 = vpop.xlane.xlu0 %665
      %v667 = vsel %vm422, %v601, 0.0
      %668 = vadd.xlane.f32.xlu0 %v667
      %v669 = vpop.xlane.xlu0 %668
      %v670 = vsel %vm422, %v602, 0.0
      %671 = vadd.xlane.f32.xlu0 %v670
      %v672 = vpop.xlane.xlu0 %671
      %v673 = vsel %vm422, %v603, 0.0
      %674 = vadd.xlane.f32.xlu0 %v673
      %v675 = vpop.xlane.xlu0 %674
      %v676 = vsel %vm422, %v604, 0.0
      %677 = vadd.xlane.f32.xlu0 %v676
      %v678 = vpop.xlane.xlu0 %677
      %v679 = vsel %vm422, %v605, 0.0
      %680 = vadd.xlane.f32.xlu0 %v679
      %v681 = vpop.xlane.xlu0 %680
      %v682 = vsel %vm422, %v606, 0.0
      %683 = vadd.xlane.f32.xlu0 %v682
      %v684 = vpop.xlane.xlu0 %683
      %v685 = vsel %vm422, %v607, 0.0
      %686 = vadd.xlane.f32.xlu0 %v685
      %v687 = vpop.xlane.xlu0 %686
      %v688 = vsel %vm422, %v608, 0.0
      %689 = vadd.xlane.f32.xlu0 %v688
      %v690 = vpop.xlane.xlu0 %689
      %v691 = vsel %vm422, %v609, 0.0
      %692 = vadd.xlane.f32.xlu0 %v691
      %v693 = vpop.xlane.xlu0 %692
      %v694 = vsel %vm422, %v610, 0.0
      %695 = vadd.xlane.f32.xlu0 %v694
      %v696 = vpop.xlane.xlu0 %695
      %v697 = vsel %vm422, %v611, 0.0
      %698 = vadd.xlane.f32.xlu0 %v697
      %v699 = vpop.xlane.xlu0 %698
      %v700 = vsel %vm422, %v612, 0.0
      %701 = vadd.xlane.f32.xlu0 %v700
      %v702 = vpop.xlane.xlu0 %701
      %v703 = vsel %vm422, %v613, 0.0
      %704 = vadd.xlane.f32.xlu0 %v703
      %v705 = vpop.xlane.xlu0 %704
      %v706 = vsel %vm422, %v614, 0.0
      %707 = vadd.xlane.f32.xlu0 %v706
      %v708 = vpop.xlane.xlu0 %707
      %v709 = vsel %vm422, %v615, 0.0
      %710 = vadd.xlane.f32.xlu0 %v709
      %v711 = vpop.xlane.xlu0 %710
      %v712 = vmul.f32 %v618, %v519
      %v713 = vmul.f32 %v621, %v519
      %v714 = vmul.f32 %v624, %v519
      %v715 = vmul.f32 %v627, %v519
      %v716 = vmul.f32 %v630, %v519
      %v717 = vmul.f32 %v633, %v519
      %v718 = vmul.f32 %v636, %v519
      %v719 = vmul.f32 %v639, %v519
      %v720 = vmul.f32 %v642, %v519
      %v721 = vmul.f32 %v645, %v519
      %v722 = vmul.f32 %v648, %v519
      %v723 = vmul.f32 %v651, %v519
      %v724 = vmul.f32 %v654, %v519
      %v725 = vmul.f32 %v657, %v519
      %v726 = vmul.f32 %v660, %v519
      %v727 = vmul.f32 %v663, %v519
      %v728 = vmul.f32 %v666, %v519
      %v729 = vmul.f32 %v669, %v519
      %v730 = vmul.f32 %v672, %v519
      %v731 = vmul.f32 %v675, %v519
      %v732 = vmul.f32 %v678, %v519
      %v733 = vmul.f32 %v681, %v519
      %v734 = vmul.f32 %v684, %v519
      %v735 = vmul.f32 %v687, %v519
      %v736 = vmul.f32 %v690, %v519
      %v737 = vmul.f32 %v693, %v519
      %v738 = vmul.f32 %v696, %v519
      %v739 = vmul.f32 %v699, %v519
      %v740 = vmul.f32 %v702, %v519
      %v741 = vmul.f32 %v705, %v519
      %v742 = vmul.f32 %v708, %v519
      %v743 = vmul.f32 %v711, %v519
      %v744 = vadd.f32 %v712, 1e-05
      %v745 = vadd.f32 %v713, 1e-05
      %v746 = vadd.f32 %v714, 1e-05
      %v747 = vadd.f32 %v715, 1e-05
      %v748 = vadd.f32 %v716, 1e-05
      %v749 = vadd.f32 %v717, 1e-05
      %v750 = vadd.f32 %v718, 1e-05
      %v751 = vadd.f32 %v719, 1e-05
      %v752 = vadd.f32 %v720, 1e-05
      %v753 = vadd.f32 %v721, 1e-05
      %v754 = vadd.f32 %v722, 1e-05
      %v755 = vadd.f32 %v723, 1e-05
      %v756 = vadd.f32 %v724, 1e-05
      %v757 = vadd.f32 %v725, 1e-05
      %v758 = vadd.f32 %v726, 1e-05
      %v759 = vadd.f32 %v727, 1e-05
      %v760 = vadd.f32 %v728, 1e-05
      %v761 = vadd.f32 %v729, 1e-05
      %v762 = vadd.f32 %v730, 1e-05
      %v763 = vadd.f32 %v731, 1e-05
      %v764 = vadd.f32 %v732, 1e-05
      %v765 = vadd.f32 %v733, 1e-05
      %v766 = vadd.f32 %v734, 1e-05
      %v767 = vadd.f32 %v735, 1e-05
      %v768 = vadd.f32 %v736, 1e-05
      %v769 = vadd.f32 %v737, 1e-05
      %v770 = vadd.f32 %v738, 1e-05
      %v771 = vadd.f32 %v739, 1e-05
      %v772 = vadd.f32 %v740, 1e-05
      %v773 = vadd.f32 %v741, 1e-05
      %v774 = vadd.f32 %v742, 1e-05
      %v775 = vadd.f32 %v743, 1e-05
      %v776 = vrsqrt.pop %v744
      %v777 = vrsqrt.pop %v745
      %v778 = vrsqrt.pop %v746
      %v779 = vrsqrt.pop %v747
      %v780 = vrsqrt.pop %v748
      %v781 = vrsqrt.pop %v749
      %v782 = vrsqrt.pop %v750
      %v783 = vrsqrt.pop %v751
      %v784 = vrsqrt.pop %v752
      %v785 = vrsqrt.pop %v753
      %v786 = vrsqrt.pop %v754
      %v787 = vrsqrt.pop %v755
      %v788 = vrsqrt.pop %v756
      %v789 = vrsqrt.pop %v757
      %v790 = vrsqrt.pop %v758
      %v791 = vrsqrt.pop %v759
      %v792 = vrsqrt.pop %v760
      %v793 = vrsqrt.pop %v761
      %v794 = vrsqrt.pop %v762
      %v795 = vrsqrt.pop %v763
      %v796 = vrsqrt.pop %v764
      %v797 = vrsqrt.pop %v765
      %v798 = vrsqrt.pop %v766
      %v799 = vrsqrt.pop %v767
      %v800 = vrsqrt.pop %v768
      %v801 = vrsqrt.pop %v769
      %v802 = vrsqrt.pop %v770
      %v803 = vrsqrt.pop %v771
      %v804 = vrsqrt.pop %v772
      %v805 = vrsqrt.pop %v773
      %v806 = vrsqrt.pop %v774
      %v807 = vrsqrt.pop %v775
      %v808 = vmul.f32 %v552, %v776
      %v809 = vmul.f32 %v553, %v777
      %v810 = vmul.f32 %v554, %v778
      %v811 = vmul.f32 %v555, %v779
      %v812 = vmul.f32 %v556, %v780
      %v813 = vmul.f32 %v557, %v781
      %v814 = vmul.f32 %v558, %v782
      %v815 = vmul.f32 %v559, %v783
      %v816 = vmul.f32 %v560, %v784
      %v817 = vmul.f32 %v561, %v785
      %v818 = vmul.f32 %v562, %v786
      %v819 = vmul.f32 %v563, %v787
      %v820 = vmul.f32 %v564, %v788
      %v821 = vmul.f32 %v565, %v789
      %v822 = vmul.f32 %v566, %v790
      %v823 = vmul.f32 %v567, %v791
      %v824 = vmul.f32 %v568, %v792
      %v825 = vmul.f32 %v569, %v793
      %v826 = vmul.f32 %v570, %v794
      %v827 = vmul.f32 %v571, %v795
      %v828 = vmul.f32 %v572, %v796
      %v829 = vmul.f32 %v573, %v797
      %v830 = vmul.f32 %v574, %v798
      %v831 = vmul.f32 %v575, %v799
      %v832 = vmul.f32 %v576, %v800
      %v833 = vmul.f32 %v577, %v801
      %v834 = vmul.f32 %v578, %v802
      %v835 = vmul.f32 %v579, %v803
      %v836 = vmul.f32 %v580, %v804
      %v837 = vmul.f32 %v581, %v805
      %v838 = vmul.f32 %v582, %v806
      %v839 = vmul.f32 %v583, %v807
      %v840 = vld [vmem:[%s1] sm:$0x1]
      %v842 = vlaneseq
      %v843 = vshrl.u32 %v842, 7
      %v844 = vsub.s32 0, %v843
      %v845 = vrot.slane %v840, %v844
      %v847 = vmul.f32 %v808, %v845
      %v848 = vmul.f32 %v809, %v845
      %v849 = vmul.f32 %v810, %v845
      %v850 = vmul.f32 %v811, %v845
      %v851 = vmul.f32 %v812, %v845
      %v852 = vmul.f32 %v813, %v845
      %v853 = vmul.f32 %v814, %v845
      %v854 = vmul.f32 %v815, %v845
      %v855 = vmul.f32 %v816, %v845
      %v856 = vmul.f32 %v817, %v845
      %v857 = vmul.f32 %v818, %v845
      %v858 = vmul.f32 %v819, %v845
      %v859 = vmul.f32 %v820, %v845
      %v860 = vmul.f32 %v821, %v845
      %v861 = vmul.f32 %v822, %v845
      %v862 = vmul.f32 %v823, %v845
      %v863 = vmul.f32 %v824, %v845
      %v864 = vmul.f32 %v825, %v845
      %v865 = vmul.f32 %v826, %v845
      %v866 = vmul.f32 %v827, %v845
      %v867 = vmul.f32 %v828, %v845
      %v868 = vmul.f32 %v829, %v845
      %v869 = vmul.f32 %v830, %v845
      %v870 = vmul.f32 %v831, %v845
      %v871 = vmul.f32 %v832, %v845
      %v872 = vmul.f32 %v833, %v845
      %v873 = vmul.f32 %v834, %v845
      %v874 = vmul.f32 %v835, %v845
      %v875 = vmul.f32 %v836, %v845
      %v876 = vmul.f32 %v837, %v845
      %v877 = vmul.f32 %v838, %v845
      %v878 = vmul.f32 %v839, %v845
      %v879 = vld [vmem:[%s2] sm:$0x1]
      %v881 = vlaneseq
      %v882 = vshrl.u32 %v881, 7
      %v883 = vsub.s32 0, %v882
      %v884 = vrot.slane %v879, %v883
      %v886 = vadd.f32 %v847, %v884
      %v887 = vadd.f32 %v848, %v884
      %v888 = vadd.f32 %v849, %v884
      %v889 = vadd.f32 %v850, %v884
      %v890 = vadd.f32 %v851, %v884
      %v891 = vadd.f32 %v852, %v884
      %v892 = vadd.f32 %v853, %v884
      %v893 = vadd.f32 %v854, %v884
      %v894 = vadd.f32 %v855, %v884
      %v895 = vadd.f32 %v856, %v884
      %v896 = vadd.f32 %v857, %v884
      %v897 = vadd.f32 %v858, %v884
      %v898 = vadd.f32 %v859, %v884
      %v899 = vadd.f32 %v860, %v884
      %v900 = vadd.f32 %v861, %v884
      %v901 = vadd.f32 %v862, %v884
      %v902 = vadd.f32 %v863, %v884
      %v903 = vadd.f32 %v864, %v884
      %v904 = vadd.f32 %v865, %v884
      %v905 = vadd.f32 %v866, %v884
      %v906 = vadd.f32 %v867, %v884
      %v907 = vadd.f32 %v868, %v884
      %v908 = vadd.f32 %v869, %v884
      %v909 = vadd.f32 %v870, %v884
      %v910 = vadd.f32 %v871, %v884
      %v911 = vadd.f32 %v872, %v884
      %v912 = vadd.f32 %v873, %v884
      %v913 = vadd.f32 %v874, %v884
      %v914 = vadd.f32 %v875, %v884
      %v915 = vadd.f32 %v876, %v884
      %v916 = vadd.f32 %v877, %v884
      %v917 = vadd.f32 %v878, %v884
      %v918 = vld [vmem:[%s3] sm:$0xff]
      %v919 = vld [vmem:[%s3 + $0x8] sm:$0xff]
      %v920 = vld [vmem:[%s3 + $0x10] sm:$0xff]
      %v921 = vld [vmem:[%s3 + $0x18] sm:$0xff]
      %v923 = vsel %vm422, %v886, 0
      %v926 = vsel %vm422, %v887, 0
      %v929 = vsel %vm422, %v888, 0
      %v932 = vsel %vm422, %v889, 0
      %v935 = vsel %vm422, %v890, 0
      %v938 = vsel %vm422, %v891, 0
      %v941 = vsel %vm422, %v892, 0
      %v944 = vsel %vm422, %v893, 0
      %v947 = vsel %vm422, %v894, 0
      %v950 = vsel %vm422, %v895, 0
      %v953 = vsel %vm422, %v896, 0
      %v956 = vsel %vm422, %v897, 0
      %v959 = vsel %vm422, %v898, 0
      %v962 = vsel %vm422, %v899, 0
      %v965 = vsel %vm422, %v900, 0
      %v968 = vsel %vm422, %v901, 0
      %v971 = vsel %vm422, %v902, 0
      %v974 = vsel %vm422, %v903, 0
      %v977 = vsel %vm422, %v904, 0
      %v980 = vsel %vm422, %v905, 0
      %v983 = vsel %vm422, %v906, 0
      %v986 = vsel %vm422, %v907, 0
      %v989 = vsel %vm422, %v908, 0
      %v992 = vsel %vm422, %v909, 0
      %v995 = vsel %vm422, %v910, 0
      %v998 = vsel %vm422, %v911, 0
      %v1001 = vsel %vm422, %v912, 0
      %v1004 = vsel %vm422, %v913, 0
      %v1007 = vsel %vm422, %v914, 0
      %v1010 = vsel %vm422, %v915, 0
      %v1013 = vsel %vm422, %v916, 0
      %v1016 = vsel %vm422, %v917, 0
      %1018 = vmatprep.subr.mxu0 0.0
      %1019 = vmatpush1.msra.mxu0 %v918
      %1020 = vmatprep.subr.mxu0 0.0
      %1021 = vmatpush1.msra.mxu0 %v919
      %1022 = vmatprep.subr.mxu0 0.0
      %1023 = vmatpush1.msra.mxu0 %v920
      %1024 = vmatprep.subr.mxu0 0.0
      %1025 = vmatpush1.msra.mxu0 %v921
      %1026 = vmatprep.subr.mxu0 0.0
      %1027 = vmatpush1.msra.mxu0 0.0
      %1028 = vmatprep.subr.mxu0 0.0
      %1029 = vmatpush1.msra.mxu0 0.0
      %1030 = vmatprep.subr.mxu0 0.0
      %1031 = vmatpush1.msra.mxu0 0.0
      %1032 = vmatprep.subr.mxu0 0.0
      %1033 = vmatpush1.msra.mxu0 0.0
      %1034 = vmatprep.subr.mxu0 0.0
      %1035 = vmatpush1.msra.mxu0 0.0
      %1036 = vmatprep.subr.mxu0 0.0
      %1037 = vmatpush1.msra.mxu0 0.0
      %1038 = vmatprep.subr.mxu0 0.0
      %1039 = vmatpush1.msra.mxu0 0.0
      %1040 = vmatprep.subr.mxu0 0.0
      %1041 = vmatpush1.msra.mxu0 0.0
      %1042 = vmatprep.subr.mxu0 0.0
      %1043 = vmatpush1.msra.mxu0 0.0
      %1044 = vmatprep.subr.mxu0 0.0
      %1045 = vmatpush1.msra.mxu0 0.0
      %1046 = vmatprep.subr.mxu0 0.0
      %1047 = vmatpush1.msra.mxu0 0.0
      %1048 = vmatprep.subr.mxu0 0.0
      %1049 = vmatpush1.msra.mxu0 0.0
      %1050 = vmatprep.subr.mxu0 0.0
      %1051 = vmatpush1.msra.mxu0 0.0
      %1052 = vmatprep.subr.mxu0 0.0
      %1053 = vmatpush1.msra.mxu0 0.0
      %1054 = vmatprep.subr.mxu0 0.0
      %1055 = vmatpush1.msra.mxu0 0.0
      %1056 = vmatprep.subr.mxu0 0.0
      %1057 = vmatpush1.msra.mxu0 0.0
      %1058 = vmatprep.subr.mxu0 0.0
      %1059 = vmatpush1.msra.mxu0 0.0
      %1060 = vmatprep.subr.mxu0 0.0
      %1061 = vmatpush1.msra.mxu0 0.0
      %1062 = vmatprep.subr.mxu0 0.0
      %1063 = vmatpush1.msra.mxu0 0.0
      %1064 = vmatprep.subr.mxu0 0.0
      %1065 = vmatpush1.msra.mxu0 0.0
      %1066 = vmatprep.subr.mxu0 0.0
      %1067 = vmatpush1.msra.mxu0 0.0
      %1068 = vmatprep.subr.mxu0 0.0
      %1069 = vmatpush1.msra.mxu0 0.0
      %1070 = vmatprep.subr.mxu0 0.0
      %1071 = vmatpush1.msra.mxu0 0.0
      %1072 = vmatprep.subr.mxu0 0.0
      %1073 = vmatpush1.msra.mxu0 0.0
      %1074 = vmatprep.subr.mxu0 0.0
      %1075 = vmatpush1.msra.mxu0 0.0
      %1076 = vmatprep.subr.mxu0 0.0
      %1077 = vmatpush1.msra.mxu0 0.0
      %1078 = vmatprep.subr.mxu0 0.0
      %1079 = vmatpush1.msra.mxu0 0.0
      %1080 = vmatprep.subr.mxu0 0.0
      %1081 = vmatpush1.msra.mxu0 0.0
      %1082 = vmatprep.mubr.f32.mxu0 0.0
      %1083 = vmatmul.mubr.f32.gmra.mrb[0].mxu0 %v923
      %v1084 = vpop.f32.mrb[0].mxu0
      %v1085 = vadd.f32 0.0, %v1084
      %v1086 = vpop.f32.mrb[0].mxu0
      %1087 = vmatprep.mubr.f32.mxu0 0.0
      %1088 = vmatmul.mubr.f32.gmra.mrb[0].mxu0 %v926
      %v1089 = vpop.f32.mrb[0].mxu0
      %v1090 = vadd.f32 0.0, %v1089
      %v1091 = vpop.f32.mrb[0].mxu0
      %1092 = vmatprep.mubr.f32.mxu0 0.0
      %1093 = vmatmul.mubr.f32.gmra.mrb[0].mxu0 %v929
      %v1094 = vpop.f32.mrb[0].mxu0
      %v1095 = vadd.f32 0.0, %v1094
      %v1096 = vpop.f32.mrb[0].mxu0
      %1097 = vmatprep.mubr.f32.mxu0 0.0
      %1098 = vmatmul.mubr.f32.gmra.mrb[0].mxu0 %v932
      %v1099 = vpop.f32.mrb[0].mxu0
      %v1100 = vadd.f32 0.0, %v1099
      %v1101 = vpop.f32.mrb[0].mxu0
      %1102 = vmatprep.mubr.f32.mxu0 0.0
      %1103 = vmatmul.mubr.f32.gmra.mrb[0].mxu0 %v935
      %v1104 = vpop.f32.mrb[0].mxu0
      %v1105 = vadd.f32 0.0, %v1104
      %v1106 = vpop.f32.mrb[0].mxu0
      %1107 = vmatprep.mubr.f32.mxu0 0.0
      %1108 = vmatmul.mubr.f32.gmra.mrb[0].mxu0 %v938
      %v1109 = vpop.f32.mrb[0].mxu0
      %v1110 = vadd.f32 0.0, %v1109
      %v1111 = vpop.f32.mrb[0].mxu0
      %1112 = vmatprep.mubr.f32.mxu0 0.0
      %1113 = vmatmul.mubr.f32.gmra.mrb[0].mxu0 %v941
      %v1114 = vpop.f32.mrb[0].mxu0
      %v1115 = vadd.f32 0.0, %v1114
      %v1116 = vpop.f32.mrb[0].mxu0
      %1117 = vmatprep.mubr.f32.mxu0 0.0
      %1118 = vmatmul.mubr.f32.gmra.mrb[0].mxu0 %v944
      %v1119 = vpop.f32.mrb[0].mxu0
      %v1120 = vadd.f32 0.0, %v1119
      %v1121 = vpop.f32.mrb[0].mxu0
      %1122 = vmatprep.mubr.f32.mxu0 0.0
      %1123 = vmatmul.mubr.f32.gmra.mrb[0].mxu0 %v947
      %v1124 = vpop.f32.mrb[0].mxu0
      %v1125 = vadd.f32 0.0, %v1124
      %v1126 = vpop.f32.mrb[0].mxu0
      %1127 = vmatprep.mubr.f32.mxu0 0.0
      %1128 = vmatmul.mubr.f32.gmra.mrb[0].mxu0 %v950
      %v1129 = vpop.f32.mrb[0].mxu0
      %v1130 = vadd.f32 0.0, %v1129
      %v1131 = vpop.f32.mrb[0].mxu0
      %1132 = vmatprep.mubr.f32.mxu0 0.0
      %1133 = vmatmul.mubr.f32.gmra.mrb[0].mxu0 %v953
      %v1134 = vpop.f32.mrb[0].mxu0
      %v1135 = vadd.f32 0.0, %v1134
      %v1136 = vpop.f32.mrb[0].mxu0
      %1137 = vmatprep.mubr.f32.mxu0 0.0
      %1138 = vmatmul.mubr.f32.gmra.mrb[0].mxu0 %v956
      %v1139 = vpop.f32.mrb[0].mxu0
      %v1140 = vadd.f32 0.0, %v1139
      %v1141 = vpop.f32.mrb[0].mxu0
      %1142 = vmatprep.mubr.f32.mxu0 0.0
      %1143 = vmatmul.mubr.f32.gmra.mrb[0].mxu0 %v959
      %v1144 = vpop.f32.mrb[0].mxu0
      %v1145 = vadd.f32 0.0, %v1144
      %v1146 = vpop.f32.mrb[0].mxu0
      %1147 = vmatprep.mubr.f32.mxu0 0.0
      %1148 = vmatmul.mubr.f32.gmra.mrb[0].mxu0 %v962
      %v1149 = vpop.f32.mrb[0].mxu0
      %v1150 = vadd.f32 0.0, %v1149
      %v1151 = vpop.f32.mrb[0].mxu0
      %1152 = vmatprep.mubr.f32.mxu0 0.0
      %1153 = vmatmul.mubr.f32.gmra.mrb[0].mxu0 %v965
      %v1154 = vpop.f32.mrb[0].mxu0
      %v1155 = vadd.f32 0.0, %v1154
      %v1156 = vpop.f32.mrb[0].mxu0
      %1157 = vmatprep.mubr.f32.mxu0 0.0
      %1158 = vmatmul.mubr.f32.gmra.mrb[0].mxu0 %v968
      %v1159 = vpop.f32.mrb[0].mxu0
      %v1160 = vadd.f32 0.0, %v1159
      %v1161 = vpop.f32.mrb[0].mxu0
      %1162 = vmatprep.mubr.f32.mxu0 0.0
      %1163 = vmatmul.mubr.f32.gmra.mrb[0].mxu0 %v971
      %v1164 = vpop.f32.mrb[0].mxu0
      %v1165 = vadd.f32 0.0, %v1164
      %v1166 = vpop.f32.mrb[0].mxu0
      %1167 = vmatprep.mubr.f32.mxu0 0.0
      %1168 = vmatmul.mubr.f32.gmra.mrb[0].mxu0 %v974
      %v1169 = vpop.f32.mrb[0].mxu0
      %v1170 = vadd.f32 0.0, %v1169
      %v1171 = vpop.f32.mrb[0].mxu0
      %1172 = vmatprep.mubr.f32.mxu0 0.0
      %1173 = vmatmul.mubr.f32.gmra.mrb[0].mxu0 %v977
      %v1174 = vpop.f32.mrb[0].mxu0
      %v1175 = vadd.f32 0.0, %v1174
      %v1176 = vpop.f32.mrb[0].mxu0
      %1177 = vmatprep.mubr.f32.mxu0 0.0
      %1178 = vmatmul.mubr.f32.gmra.mrb[0].mxu0 %v980
      %v1179 = vpop.f32.mrb[0].mxu0
      %v1180 = vadd.f32 0.0, %v1179
      %v1181 = vpop.f32.mrb[0].mxu0
      %1182 = vmatprep.mubr.f32.mxu0 0.0
      %1183 = vmatmul.mubr.f32.gmra.mrb[0].mxu0 %v983
      %v1184 = vpop.f32.mrb[0].mxu0
      %v1185 = vadd.f32 0.0, %v1184
      %v1186 = vpop.f32.mrb[0].mxu0
      %1187 = vmatprep.mubr.f32.mxu0 0.0
      %1188 = vmatmul.mubr.f32.gmra.mrb[0].mxu0 %v986
      %v1189 = vpop.f32.mrb[0].mxu0
      %v1190 = vadd.f32 0.0, %v1189
      %v1191 = vpop.f32.mrb[0].mxu0
      %1192 = vmatprep.mubr.f32.mxu0 0.0
      %1193 = vmatmul.mubr.f32.gmra.mrb[0].mxu0 %v989
      %v1194 = vpop.f32.mrb[0].mxu0
      %v1195 = vadd.f32 0.0, %v1194
      %v1196 = vpop.f32.mrb[0].mxu0
      %1197 = vmatprep.mubr.f32.mxu0 0.0
      %1198 = vmatmul.mubr.f32.gmra.mrb[0].mxu0 %v992
      %v1199 = vpop.f32.mrb[0].mxu0
      %v1200 = vadd.f32 0.0, %v1199
      %v1201 = vpop.f32.mrb[0].mxu0
      %1202 = vmatprep.mubr.f32.mxu0 0.0
      %1203 = vmatmul.mubr.f32.gmra.mrb[0].mxu0 %v995
      %v1204 = vpop.f32.mrb[0].mxu0
      %v1205 = vadd.f32 0.0, %v1204
      %v1206 = vpop.f32.mrb[0].mxu0
      %1207 = vmatprep.mubr.f32.mxu0 0.0
      %1208 = vmatmul.mubr.f32.gmra.mrb[0].mxu0 %v998
      %v1209 = vpop.f32.mrb[0].mxu0
      %v1210 = vadd.f32 0.0, %v1209
      %v1211 = vpop.f32.mrb[0].mxu0
      %1212 = vmatprep.mubr.f32.mxu0 0.0
      %1213 = vmatmul.mubr.f32.gmra.mrb[0].mxu0 %v1001
      %v1214 = vpop.f32.mrb[0].mxu0
      %v1215 = vadd.f32 0.0, %v1214
      %v1216 = vpop.f32.mrb[0].mxu0
      %1217 = vmatprep.mubr.f32.mxu0 0.0
      %1218 = vmatmul.mubr.f32.gmra.mrb[0].mxu0 %v1004
      %v1219 = vpop.f32.mrb[0].mxu0
      %v1220 = vadd.f32 0.0, %v1219
      %v1221 = vpop.f32.mrb[0].mxu0
      %1222 = vmatprep.mubr.f32.mxu0 0.0
      %1223 = vmatmul.mubr.f32.gmra.mrb[0].mxu0 %v1007
      %v1224 = vpop.f32.mrb[0].mxu0
      %v1225 = vadd.f32 0.0, %v1224
      %v1226 = vpop.f32.mrb[0].mxu0
      %1227 = vmatprep.mubr.f32.mxu0 0.0
      %1228 = vmatmul.mubr.f32.gmra.mrb[0].mxu0 %v1010
      %v1229 = vpop.f32.mrb[0].mxu0
      %v1230 = vadd.f32 0.0, %v1229
      %v1231 = vpop.f32.mrb[0].mxu0
      %1232 = vmatprep.mubr.f32.mxu0 0.0
      %1233 = vmatmul.mubr.f32.gmra.mrb[0].mxu0 %v1013
      %v1234 = vpop.f32.mrb[0].mxu0
      %v1235 = vadd.f32 0.0, %v1234
      %v1236 = vpop.f32.mrb[0].mxu0
      %1237 = vmatprep.mubr.f32.mxu0 0.0
      %1238 = vmatmul.mubr.f32.gmra.mrb[0].mxu0 %v1016
      %v1239 = vpop.f32.mrb[0].mxu0
      %v1240 = vadd.f32 0.0, %v1239
      %v1241 = vpop.f32.mrb[0].mxu0
      %1242 = vdwg.mxu0
      %v1243 = vld [vmem:[%s4] sm:$0xff]
      %v1244 = vld [vmem:[%s4 + $0x8] sm:$0xff]
      %v1245 = vld [vmem:[%s4 + $0x10] sm:$0xff]
      %v1246 = vld [vmem:[%s4 + $0x18] sm:$0xff]
      %1247 = vmatprep.subr.mxu0 0.0
      %1248 = vmatpush1.msra.mxu0 %v1243
      %1249 = vmatprep.subr.mxu0 0.0
      %1250 = vmatpush1.msra.mxu0 %v1244
      %1251 = vmatprep.subr.mxu0 0.0
      %1252 = vmatpush1.msra.mxu0 %v1245
      %1253 = vmatprep.subr.mxu0 0.0
      %1254 = vmatpush1.msra.mxu0 %v1246
      %1255 = vmatprep.subr.mxu0 0.0
      %1256 = vmatpush1.msra.mxu0 0.0
      %1257 = vmatprep.subr.mxu0 0.0
      %1258 = vmatpush1.msra.mxu0 0.0
      %1259 = vmatprep.subr.mxu0 0.0
      %1260 = vmatpush1.msra.mxu0 0.0
      %1261 = vmatprep.subr.mxu0 0.0
      %1262 = vmatpush1.msra.mxu0 0.0
      %1263 = vmatprep.subr.mxu0 0.0
      %1264 = vmatpush1.msra.mxu0 0.0
      %1265 = vmatprep.subr.mxu0 0.0
      %1266 = vmatpush1.msra.mxu0 0.0
      %1267 = vmatprep.subr.mxu0 0.0
      %1268 = vmatpush1.msra.mxu0 0.0
      %1269 = vmatprep.subr.mxu0 0.0
      %1270 = vmatpush1.msra.mxu0 0.0
      %1271 = vmatprep.subr.mxu0 0.0
      %1272 = vmatpush1.msra.mxu0 0.0
      %1273 = vmatprep.subr.mxu0 0.0
      %1274 = vmatpush1.msra.mxu0 0.0
      %1275 = vmatprep.subr.mxu0 0.0
      %1276 = vmatpush1.msra.mxu0 0.0
      %1277 = vmatprep.subr.mxu0 0.0
      %1278 = vmatpush1.msra.mxu0 0.0
      %1279 = vmatprep.subr.mxu0 0.0
      %1280 = vmatpush1.msra.mxu0 0.0
      %1281 = vmatprep.subr.mxu0 0.0
      %1282 = vmatpush1.msra.mxu0 0.0
      %1283 = vmatprep.subr.mxu0 0.0
      %1284 = vmatpush1.msra.mxu0 0.0
      %1285 = vmatprep.subr.mxu0 0.0
      %1286 = vmatpush1.msra.mxu0 0.0
      %1287 = vmatprep.subr.mxu0 0.0
      %1288 = vmatpush1.msra.mxu0 0.0
      %1289 = vmatprep.subr.mxu0 0.0
      %1290 = vmatpush1.msra.mxu0 0.0
      %1291 = vmatprep.subr.mxu0 0.0
      %1292 = vmatpush1.msra.mxu0 0.0
      %1293 = vmatprep.subr.mxu0 0.0
      %1294 = vmatpush1.msra.mxu0 0.0
      %1295 = vmatprep.subr.mxu0 0.0
      %1296 = vmatpush1.msra.mxu0 0.0
      %1297 = vmatprep.subr.mxu0 0.0
      %1298 = vmatpush1.msra.mxu0 0.0
      %1299 = vmatprep.subr.mxu0 0.0
      %1300 = vmatpush1.msra.mxu0 0.0
      %1301 = vmatprep.subr.mxu0 0.0
      %1302 = vmatpush1.msra.mxu0 0.0
      %1303 = vmatprep.subr.mxu0 0.0
      %1304 = vmatpush1.msra.mxu0 0.0
      %1305 = vmatprep.subr.mxu0 0.0
      %1306 = vmatpush1.msra.mxu0 0.0
      %1307 = vmatprep.subr.mxu0 0.0
      %1308 = vmatpush1.msra.mxu0 0.0
      %1309 = vmatprep.subr.mxu0 0.0
      %1310 = vmatpush1.msra.mxu0 0.0
      %1311 = vmatprep.mubr.f32.mxu0 0.0
      %1312 = vmatmul.mubr.f32.gmra.mrb[0].mxu0 %v923
      %v1313 = vpop.f32.mrb[0].mxu0
      %v1314 = vadd.f32 0.0, %v1313
      %v1315 = vpop.f32.mrb[0].mxu0
      %1316 = vmatprep.mubr.f32.mxu0 0.0
      %1317 = vmatmul.mubr.f32.gmra.mrb[0].mxu0 %v926
      %v1318 = vpop.f32.mrb[0].mxu0
      %v1319 = vadd.f32 0.0, %v1318
      %v1320 = vpop.f32.mrb[0].mxu0
      %1321 = vmatprep.mubr.f32.mxu0 0.0
      %1322 = vmatmul.mubr.f32.gmra.mrb[0].mxu0 %v929
      %v1323 = vpop.f32.mrb[0].mxu0
      %v1324 = vadd.f32 0.0, %v1323
      %v1325 = vpop.f32.mrb[0].mxu0
      %1326 = vmatprep.mubr.f32.mxu0 0.0
      %1327 = vmatmul.mubr.f32.gmra.mrb[0].mxu0 %v932
      %v1328 = vpop.f32.mrb[0].mxu0
      %v1329 = vadd.f32 0.0, %v1328
      %v1330 = vpop.f32.mrb[0].mxu0
      %1331 = vmatprep.mubr.f32.mxu0 0.0
      %1332 = vmatmul.mubr.f32.gmra.mrb[0].mxu0 %v935
      %v1333 = vpop.f32.mrb[0].mxu0
      %v1334 = vadd.f32 0.0, %v1333
      %v1335 = vpop.f32.mrb[0].mxu0
      %1336 = vmatprep.mubr.f32.mxu0 0.0
      %1337 = vmatmul.mubr.f32.gmra.mrb[0].mxu0 %v938
      %v1338 = vpop.f32.mrb[0].mxu0
      %v1339 = vadd.f32 0.0, %v1338
      %v1340 = vpop.f32.mrb[0].mxu0
      %1341 = vmatprep.mubr.f32.mxu0 0.0
      %1342 = vmatmul.mubr.f32.gmra.mrb[0].mxu0 %v941
      %v1343 = vpop.f32.mrb[0].mxu0
      %v1344 = vadd.f32 0.0, %v1343
      %v1345 = vpop.f32.mrb[0].mxu0
      %1346 = vmatprep.mubr.f32.mxu0 0.0
      %1347 = vmatmul.mubr.f32.gmra.mrb[0].mxu0 %v944
      %v1348 = vpop.f32.mrb[0].mxu0
      %v1349 = vadd.f32 0.0, %v1348
      %v1350 = vpop.f32.mrb[0].mxu0
      %1351 = vmatprep.mubr.f32.mxu0 0.0
      %1352 = vmatmul.mubr.f32.gmra.mrb[0].mxu0 %v947
      %v1353 = vpop.f32.mrb[0].mxu0
      %v1354 = vadd.f32 0.0, %v1353
      %v1355 = vpop.f32.mrb[0].mxu0
      %1356 = vmatprep.mubr.f32.mxu0 0.0
      %1357 = vmatmul.mubr.f32.gmra.mrb[0].mxu0 %v950
      %v1358 = vpop.f32.mrb[0].mxu0
      %v1359 = vadd.f32 0.0, %v1358
      %v1360 = vpop.f32.mrb[0].mxu0
      %1361 = vmatprep.mubr.f32.mxu0 0.0
      %1362 = vmatmul.mubr.f32.gmra.mrb[0].mxu0 %v953
      %v1363 = vpop.f32.mrb[0].mxu0
      %v1364 = vadd.f32 0.0, %v1363
      %v1365 = vpop.f32.mrb[0].mxu0
      %1366 = vmatprep.mubr.f32.mxu0 0.0
      %1367 = vmatmul.mubr.f32.gmra.mrb[0].mxu0 %v956
      %v1368 = vpop.f32.mrb[0].mxu0
      %v1369 = vadd.f32 0.0, %v1368
      %v1370 = vpop.f32.mrb[0].mxu0
      %1371 = vmatprep.mubr.f32.mxu0 0.0
      %1372 = vmatmul.mubr.f32.gmra.mrb[0].mxu0 %v959
      %v1373 = vpop.f32.mrb[0].mxu0
      %v1374 = vadd.f32 0.0, %v1373
      %v1375 = vpop.f32.mrb[0].mxu0
      %1376 = vmatprep.mubr.f32.mxu0 0.0
      %1377 = vmatmul.mubr.f32.gmra.mrb[0].mxu0 %v962
      %v1378 = vpop.f32.mrb[0].mxu0
      %v1379 = vadd.f32 0.0, %v1378
      %v1380 = vpop.f32.mrb[0].mxu0
      %1381 = vmatprep.mubr.f32.mxu0 0.0
      %1382 = vmatmul.mubr.f32.gmra.mrb[0].mxu0 %v965
      %v1383 = vpop.f32.mrb[0].mxu0
      %v1384 = vadd.f32 0.0, %v1383
      %v1385 = vpop.f32.mrb[0].mxu0
      %1386 = vmatprep.mubr.f32.mxu0 0.0
      %1387 = vmatmul.mubr.f32.gmra.mrb[0].mxu0 %v968
      %v1388 = vpop.f32.mrb[0].mxu0
      %v1389 = vadd.f32 0.0, %v1388
      %v1390 = vpop.f32.mrb[0].mxu0
      %1391 = vmatprep.mubr.f32.mxu0 0.0
      %1392 = vmatmul.mubr.f32.gmra.mrb[0].mxu0 %v971
      %v1393 = vpop.f32.mrb[0].mxu0
      %v1394 = vadd.f32 0.0, %v1393
      %v1395 = vpop.f32.mrb[0].mxu0
      %1396 = vmatprep.mubr.f32.mxu0 0.0
      %1397 = vmatmul.mubr.f32.gmra.mrb[0].mxu0 %v974
      %v1398 = vpop.f32.mrb[0].mxu0
      %v1399 = vadd.f32 0.0, %v1398
      %v1400 = vpop.f32.mrb[0].mxu0
      %1401 = vmatprep.mubr.f32.mxu0 0.0
      %1402 = vmatmul.mubr.f32.gmra.mrb[0].mxu0 %v977
      %v1403 = vpop.f32.mrb[0].mxu0
      %v1404 = vadd.f32 0.0, %v1403
      %v1405 = vpop.f32.mrb[0].mxu0
      %1406 = vmatprep.mubr.f32.mxu0 0.0
      %1407 = vmatmul.mubr.f32.gmra.mrb[0].mxu0 %v980
      %v1408 = vpop.f32.mrb[0].mxu0
      %v1409 = vadd.f32 0.0, %v1408
      %v1410 = vpop.f32.mrb[0].mxu0
      %1411 = vmatprep.mubr.f32.mxu0 0.0
      %1412 = vmatmul.mubr.f32.gmra.mrb[0].mxu0 %v983
      %v1413 = vpop.f32.mrb[0].mxu0
      %v1414 = vadd.f32 0.0, %v1413
      %v1415 = vpop.f32.mrb[0].mxu0
      %1416 = vmatprep.mubr.f32.mxu0 0.0
      %1417 = vmatmul.mubr.f32.gmra.mrb[0].mxu0 %v986
      %v1418 = vpop.f32.mrb[0].mxu0
      %v1419 = vadd.f32 0.0, %v1418
      %v1420 = vpop.f32.mrb[0].mxu0
      %1421 = vmatprep.mubr.f32.mxu0 0.0
      %1422 = vmatmul.mubr.f32.gmra.mrb[0].mxu0 %v989
      %v1423 = vpop.f32.mrb[0].mxu0
      %v1424 = vadd.f32 0.0, %v1423
      %v1425 = vpop.f32.mrb[0].mxu0
      %1426 = vmatprep.mubr.f32.mxu0 0.0
      %1427 = vmatmul.mubr.f32.gmra.mrb[0].mxu0 %v992
      %v1428 = vpop.f32.mrb[0].mxu0
      %v1429 = vadd.f32 0.0, %v1428
      %v1430 = vpop.f32.mrb[0].mxu0
      %1431 = vmatprep.mubr.f32.mxu0 0.0
      %1432 = vmatmul.mubr.f32.gmra.mrb[0].mxu0 %v995
      %v1433 = vpop.f32.mrb[0].mxu0
      %v1434 = vadd.f32 0.0, %v1433
      %v1435 = vpop.f32.mrb[0].mxu0
      %1436 = vmatprep.mubr.f32.mxu0 0.0
      %1437 = vmatmul.mubr.f32.gmra.mrb[0].mxu0 %v998
      %v1438 = vpop.f32.mrb[0].mxu0
      %v1439 = vadd.f32 0.0, %v1438
      %v1440 = vpop.f32.mrb[0].mxu0
      %1441 = vmatprep.mubr.f32.mxu0 0.0
      %1442 = vmatmul.mubr.f32.gmra.mrb[0].mxu0 %v1001
      %v1443 = vpop.f32.mrb[0].mxu0
      %v1444 = vadd.f32 0.0, %v1443
      %v1445 = vpop.f32.mrb[0].mxu0
      %1446 = vmatprep.mubr.f32.mxu0 0.0
      %1447 = vmatmul.mubr.f32.gmra.mrb[0].mxu0 %v1004
      %v1448 = vpop.f32.mrb[0].mxu0
      %v1449 = vadd.f32 0.0, %v1448
      %v1450 = vpop.f32.mrb[0].mxu0
      %1451 = vmatprep.mubr.f32.mxu0 0.0
      %1452 = vmatmul.mubr.f32.gmra.mrb[0].mxu0 %v1007
      %v1453 = vpop.f32.mrb[0].mxu0
      %v1454 = vadd.f32 0.0, %v1453
      %v1455 = vpop.f32.mrb[0].mxu0
      %1456 = vmatprep.mubr.f32.mxu0 0.0
      %1457 = vmatmul.mubr.f32.gmra.mrb[0].mxu0 %v1010
      %v1458 = vpop.f32.mrb[0].mxu0
      %v1459 = vadd.f32 0.0, %v1458
      %v1460 = vpop.f32.mrb[0].mxu0
      %1461 = vmatprep.mubr.f32.mxu0 0.0
      %1462 = vmatmul.mubr.f32.gmra.mrb[0].mxu0 %v1013
      %v1463 = vpop.f32.mrb[0].mxu0
      %v1464 = vadd.f32 0.0, %v1463
      %v1465 = vpop.f32.mrb[0].mxu0
      %1466 = vmatprep.mubr.f32.mxu0 0.0
      %1467 = vmatmul.mubr.f32.gmra.mrb[0].mxu0 %v1016
      %v1468 = vpop.f32.mrb[0].mxu0
      %v1469 = vadd.f32 0.0, %v1468
      %v1470 = vpop.f32.mrb[0].mxu0
      %1471 = vdwg.mxu0
      %v1472 = vld [vmem:[%s5] sm:$0xff]
      %v1473 = vld [vmem:[%s5 + $0x8] sm:$0xff]
      %v1474 = vld [vmem:[%s5 + $0x10] sm:$0xff]
      %v1475 = vld [vmem:[%s5 + $0x18] sm:$0xff]
      %1476 = vmatprep.subr.mxu0 0.0
      %1477 = vmatpush1.msra.mxu0 %v1472
      %1478 = vmatprep.subr.mxu0 0.0
      %1479 = vmatpush1.msra.mxu0 %v1473
      %1480 = vmatprep.subr.mxu0 0.0
      %1481 = vmatpush1.msra.mxu0 %v1474
      %1482 = vmatprep.subr.mxu0 0.0
      %1483 = vmatpush1.msra.mxu0 %v1475
      %1484 = vmatprep.subr.mxu0 0.0
      %1485 = vmatpush1.msra.mxu0 0.0
      %1486 = vmatprep.subr.mxu0 0.0
      %1487 = vmatpush1.msra.mxu0 0.0
      %1488 = vmatprep.subr.mxu0 0.0
      %1489 = vmatpush1.msra.mxu0 0.0
      %1490 = vmatprep.subr.mxu0 0.0
      %1491 = vmatpush1.msra.mxu0 0.0
      %1492 = vmatprep.subr.mxu0 0.0
      %1493 = vmatpush1.msra.mxu0 0.0
      %1494 = vmatprep.subr.mxu0 0.0
      %1495 = vmatpush1.msra.mxu0 0.0
      %1496 = vmatprep.subr.mxu0 0.0
      %1497 = vmatpush1.msra.mxu0 0.0
      %1498 = vmatprep.subr.mxu0 0.0
      %1499 = vmatpush1.msra.mxu0 0.0
      %1500 = vmatprep.subr.mxu0 0.0
      %1501 = vmatpush1.msra.mxu0 0.0
      %1502 = vmatprep.subr.mxu0 0.0
      %1503 = vmatpush1.msra.mxu0 0.0
      %1504 = vmatprep.subr.mxu0 0.0
      %1505 = vmatpush1.msra.mxu0 0.0
      %1506 = vmatprep.subr.mxu0 0.0
      %1507 = vmatpush1.msra.mxu0 0.0
      %1508 = vmatprep.subr.mxu0 0.0
      %1509 = vmatpush1.msra.mxu0 0.0
      %1510 = vmatprep.subr.mxu0 0.0
      %1511 = vmatpush1.msra.mxu0 0.0
      %1512 = vmatprep.subr.mxu0 0.0
      %1513 = vmatpush1.msra.mxu0 0.0
      %1514 = vmatprep.subr.mxu0 0.0
      %1515 = vmatpush1.msra.mxu0 0.0
      %1516 = vmatprep.subr.mxu0 0.0
      %1517 = vmatpush1.msra.mxu0 0.0
      %1518 = vmatprep.subr.mxu0 0.0
      %1519 = vmatpush1.msra.mxu0 0.0
      %1520 = vmatprep.subr.mxu0 0.0
      %1521 = vmatpush1.msra.mxu0 0.0
      %1522 = vmatprep.subr.mxu0 0.0
      %1523 = vmatpush1.msra.mxu0 0.0
      %1524 = vmatprep.subr.mxu0 0.0
      %1525 = vmatpush1.msra.mxu0 0.0
      %1526 = vmatprep.subr.mxu0 0.0
      %1527 = vmatpush1.msra.mxu0 0.0
      %1528 = vmatprep.subr.mxu0 0.0
      %1529 = vmatpush1.msra.mxu0 0.0
      %1530 = vmatprep.subr.mxu0 0.0
      %1531 = vmatpush1.msra.mxu0 0.0
      %1532 = vmatprep.subr.mxu0 0.0
      %1533 = vmatpush1.msra.mxu0 0.0
      %1534 = vmatprep.subr.mxu0 0.0
      %1535 = vmatpush1.msra.mxu0 0.0
      %1536 = vmatprep.subr.mxu0 0.0
      %1537 = vmatpush1.msra.mxu0 0.0
      %1538 = vmatprep.subr.mxu0 0.0
      %1539 = vmatpush1.msra.mxu0 0.0
      %1540 = vmatprep.mubr.f32.mxu0 0.0
      %1541 = vmatmul.mubr.f32.gmra.mrb[0].mxu0 %v923
      %v1542 = vpop.f32.mrb[0].mxu0
      %v1543 = vadd.f32 0.0, %v1542
      %v1544 = vpop.f32.mrb[0].mxu0
      %1545 = vmatprep.mubr.f32.mxu0 0.0
      %1546 = vmatmul.mubr.f32.gmra.mrb[0].mxu0 %v926
      %v1547 = vpop.f32.mrb[0].mxu0
      %v1548 = vadd.f32 0.0, %v1547
      %v1549 = vpop.f32.mrb[0].mxu0
      %1550 = vmatprep.mubr.f32.mxu0 0.0
      %1551 = vmatmul.mubr.f32.gmra.mrb[0].mxu0 %v929
      %v1552 = vpop.f32.mrb[0].mxu0
      %v1553 = vadd.f32 0.0, %v1552
      %v1554 = vpop.f32.mrb[0].mxu0
      %1555 = vmatprep.mubr.f32.mxu0 0.0
      %1556 = vmatmul.mubr.f32.gmra.mrb[0].mxu0 %v932
      %v1557 = vpop.f32.mrb[0].mxu0
      %v1558 = vadd.f32 0.0, %v1557
      %v1559 = vpop.f32.mrb[0].mxu0
      %1560 = vmatprep.mubr.f32.mxu0 0.0
      %1561 = vmatmul.mubr.f32.gmra.mrb[0].mxu0 %v935
      %v1562 = vpop.f32.mrb[0].mxu0
      %v1563 = vadd.f32 0.0, %v1562
      %v1564 = vpop.f32.mrb[0].mxu0
      %1565 = vmatprep.mubr.f32.mxu0 0.0
      %1566 = vmatmul.mubr.f32.gmra.mrb[0].mxu0 %v938
      %v1567 = vpop.f32.mrb[0].mxu0
      %v1568 = vadd.f32 0.0, %v1567
      %v1569 = vpop.f32.mrb[0].mxu0
      %1570 = vmatprep.mubr.f32.mxu0 0.0
      %1571 = vmatmul.mubr.f32.gmra.mrb[0].mxu0 %v941
      %v1572 = vpop.f32.mrb[0].mxu0
      %v1573 = vadd.f32 0.0, %v1572
      %v1574 = vpop.f32.mrb[0].mxu0
      %1575 = vmatprep.mubr.f32.mxu0 0.0
      %1576 = vmatmul.mubr.f32.gmra.mrb[0].mxu0 %v944
      %v1577 = vpop.f32.mrb[0].mxu0
      %v1578 = vadd.f32 0.0, %v1577
      %v1579 = vpop.f32.mrb[0].mxu0
      %1580 = vmatprep.mubr.f32.mxu0 0.0
      %1581 = vmatmul.mubr.f32.gmra.mrb[0].mxu0 %v947
      %v1582 = vpop.f32.mrb[0].mxu0
      %v1583 = vadd.f32 0.0, %v1582
      %v1584 = vpop.f32.mrb[0].mxu0
      %1585 = vmatprep.mubr.f32.mxu0 0.0
      %1586 = vmatmul.mubr.f32.gmra.mrb[0].mxu0 %v950
      %v1587 = vpop.f32.mrb[0].mxu0
      %v1588 = vadd.f32 0.0, %v1587
      %v1589 = vpop.f32.mrb[0].mxu0
      %1590 = vmatprep.mubr.f32.mxu0 0.0
      %1591 = vmatmul.mubr.f32.gmra.mrb[0].mxu0 %v953
      %v1592 = vpop.f32.mrb[0].mxu0
      %v1593 = vadd.f32 0.0, %v1592
      %v1594 = vpop.f32.mrb[0].mxu0
      %1595 = vmatprep.mubr.f32.mxu0 0.0
      %1596 = vmatmul.mubr.f32.gmra.mrb[0].mxu0 %v956
      %v1597 = vpop.f32.mrb[0].mxu0
      %v1598 = vadd.f32 0.0, %v1597
      %v1599 = vpop.f32.mrb[0].mxu0
      %1600 = vmatprep.mubr.f32.mxu0 0.0
      %1601 = vmatmul.mubr.f32.gmra.mrb[0].mxu0 %v959
      %v1602 = vpop.f32.mrb[0].mxu0
      %v1603 = vadd.f32 0.0, %v1602
      %v1604 = vpop.f32.mrb[0].mxu0
      %1605 = vmatprep.mubr.f32.mxu0 0.0
      %1606 = vmatmul.mubr.f32.gmra.mrb[0].mxu0 %v962
      %v1607 = vpop.f32.mrb[0].mxu0
      %v1608 = vadd.f32 0.0, %v1607
      %v1609 = vpop.f32.mrb[0].mxu0
      %1610 = vmatprep.mubr.f32.mxu0 0.0
      %1611 = vmatmul.mubr.f32.gmra.mrb[0].mxu0 %v965
      %v1612 = vpop.f32.mrb[0].mxu0
      %v1613 = vadd.f32 0.0, %v1612
      %v1614 = vpop.f32.mrb[0].mxu0
      %1615 = vmatprep.mubr.f32.mxu0 0.0
      %1616 = vmatmul.mubr.f32.gmra.mrb[0].mxu0 %v968
      %v1617 = vpop.f32.mrb[0].mxu0
      %v1618 = vadd.f32 0.0, %v1617
      %v1619 = vpop.f32.mrb[0].mxu0
      %1620 = vmatprep.mubr.f32.mxu0 0.0
      %1621 = vmatmul.mubr.f32.gmra.mrb[0].mxu0 %v971
      %v1622 = vpop.f32.mrb[0].mxu0
      %v1623 = vadd.f32 0.0, %v1622
      %v1624 = vpop.f32.mrb[0].mxu0
      %1625 = vmatprep.mubr.f32.mxu0 0.0
      %1626 = vmatmul.mubr.f32.gmra.mrb[0].mxu0 %v974
      %v1627 = vpop.f32.mrb[0].mxu0
      %v1628 = vadd.f32 0.0, %v1627
      %v1629 = vpop.f32.mrb[0].mxu0
      %1630 = vmatprep.mubr.f32.mxu0 0.0
      %1631 = vmatmul.mubr.f32.gmra.mrb[0].mxu0 %v977
      %v1632 = vpop.f32.mrb[0].mxu0
      %v1633 = vadd.f32 0.0, %v1632
      %v1634 = vpop.f32.mrb[0].mxu0
      %1635 = vmatprep.mubr.f32.mxu0 0.0
      %1636 = vmatmul.mubr.f32.gmra.mrb[0].mxu0 %v980
      %v1637 = vpop.f32.mrb[0].mxu0
      %v1638 = vadd.f32 0.0, %v1637
      %v1639 = vpop.f32.mrb[0].mxu0
      %1640 = vmatprep.mubr.f32.mxu0 0.0
      %1641 = vmatmul.mubr.f32.gmra.mrb[0].mxu0 %v983
      %v1642 = vpop.f32.mrb[0].mxu0
      %v1643 = vadd.f32 0.0, %v1642
      %v1644 = vpop.f32.mrb[0].mxu0
      %1645 = vmatprep.mubr.f32.mxu0 0.0
      %1646 = vmatmul.mubr.f32.gmra.mrb[0].mxu0 %v986
      %v1647 = vpop.f32.mrb[0].mxu0
      %v1648 = vadd.f32 0.0, %v1647
      %v1649 = vpop.f32.mrb[0].mxu0
      %1650 = vmatprep.mubr.f32.mxu0 0.0
      %1651 = vmatmul.mubr.f32.gmra.mrb[0].mxu0 %v989
      %v1652 = vpop.f32.mrb[0].mxu0
      %v1653 = vadd.f32 0.0, %v1652
      %v1654 = vpop.f32.mrb[0].mxu0
      %1655 = vmatprep.mubr.f32.mxu0 0.0
      %1656 = vmatmul.mubr.f32.gmra.mrb[0].mxu0 %v992
      %v1657 = vpop.f32.mrb[0].mxu0
      %v1658 = vadd.f32 0.0, %v1657
      %v1659 = vpop.f32.mrb[0].mxu0
      %1660 = vmatprep.mubr.f32.mxu0 0.0
      %1661 = vmatmul.mubr.f32.gmra.mrb[0].mxu0 %v995
      %v1662 = vpop.f32.mrb[0].mxu0
      %v1663 = vadd.f32 0.0, %v1662
      %v1664 = vpop.f32.mrb[0].mxu0
      %1665 = vmatprep.mubr.f32.mxu0 0.0
      %1666 = vmatmul.mubr.f32.gmra.mrb[0].mxu0 %v998
      %v1667 = vpop.f32.mrb[0].mxu0
      %v1668 = vadd.f32 0.0, %v1667
      %v1669 = vpop.f32.mrb[0].mxu0
      %1670 = vmatprep.mubr.f32.mxu0 0.0
      %1671 = vmatmul.mubr.f32.gmra.mrb[0].mxu0 %v1001
      %v1672 = vpop.f32.mrb[0].mxu0
      %v1673 = vadd.f32 0.0, %v1672
      %v1674 = vpop.f32.mrb[0].mxu0
      %1675 = vmatprep.mubr.f32.mxu0 0.0
      %1676 = vmatmul.mubr.f32.gmra.mrb[0].mxu0 %v1004
      %v1677 = vpop.f32.mrb[0].mxu0
      %v1678 = vadd.f32 0.0, %v1677
      %v1679 = vpop.f32.mrb[0].mxu0
      %1680 = vmatprep.mubr.f32.mxu0 0.0
      %1681 = vmatmul.mubr.f32.gmra.mrb[0].mxu0 %v1007
      %v1682 = vpop.f32.mrb[0].mxu0
      %v1683 = vadd.f32 0.0, %v1682
      %v1684 = vpop.f32.mrb[0].mxu0
      %1685 = vmatprep.mubr.f32.mxu0 0.0
      %1686 = vmatmul.mubr.f32.gmra.mrb[0].mxu0 %v1010
      %v1687 = vpop.f32.mrb[0].mxu0
      %v1688 = vadd.f32 0.0, %v1687
      %v1689 = vpop.f32.mrb[0].mxu0
      %1690 = vmatprep.mubr.f32.mxu0 0.0
      %1691 = vmatmul.mubr.f32.gmra.mrb[0].mxu0 %v1013
      %v1692 = vpop.f32.mrb[0].mxu0
      %v1693 = vadd.f32 0.0, %v1692
      %v1694 = vpop.f32.mrb[0].mxu0
      %1695 = vmatprep.mubr.f32.mxu0 0.0
      %1696 = vmatmul.mubr.f32.gmra.mrb[0].mxu0 %v1016
      %v1697 = vpop.f32.mrb[0].mxu0
      %v1698 = vadd.f32 0.0, %v1697
      %v1699 = vpop.f32.mrb[0].mxu0
      %1700 = vdwg.mxu0
      %v1701 = vld [vmem:[%s6] sm:$0xff]
      %v1702 = vld [vmem:[%s6 + $0x8] sm:$0xff]
      %v1703 = vld [vmem:[%s6 + $0x10] sm:$0xff]
      %v1704 = vld [vmem:[%s6 + $0x18] sm:$0xff]
      %1705 = vmatprep.subr.mxu0 0.0
      %1706 = vmatpush1.msra.mxu0 %v1701
      %1707 = vmatprep.subr.mxu0 0.0
      %1708 = vmatpush1.msra.mxu0 %v1702
      %1709 = vmatprep.subr.mxu0 0.0
      %1710 = vmatpush1.msra.mxu0 %v1703
      %1711 = vmatprep.subr.mxu0 0.0
      %1712 = vmatpush1.msra.mxu0 %v1704
      %1713 = vmatprep.subr.mxu0 0.0
      %1714 = vmatpush1.msra.mxu0 0.0
      %1715 = vmatprep.subr.mxu0 0.0
      %1716 = vmatpush1.msra.mxu0 0.0
      %1717 = vmatprep.subr.mxu0 0.0
      %1718 = vmatpush1.msra.mxu0 0.0
      %1719 = vmatprep.subr.mxu0 0.0
      %1720 = vmatpush1.msra.mxu0 0.0
      %1721 = vmatprep.subr.mxu0 0.0
      %1722 = vmatpush1.msra.mxu0 0.0
      %1723 = vmatprep.subr.mxu0 0.0
      %1724 = vmatpush1.msra.mxu0 0.0
      %1725 = vmatprep.subr.mxu0 0.0
      %1726 = vmatpush1.msra.mxu0 0.0
      %1727 = vmatprep.subr.mxu0 0.0
      %1728 = vmatpush1.msra.mxu0 0.0
      %1729 = vmatprep.subr.mxu0 0.0
      %1730 = vmatpush1.msra.mxu0 0.0
      %1731 = vmatprep.subr.mxu0 0.0
      %1732 = vmatpush1.msra.mxu0 0.0
      %1733 = vmatprep.subr.mxu0 0.0
      %1734 = vmatpush1.msra.mxu0 0.0
      %1735 = vmatprep.subr.mxu0 0.0
      %1736 = vmatpush1.msra.mxu0 0.0
      %1737 = vmatprep.subr.mxu0 0.0
      %1738 = vmatpush1.msra.mxu0 0.0
      %1739 = vmatprep.subr.mxu0 0.0
      %1740 = vmatpush1.msra.mxu0 0.0
      %1741 = vmatprep.subr.mxu0 0.0
      %1742 = vmatpush1.msra.mxu0 0.0
      %1743 = vmatprep.subr.mxu0 0.0
      %1744 = vmatpush1.msra.mxu0 0.0
      %1745 = vmatprep.subr.mxu0 0.0
      %1746 = vmatpush1.msra.mxu0 0.0
      %1747 = vmatprep.subr.mxu0 0.0
      %1748 = vmatpush1.msra.mxu0 0.0
      %1749 = vmatprep.subr.mxu0 0.0
      %1750 = vmatpush1.msra.mxu0 0.0
      %1751 = vmatprep.subr.mxu0 0.0
      %1752 = vmatpush1.msra.mxu0 0.0
      %1753 = vmatprep.subr.mxu0 0.0
      %1754 = vmatpush1.msra.mxu0 0.0
      %1755 = vmatprep.subr.mxu0 0.0
      %1756 = vmatpush1.msra.mxu0 0.0
      %1757 = vmatprep.subr.mxu0 0.0
      %1758 = vmatpush1.msra.mxu0 0.0
      %1759 = vmatprep.subr.mxu0 0.0
      %1760 = vmatpush1.msra.mxu0 0.0
      %1761 = vmatprep.subr.mxu0 0.0
      %1762 = vmatpush1.msra.mxu0 0.0
      %1763 = vmatprep.subr.mxu0 0.0
      %1764 = vmatpush1.msra.mxu0 0.0
      %1765 = vmatprep.subr.mxu0 0.0
      %1766 = vmatpush1.msra.mxu0 0.0
      %1767 = vmatprep.subr.mxu0 0.0
      %1768 = vmatpush1.msra.mxu0 0.0
      %1769 = vmatprep.mubr.f32.mxu0 0.0
      %1770 = vmatmul.mubr.f32.gmra.mrb[0].mxu0 %v923
      %v1771 = vpop.f32.mrb[0].mxu0
      %v1772 = vadd.f32 0.0, %v1771
      %v1773 = vpop.f32.mrb[0].mxu0
      %1774 = vmatprep.mubr.f32.mxu0 0.0
      %1775 = vmatmul.mubr.f32.gmra.mrb[0].mxu0 %v926
      %v1776 = vpop.f32.mrb[0].mxu0
      %v1777 = vadd.f32 0.0, %v1776
      %v1778 = vpop.f32.mrb[0].mxu0
      %1779 = vmatprep.mubr.f32.mxu0 0.0
      %1780 = vmatmul.mubr.f32.gmra.mrb[0].mxu0 %v929
      %v1781 = vpop.f32.mrb[0].mxu0
      %v1782 = vadd.f32 0.0, %v1781
      %v1783 = vpop.f32.mrb[0].mxu0
      %1784 = vmatprep.mubr.f32.mxu0 0.0
      %1785 = vmatmul.mubr.f32.gmra.mrb[0].mxu0 %v932
      %v1786 = vpop.f32.mrb[0].mxu0
      %v1787 = vadd.f32 0.0, %v1786
      %v1788 = vpop.f32.mrb[0].mxu0
      %1789 = vmatprep.mubr.f32.mxu0 0.0
      %1790 = vmatmul.mubr.f32.gmra.mrb[0].mxu0 %v935
      %v1791 = vpop.f32.mrb[0].mxu0
      %v1792 = vadd.f32 0.0, %v1791
      %v1793 = vpop.f32.mrb[0].mxu0
      %1794 = vmatprep.mubr.f32.mxu0 0.0
      %1795 = vmatmul.mubr.f32.gmra.mrb[0].mxu0 %v938
      %v1796 = vpop.f32.mrb[0].mxu0
      %v1797 = vadd.f32 0.0, %v1796
      %v1798 = vpop.f32.mrb[0].mxu0
      %1799 = vmatprep.mubr.f32.mxu0 0.0
      %1800 = vmatmul.mubr.f32.gmra.mrb[0].mxu0 %v941
      %v1801 = vpop.f32.mrb[0].mxu0
      %v1802 = vadd.f32 0.0, %v1801
      %v1803 = vpop.f32.mrb[0].mxu0
      %1804 = vmatprep.mubr.f32.mxu0 0.0
      %1805 = vmatmul.mubr.f32.gmra.mrb[0].mxu0 %v944
      %v1806 = vpop.f32.mrb[0].mxu0
      %v1807 = vadd.f32 0.0, %v1806
      %v1808 = vpop.f32.mrb[0].mxu0
      %1809 = vmatprep.mubr.f32.mxu0 0.0
      %1810 = vmatmul.mubr.f32.gmra.mrb[0].mxu0 %v947
      %v1811 = vpop.f32.mrb[0].mxu0
      %v1812 = vadd.f32 0.0, %v1811
      %v1813 = vpop.f32.mrb[0].mxu0
      %1814 = vmatprep.mubr.f32.mxu0 0.0
      %1815 = vmatmul.mubr.f32.gmra.mrb[0].mxu0 %v950
      %v1816 = vpop.f32.mrb[0].mxu0
      %v1817 = vadd.f32 0.0, %v1816
      %v1818 = vpop.f32.mrb[0].mxu0
      %1819 = vmatprep.mubr.f32.mxu0 0.0
      %1820 = vmatmul.mubr.f32.gmra.mrb[0].mxu0 %v953
      %v1821 = vpop.f32.mrb[0].mxu0
      %v1822 = vadd.f32 0.0, %v1821
      %v1823 = vpop.f32.mrb[0].mxu0
      %1824 = vmatprep.mubr.f32.mxu0 0.0
      %1825 = vmatmul.mubr.f32.gmra.mrb[0].mxu0 %v956
      %v1826 = vpop.f32.mrb[0].mxu0
      %v1827 = vadd.f32 0.0, %v1826
      %v1828 = vpop.f32.mrb[0].mxu0
      %1829 = vmatprep.mubr.f32.mxu0 0.0
      %1830 = vmatmul.mubr.f32.gmra.mrb[0].mxu0 %v959
      %v1831 = vpop.f32.mrb[0].mxu0
      %v1832 = vadd.f32 0.0, %v1831
      %v1833 = vpop.f32.mrb[0].mxu0
      %1834 = vmatprep.mubr.f32.mxu0 0.0
      %1835 = vmatmul.mubr.f32.gmra.mrb[0].mxu0 %v962
      %v1836 = vpop.f32.mrb[0].mxu0
      %v1837 = vadd.f32 0.0, %v1836
      %v1838 = vpop.f32.mrb[0].mxu0
      %1839 = vmatprep.mubr.f32.mxu0 0.0
      %1840 = vmatmul.mubr.f32.gmra.mrb[0].mxu0 %v965
      %v1841 = vpop.f32.mrb[0].mxu0
      %v1842 = vadd.f32 0.0, %v1841
      %v1843 = vpop.f32.mrb[0].mxu0
      %1844 = vmatprep.mubr.f32.mxu0 0.0
      %1845 = vmatmul.mubr.f32.gmra.mrb[0].mxu0 %v968
      %v1846 = vpop.f32.mrb[0].mxu0
      %v1847 = vadd.f32 0.0, %v1846
      %v1848 = vpop.f32.mrb[0].mxu0
      %1849 = vmatprep.mubr.f32.mxu0 0.0
      %1850 = vmatmul.mubr.f32.gmra.mrb[0].mxu0 %v971
      %v1851 = vpop.f32.mrb[0].mxu0
      %v1852 = vadd.f32 0.0, %v1851
      %v1853 = vpop.f32.mrb[0].mxu0
      %1854 = vmatprep.mubr.f32.mxu0 0.0
      %1855 = vmatmul.mubr.f32.gmra.mrb[0].mxu0 %v974
      %v1856 = vpop.f32.mrb[0].mxu0
      %v1857 = vadd.f32 0.0, %v1856
      %v1858 = vpop.f32.mrb[0].mxu0
      %1859 = vmatprep.mubr.f32.mxu0 0.0
      %1860 = vmatmul.mubr.f32.gmra.mrb[0].mxu0 %v977
      %v1861 = vpop.f32.mrb[0].mxu0
      %v1862 = vadd.f32 0.0, %v1861
      %v1863 = vpop.f32.mrb[0].mxu0
      %1864 = vmatprep.mubr.f32.mxu0 0.0
      %1865 = vmatmul.mubr.f32.gmra.mrb[0].mxu0 %v980
      %v1866 = vpop.f32.mrb[0].mxu0
      %v1867 = vadd.f32 0.0, %v1866
      %v1868 = vpop.f32.mrb[0].mxu0
      %1869 = vmatprep.mubr.f32.mxu0 0.0
      %1870 = vmatmul.mubr.f32.gmra.mrb[0].mxu0 %v983
      %v1871 = vpop.f32.mrb[0].mxu0
      %v1872 = vadd.f32 0.0, %v1871
      %v1873 = vpop.f32.mrb[0].mxu0
      %1874 = vmatprep.mubr.f32.mxu0 0.0
      %1875 = vmatmul.mubr.f32.gmra.mrb[0].mxu0 %v986
      %v1876 = vpop.f32.mrb[0].mxu0
      %v1877 = vadd.f32 0.0, %v1876
      %v1878 = vpop.f32.mrb[0].mxu0
      %1879 = vmatprep.mubr.f32.mxu0 0.0
      %1880 = vmatmul.mubr.f32.gmra.mrb[0].mxu0 %v989
      %v1881 = vpop.f32.mrb[0].mxu0
      %v1882 = vadd.f32 0.0, %v1881
      %v1883 = vpop.f32.mrb[0].mxu0
      %1884 = vmatprep.mubr.f32.mxu0 0.0
      %1885 = vmatmul.mubr.f32.gmra.mrb[0].mxu0 %v992
      %v1886 = vpop.f32.mrb[0].mxu0
      %v1887 = vadd.f32 0.0, %v1886
      %v1888 = vpop.f32.mrb[0].mxu0
      %1889 = vmatprep.mubr.f32.mxu0 0.0
      %1890 = vmatmul.mubr.f32.gmra.mrb[0].mxu0 %v995
      %v1891 = vpop.f32.mrb[0].mxu0
      %v1892 = vadd.f32 0.0, %v1891
      %v1893 = vpop.f32.mrb[0].mxu0
      %1894 = vmatprep.mubr.f32.mxu0 0.0
      %1895 = vmatmul.mubr.f32.gmra.mrb[0].mxu0 %v998
      %v1896 = vpop.f32.mrb[0].mxu0
      %v1897 = vadd.f32 0.0, %v1896
      %v1898 = vpop.f32.mrb[0].mxu0
      %1899 = vmatprep.mubr.f32.mxu0 0.0
      %1900 = vmatmul.mubr.f32.gmra.mrb[0].mxu0 %v1001
      %v1901 = vpop.f32.mrb[0].mxu0
      %v1902 = vadd.f32 0.0, %v1901
      %v1903 = vpop.f32.mrb[0].mxu0
      %1904 = vmatprep.mubr.f32.mxu0 0.0
      %1905 = vmatmul.mubr.f32.gmra.mrb[0].mxu0 %v1004
      %v1906 = vpop.f32.mrb[0].mxu0
      %v1907 = vadd.f32 0.0, %v1906
      %v1908 = vpop.f32.mrb[0].mxu0
      %1909 = vmatprep.mubr.f32.mxu0 0.0
      %1910 = vmatmul.mubr.f32.gmra.mrb[0].mxu0 %v1007
      %v1911 = vpop.f32.mrb[0].mxu0
      %v1912 = vadd.f32 0.0, %v1911
      %v1913 = vpop.f32.mrb[0].mxu0
      %1914 = vmatprep.mubr.f32.mxu0 0.0
      %1915 = vmatmul.mubr.f32.gmra.mrb[0].mxu0 %v1010
      %v1916 = vpop.f32.mrb[0].mxu0
      %v1917 = vadd.f32 0.0, %v1916
      %v1918 = vpop.f32.mrb[0].mxu0
      %1919 = vmatprep.mubr.f32.mxu0 0.0
      %1920 = vmatmul.mubr.f32.gmra.mrb[0].mxu0 %v1013
      %v1921 = vpop.f32.mrb[0].mxu0
      %v1922 = vadd.f32 0.0, %v1921
      %v1923 = vpop.f32.mrb[0].mxu0
      %1924 = vmatprep.mubr.f32.mxu0 0.0
      %1925 = vmatmul.mubr.f32.gmra.mrb[0].mxu0 %v1016
      %v1926 = vpop.f32.mrb[0].mxu0
      %v1927 = vadd.f32 0.0, %v1926
      %v1928 = vpop.f32.mrb[0].mxu0
      %1929 = vdwg.mxu0
      %v1930 = vld [vmem:[%s7] sm:$0xff]
      %v1931 = vld [vmem:[%s7 + $0x8] sm:$0xff]
      %v1932 = vld [vmem:[%s7 + $0x10] sm:$0xff]
      %v1933 = vld [vmem:[%s7 + $0x18] sm:$0xff]
      %1934 = vmatprep.subr.mxu0 0.0
      %1935 = vmatpush1.msra.mxu0 %v1930
      %1936 = vmatprep.subr.mxu0 0.0
      %1937 = vmatpush1.msra.mxu0 %v1931
      %1938 = vmatprep.subr.mxu0 0.0
      %1939 = vmatpush1.msra.mxu0 %v1932
      %1940 = vmatprep.subr.mxu0 0.0
      %1941 = vmatpush1.msra.mxu0 %v1933
      %1942 = vmatprep.subr.mxu0 0.0
      %1943 = vmatpush1.msra.mxu0 0.0
      %1944 = vmatprep.subr.mxu0 0.0
      %1945 = vmatpush1.msra.mxu0 0.0
      %1946 = vmatprep.subr.mxu0 0.0
      %1947 = vmatpush1.msra.mxu0 0.0
      %1948 = vmatprep.subr.mxu0 0.0
      %1949 = vmatpush1.msra.mxu0 0.0
      %1950 = vmatprep.subr.mxu0 0.0
      %1951 = vmatpush1.msra.mxu0 0.0
      %1952 = vmatprep.subr.mxu0 0.0
      %1953 = vmatpush1.msra.mxu0 0.0
      %1954 = vmatprep.subr.mxu0 0.0
      %1955 = vmatpush1.msra.mxu0 0.0
      %1956 = vmatprep.subr.mxu0 0.0
      %1957 = vmatpush1.msra.mxu0 0.0
      %1958 = vmatprep.subr.mxu0 0.0
      %1959 = vmatpush1.msra.mxu0 0.0
      %1960 = vmatprep.subr.mxu0 0.0
      %1961 = vmatpush1.msra.mxu0 0.0
      %1962 = vmatprep.subr.mxu0 0.0
      %1963 = vmatpush1.msra.mxu0 0.0
      %1964 = vmatprep.subr.mxu0 0.0
      %1965 = vmatpush1.msra.mxu0 0.0
      %1966 = vmatprep.subr.mxu0 0.0
      %1967 = vmatpush1.msra.mxu0 0.0
      %1968 = vmatprep.subr.mxu0 0.0
      %1969 = vmatpush1.msra.mxu0 0.0
      %1970 = vmatprep.subr.mxu0 0.0
      %1971 = vmatpush1.msra.mxu0 0.0
      %1972 = vmatprep.subr.mxu0 0.0
      %1973 = vmatpush1.msra.mxu0 0.0
      %1974 = vmatprep.subr.mxu0 0.0
      %1975 = vmatpush1.msra.mxu0 0.0
      %1976 = vmatprep.subr.mxu0 0.0
      %1977 = vmatpush1.msra.mxu0 0.0
      %1978 = vmatprep.subr.mxu0 0.0
      %1979 = vmatpush1.msra.mxu0 0.0
      %1980 = vmatprep.subr.mxu0 0.0
      %1981 = vmatpush1.msra.mxu0 0.0
      %1982 = vmatprep.subr.mxu0 0.0
      %1983 = vmatpush1.msra.mxu0 0.0
      %1984 = vmatprep.subr.mxu0 0.0
      %1985 = vmatpush1.msra.mxu0 0.0
      %1986 = vmatprep.subr.mxu0 0.0
      %1987 = vmatpush1.msra.mxu0 0.0
      %1988 = vmatprep.subr.mxu0 0.0
      %1989 = vmatpush1.msra.mxu0 0.0
      %1990 = vmatprep.subr.mxu0 0.0
      %1991 = vmatpush1.msra.mxu0 0.0
      %1992 = vmatprep.subr.mxu0 0.0
      %1993 = vmatpush1.msra.mxu0 0.0
      %1994 = vmatprep.subr.mxu0 0.0
      %1995 = vmatpush1.msra.mxu0 0.0
      %1996 = vmatprep.subr.mxu0 0.0
      %1997 = vmatpush1.msra.mxu0 0.0
      %1998 = vmatprep.mubr.f32.mxu0 0.0
      %1999 = vmatmul.mubr.f32.gmra.mrb[0].mxu0 %v923
      %v2000 = vpop.f32.mrb[0].mxu0
      %v2001 = vadd.f32 0.0, %v2000
      %v2002 = vpop.f32.mrb[0].mxu0
      %2003 = vmatprep.mubr.f32.mxu0 0.0
      %2004 = vmatmul.mubr.f32.gmra.mrb[0].mxu0 %v926
      %v2005 = vpop.f32.mrb[0].mxu0
      %v2006 = vadd.f32 0.0, %v2005
      %v2007 = vpop.f32.mrb[0].mxu0
      %2008 = vmatprep.mubr.f32.mxu0 0.0
      %2009 = vmatmul.mubr.f32.gmra.mrb[0].mxu0 %v929
      %v2010 = vpop.f32.mrb[0].mxu0
      %v2011 = vadd.f32 0.0, %v2010
      %v2012 = vpop.f32.mrb[0].mxu0
      %2013 = vmatprep.mubr.f32.mxu0 0.0
      %2014 = vmatmul.mubr.f32.gmra.mrb[0].mxu0 %v932
      %v2015 = vpop.f32.mrb[0].mxu0
      %v2016 = vadd.f32 0.0, %v2015
      %v2017 = vpop.f32.mrb[0].mxu0
      %2018 = vmatprep.mubr.f32.mxu0 0.0
      %2019 = vmatmul.mubr.f32.gmra.mrb[0].mxu0 %v935
      %v2020 = vpop.f32.mrb[0].mxu0
      %v2021 = vadd.f32 0.0, %v2020
      %v2022 = vpop.f32.mrb[0].mxu0
      %2023 = vmatprep.mubr.f32.mxu0 0.0
      %2024 = vmatmul.mubr.f32.gmra.mrb[0].mxu0 %v938
      %v2025 = vpop.f32.mrb[0].mxu0
      %v2026 = vadd.f32 0.0, %v2025
      %v2027 = vpop.f32.mrb[0].mxu0
      %2028 = vmatprep.mubr.f32.mxu0 0.0
      %2029 = vmatmul.mubr.f32.gmra.mrb[0].mxu0 %v941
      %v2030 = vpop.f32.mrb[0].mxu0
      %v2031 = vadd.f32 0.0, %v2030
      %v2032 = vpop.f32.mrb[0].mxu0
      %2033 = vmatprep.mubr.f32.mxu0 0.0
      %2034 = vmatmul.mubr.f32.gmra.mrb[0].mxu0 %v944
      %v2035 = vpop.f32.mrb[0].mxu0
      %v2036 = vadd.f32 0.0, %v2035
      %v2037 = vpop.f32.mrb[0].mxu0
      %2038 = vmatprep.mubr.f32.mxu0 0.0
      %2039 = vmatmul.mubr.f32.gmra.mrb[0].mxu0 %v947
      %v2040 = vpop.f32.mrb[0].mxu0
      %v2041 = vadd.f32 0.0, %v2040
      %v2042 = vpop.f32.mrb[0].mxu0
      %2043 = vmatprep.mubr.f32.mxu0 0.0
      %2044 = vmatmul.mubr.f32.gmra.mrb[0].mxu0 %v950
      %v2045 = vpop.f32.mrb[0].mxu0
      %v2046 = vadd.f32 0.0, %v2045
      %v2047 = vpop.f32.mrb[0].mxu0
      %2048 = vmatprep.mubr.f32.mxu0 0.0
      %2049 = vmatmul.mubr.f32.gmra.mrb[0].mxu0 %v953
      %v2050 = vpop.f32.mrb[0].mxu0
      %v2051 = vadd.f32 0.0, %v2050
      %v2052 = vpop.f32.mrb[0].mxu0
      %2053 = vmatprep.mubr.f32.mxu0 0.0
      %2054 = vmatmul.mubr.f32.gmra.mrb[0].mxu0 %v956
      %v2055 = vpop.f32.mrb[0].mxu0
      %v2056 = vadd.f32 0.0, %v2055
      %v2057 = vpop.f32.mrb[0].mxu0
      %2058 = vmatprep.mubr.f32.mxu0 0.0
      %2059 = vmatmul.mubr.f32.gmra.mrb[0].mxu0 %v959
      %v2060 = vpop.f32.mrb[0].mxu0
      %v2061 = vadd.f32 0.0, %v2060
      %v2062 = vpop.f32.mrb[0].mxu0
      %2063 = vmatprep.mubr.f32.mxu0 0.0
      %2064 = vmatmul.mubr.f32.gmra.mrb[0].mxu0 %v962
      %v2065 = vpop.f32.mrb[0].mxu0
      %v2066 = vadd.f32 0.0, %v2065
      %v2067 = vpop.f32.mrb[0].mxu0
      %2068 = vmatprep.mubr.f32.mxu0 0.0
      %2069 = vmatmul.mubr.f32.gmra.mrb[0].mxu0 %v965
      %v2070 = vpop.f32.mrb[0].mxu0
      %v2071 = vadd.f32 0.0, %v2070
      %v2072 = vpop.f32.mrb[0].mxu0
      %2073 = vmatprep.mubr.f32.mxu0 0.0
      %2074 = vmatmul.mubr.f32.gmra.mrb[0].mxu0 %v968
      %v2075 = vpop.f32.mrb[0].mxu0
      %v2076 = vadd.f32 0.0, %v2075
      %v2077 = vpop.f32.mrb[0].mxu0
      %2078 = vmatprep.mubr.f32.mxu0 0.0
      %2079 = vmatmul.mubr.f32.gmra.mrb[0].mxu0 %v971
      %v2080 = vpop.f32.mrb[0].mxu0
      %v2081 = vadd.f32 0.0, %v2080
      %v2082 = vpop.f32.mrb[0].mxu0
      %2083 = vmatprep.mubr.f32.mxu0 0.0
      %2084 = vmatmul.mubr.f32.gmra.mrb[0].mxu0 %v974
      %v2085 = vpop.f32.mrb[0].mxu0
      %v2086 = vadd.f32 0.0, %v2085
      %v2087 = vpop.f32.mrb[0].mxu0
      %2088 = vmatprep.mubr.f32.mxu0 0.0
      %2089 = vmatmul.mubr.f32.gmra.mrb[0].mxu0 %v977
      %v2090 = vpop.f32.mrb[0].mxu0
      %v2091 = vadd.f32 0.0, %v2090
      %v2092 = vpop.f32.mrb[0].mxu0
      %2093 = vmatprep.mubr.f32.mxu0 0.0
      %2094 = vmatmul.mubr.f32.gmra.mrb[0].mxu0 %v980
      %v2095 = vpop.f32.mrb[0].mxu0
      %v2096 = vadd.f32 0.0, %v2095
      %v2097 = vpop.f32.mrb[0].mxu0
      %2098 = vmatprep.mubr.f32.mxu0 0.0
      %2099 = vmatmul.mubr.f32.gmra.mrb[0].mxu0 %v983
      %v2100 = vpop.f32.mrb[0].mxu0
      %v2101 = vadd.f32 0.0, %v2100
      %v2102 = vpop.f32.mrb[0].mxu0
      %2103 = vmatprep.mubr.f32.mxu0 0.0
      %2104 = vmatmul.mubr.f32.gmra.mrb[0].mxu0 %v986
      %v2105 = vpop.f32.mrb[0].mxu0
      %v2106 = vadd.f32 0.0, %v2105
      %v2107 = vpop.f32.mrb[0].mxu0
      %2108 = vmatprep.mubr.f32.mxu0 0.0
      %2109 = vmatmul.mubr.f32.gmra.mrb[0].mxu0 %v989
      %v2110 = vpop.f32.mrb[0].mxu0
      %v2111 = vadd.f32 0.0, %v2110
      %v2112 = vpop.f32.mrb[0].mxu0
      %2113 = vmatprep.mubr.f32.mxu0 0.0
      %2114 = vmatmul.mubr.f32.gmra.mrb[0].mxu0 %v992
      %v2115 = vpop.f32.mrb[0].mxu0
      %v2116 = vadd.f32 0.0, %v2115
      %v2117 = vpop.f32.mrb[0].mxu0
      %2118 = vmatprep.mubr.f32.mxu0 0.0
      %2119 = vmatmul.mubr.f32.gmra.mrb[0].mxu0 %v995
      %v2120 = vpop.f32.mrb[0].mxu0
      %v2121 = vadd.f32 0.0, %v2120
      %v2122 = vpop.f32.mrb[0].mxu0
      %2123 = vmatprep.mubr.f32.mxu0 0.0
      %2124 = vmatmul.mubr.f32.gmra.mrb[0].mxu0 %v998
      %v2125 = vpop.f32.mrb[0].mxu0
      %v2126 = vadd.f32 0.0, %v2125
      %v2127 = vpop.f32.mrb[0].mxu0
      %2128 = vmatprep.mubr.f32.mxu0 0.0
      %2129 = vmatmul.mubr.f32.gmra.mrb[0].mxu0 %v1001
      %v2130 = vpop.f32.mrb[0].mxu0
      %v2131 = vadd.f32 0.0, %v2130
      %v2132 = vpop.f32.mrb[0].mxu0
      %2133 = vmatprep.mubr.f32.mxu0 0.0
      %2134 = vmatmul.mubr.f32.gmra.mrb[0].mxu0 %v1004
      %v2135 = vpop.f32.mrb[0].mxu0
      %v2136 = vadd.f32 0.0, %v2135
      %v2137 = vpop.f32.mrb[0].mxu0
      %2138 = vmatprep.mubr.f32.mxu0 0.0
      %2139 = vmatmul.mubr.f32.gmra.mrb[0].mxu0 %v1007
      %v2140 = vpop.f32.mrb[0].mxu0
      %v2141 = vadd.f32 0.0, %v2140
      %v2142 = vpop.f32.mrb[0].mxu0
      %2143 = vmatprep.mubr.f32.mxu0 0.0
      %2144 = vmatmul.mubr.f32.gmra.mrb[0].mxu0 %v1010
      %v2145 = vpop.f32.mrb[0].mxu0
      %v2146 = vadd.f32 0.0, %v2145
      %v2147 = vpop.f32.mrb[0].mxu0
      %2148 = vmatprep.mubr.f32.mxu0 0.0
      %2149 = vmatmul.mubr.f32.gmra.mrb[0].mxu0 %v1013
      %v2150 = vpop.f32.mrb[0].mxu0
      %v2151 = vadd.f32 0.0, %v2150
      %v2152 = vpop.f32.mrb[0].mxu0
      %2153 = vmatprep.mubr.f32.mxu0 0.0
      %2154 = vmatmul.mubr.f32.gmra.mrb[0].mxu0 %v1016
      %v2155 = vpop.f32.mrb[0].mxu0
      %v2156 = vadd.f32 0.0, %v2155
      %v2157 = vpop.f32.mrb[0].mxu0
      %2158 = vdwg.mxu0
      %v2159 = vxor.u32 %v1543, 2147483648
      %v2160 = vxor.u32 %v1548, 2147483648
      %v2161 = vxor.u32 %v1553, 2147483648
      %v2162 = vxor.u32 %v1558, 2147483648
      %v2163 = vxor.u32 %v1563, 2147483648
      %v2164 = vxor.u32 %v1568, 2147483648
      %v2165 = vxor.u32 %v1573, 2147483648
      %v2166 = vxor.u32 %v1578, 2147483648
      %v2167 = vxor.u32 %v1583, 2147483648
      %v2168 = vxor.u32 %v1588, 2147483648
      %v2169 = vxor.u32 %v1593, 2147483648
      %v2170 = vxor.u32 %v1598, 2147483648
      %v2171 = vxor.u32 %v1603, 2147483648
      %v2172 = vxor.u32 %v1608, 2147483648
      %v2173 = vxor.u32 %v1613, 2147483648
      %v2174 = vxor.u32 %v1618, 2147483648
      %v2175 = vxor.u32 %v1623, 2147483648
      %v2176 = vxor.u32 %v1628, 2147483648
      %v2177 = vxor.u32 %v1633, 2147483648
      %v2178 = vxor.u32 %v1638, 2147483648
      %v2179 = vxor.u32 %v1643, 2147483648
      %v2180 = vxor.u32 %v1648, 2147483648
      %v2181 = vxor.u32 %v1653, 2147483648
      %v2182 = vxor.u32 %v1658, 2147483648
      %v2183 = vxor.u32 %v1663, 2147483648
      %v2184 = vxor.u32 %v1668, 2147483648
      %v2185 = vxor.u32 %v1673, 2147483648
      %v2186 = vxor.u32 %v1678, 2147483648
      %v2187 = vxor.u32 %v1683, 2147483648
      %v2188 = vxor.u32 %v1688, 2147483648
      %v2189 = vxor.u32 %v1693, 2147483648
      %v2190 = vxor.u32 %v1698, 2147483648
      %v2191 = vmul.f32 %v2159, 1.442695
      %v2192 = vpow.pop %v2191
      %v2193 = vmul.f32 %v2160, 1.442695
      %v2194 = vpow.pop %v2193
      %v2195 = vmul.f32 %v2161, 1.442695
      %v2196 = vpow.pop %v2195
      %v2197 = vmul.f32 %v2162, 1.442695
      %v2198 = vpow.pop %v2197
      %v2199 = vmul.f32 %v2163, 1.442695
      %v2200 = vpow.pop %v2199
      %v2201 = vmul.f32 %v2164, 1.442695
      %v2202 = vpow.pop %v2201
      %v2203 = vmul.f32 %v2165, 1.442695
      %v2204 = vpow.pop %v2203
      %v2205 = vmul.f32 %v2166, 1.442695
      %v2206 = vpow.pop %v2205
      %v2207 = vmul.f32 %v2167, 1.442695
      %v2208 = vpow.pop %v2207
      %v2209 = vmul.f32 %v2168, 1.442695
      %v2210 = vpow.pop %v2209
      %v2211 = vmul.f32 %v2169, 1.442695
      %v2212 = vpow.pop %v2211
      %v2213 = vmul.f32 %v2170, 1.442695
      %v2214 = vpow.pop %v2213
      %v2215 = vmul.f32 %v2171, 1.442695
      %v2216 = vpow.pop %v2215
      %v2217 = vmul.f32 %v2172, 1.442695
      %v2218 = vpow.pop %v2217
      %v2219 = vmul.f32 %v2173, 1.442695
      %v2220 = vpow.pop %v2219
      %v2221 = vmul.f32 %v2174, 1.442695
      %v2222 = vpow.pop %v2221
      %v2223 = vmul.f32 %v2175, 1.442695
      %v2224 = vpow.pop %v2223
      %v2225 = vmul.f32 %v2176, 1.442695
      %v2226 = vpow.pop %v2225
      %v2227 = vmul.f32 %v2177, 1.442695
      %v2228 = vpow.pop %v2227
      %v2229 = vmul.f32 %v2178, 1.442695
      %v2230 = vpow.pop %v2229
      %v2231 = vmul.f32 %v2179, 1.442695
      %v2232 = vpow.pop %v2231
      %v2233 = vmul.f32 %v2180, 1.442695
      %v2234 = vpow.pop %v2233
      %v2235 = vmul.f32 %v2181, 1.442695
      %v2236 = vpow.pop %v2235
      %v2237 = vmul.f32 %v2182, 1.442695
      %v2238 = vpow.pop %v2237
      %v2239 = vmul.f32 %v2183, 1.442695
      %v2240 = vpow.pop %v2239
      %v2241 = vmul.f32 %v2184, 1.442695
      %v2242 = vpow.pop %v2241
      %v2243 = vmul.f32 %v2185, 1.442695
      %v2244 = vpow.pop %v2243
      %v2245 = vmul.f32 %v2186, 1.442695
      %v2246 = vpow.pop %v2245
      %v2247 = vmul.f32 %v2187, 1.442695
      %v2248 = vpow.pop %v2247
      %v2249 = vmul.f32 %v2188, 1.442695
      %v2250 = vpow.pop %v2249
      %v2251 = vmul.f32 %v2189, 1.442695
      %v2252 = vpow.pop %v2251
      %v2253 = vmul.f32 %v2190, 1.442695
      %v2254 = vpow.pop %v2253
      %v2255 = vadd.f32 %v2192, 1.0
      %v2256 = vadd.f32 %v2194, 1.0
      %v2257 = vadd.f32 %v2196, 1.0
      %v2258 = vadd.f32 %v2198, 1.0
      %v2259 = vadd.f32 %v2200, 1.0
      %v2260 = vadd.f32 %v2202, 1.0
      %v2261 = vadd.f32 %v2204, 1.0
      %v2262 = vadd.f32 %v2206, 1.0
      %v2263 = vadd.f32 %v2208, 1.0
      %v2264 = vadd.f32 %v2210, 1.0
      %v2265 = vadd.f32 %v2212, 1.0
      %v2266 = vadd.f32 %v2214, 1.0
      %v2267 = vadd.f32 %v2216, 1.0
      %v2268 = vadd.f32 %v2218, 1.0
      %v2269 = vadd.f32 %v2220, 1.0
      %v2270 = vadd.f32 %v2222, 1.0
      %v2271 = vadd.f32 %v2224, 1.0
      %v2272 = vadd.f32 %v2226, 1.0
      %v2273 = vadd.f32 %v2228, 1.0
      %v2274 = vadd.f32 %v2230, 1.0
      %v2275 = vadd.f32 %v2232, 1.0
      %v2276 = vadd.f32 %v2234, 1.0
      %v2277 = vadd.f32 %v2236, 1.0
      %v2278 = vadd.f32 %v2238, 1.0
      %v2279 = vadd.f32 %v2240, 1.0
      %v2280 = vadd.f32 %v2242, 1.0
      %v2281 = vadd.f32 %v2244, 1.0
      %v2282 = vadd.f32 %v2246, 1.0
      %v2283 = vadd.f32 %v2248, 1.0
      %v2284 = vadd.f32 %v2250, 1.0
      %v2285 = vadd.f32 %v2252, 1.0
      %v2286 = vadd.f32 %v2254, 1.0
      %v2287 = vrcp.pop %v2255
      %v2288 = vmul.f32 1.0, %v2287
      %v2289 = vrcp.pop %v2256
      %v2290 = vmul.f32 1.0, %v2289
      %v2291 = vrcp.pop %v2257
      %v2292 = vmul.f32 1.0, %v2291
      %v2293 = vrcp.pop %v2258
      %v2294 = vmul.f32 1.0, %v2293
      %v2295 = vrcp.pop %v2259
      %v2296 = vmul.f32 1.0, %v2295
      %v2297 = vrcp.pop %v2260
      %v2298 = vmul.f32 1.0, %v2297
      %v2299 = vrcp.pop %v2261
      %v2300 = vmul.f32 1.0, %v2299
      %v2301 = vrcp.pop %v2262
      %v2302 = vmul.f32 1.0, %v2301
      %v2303 = vrcp.pop %v2263
      %v2304 = vmul.f32 1.0, %v2303
      %v2305 = vrcp.pop %v2264
      %v2306 = vmul.f32 1.0, %v2305
      %v2307 = vrcp.pop %v2265
      %v2308 = vmul.f32 1.0, %v2307
      %v2309 = vrcp.pop %v2266
      %v2310 = vmul.f32 1.0, %v2309
      %v2311 = vrcp.pop %v2267
      %v2312 = vmul.f32 1.0, %v2311
      %v2313 = vrcp.pop %v2268
      %v2314 = vmul.f32 1.0, %v2313
      %v2315 = vrcp.pop %v2269
      %v2316 = vmul.f32 1.0, %v2315
      %v2317 = vrcp.pop %v2270
      %v2318 = vmul.f32 1.0, %v2317
      %v2319 = vrcp.pop %v2271
      %v2320 = vmul.f32 1.0, %v2319
      %v2321 = vrcp.pop %v2272
      %v2322 = vmul.f32 1.0, %v2321
      %v2323 = vrcp.pop %v2273
      %v2324 = vmul.f32 1.0, %v2323
      %v2325 = vrcp.pop %v2274
      %v2326 = vmul.f32 1.0, %v2325
      %v2327 = vrcp.pop %v2275
      %v2328 = vmul.f32 1.0, %v2327
      %v2329 = vrcp.pop %v2276
      %v2330 = vmul.f32 1.0, %v2329
      %v2331 = vrcp.pop %v2277
      %v2332 = vmul.f32 1.0, %v2331
      %v2333 = vrcp.pop %v2278
      %v2334 = vmul.f32 1.0, %v2333
      %v2335 = vrcp.pop %v2279
      %v2336 = vmul.f32 1.0, %v2335
      %v2337 = vrcp.pop %v2280
      %v2338 = vmul.f32 1.0, %v2337
      %v2339 = vrcp.pop %v2281
      %v2340 = vmul.f32 1.0, %v2339
      %v2341 = vrcp.pop %v2282
      %v2342 = vmul.f32 1.0, %v2341
      %v2343 = vrcp.pop %v2283
      %v2344 = vmul.f32 1.0, %v2343
      %v2345 = vrcp.pop %v2284
      %v2346 = vmul.f32 1.0, %v2345
      %v2347 = vrcp.pop %v2285
      %v2348 = vmul.f32 1.0, %v2347
      %v2349 = vrcp.pop %v2286
      %v2350 = vmul.f32 1.0, %v2349
      %v2351 = vmul.f32 %v1085, %v2288
      %v2352 = vmul.f32 %v1090, %v2290
      %v2353 = vmul.f32 %v1095, %v2292
      %v2354 = vmul.f32 %v1100, %v2294
      %v2355 = vmul.f32 %v1105, %v2296
      %v2356 = vmul.f32 %v1110, %v2298
      %v2357 = vmul.f32 %v1115, %v2300
      %v2358 = vmul.f32 %v1120, %v2302
      %v2359 = vmul.f32 %v1125, %v2304
      %v2360 = vmul.f32 %v1130, %v2306
      %v2361 = vmul.f32 %v1135, %v2308
      %v2362 = vmul.f32 %v1140, %v2310
      %v2363 = vmul.f32 %v1145, %v2312
      %v2364 = vmul.f32 %v1150, %v2314
      %v2365 = vmul.f32 %v1155, %v2316
      %v2366 = vmul.f32 %v1160, %v2318
      %v2367 = vmul.f32 %v1165, %v2320
      %v2368 = vmul.f32 %v1170, %v2322
      %v2369 = vmul.f32 %v1175, %v2324
      %v2370 = vmul.f32 %v1180, %v2326
      %v2371 = vmul.f32 %v1185, %v2328
      %v2372 = vmul.f32 %v1190, %v2330
      %v2373 = vmul.f32 %v1195, %v2332
      %v2374 = vmul.f32 %v1200, %v2334
      %v2375 = vmul.f32 %v1205, %v2336
      %v2376 = vmul.f32 %v1210, %v2338
      %v2377 = vmul.f32 %v1215, %v2340
      %v2378 = vmul.f32 %v1220, %v2342
      %v2379 = vmul.f32 %v1225, %v2344
      %v2380 = vmul.f32 %v1230, %v2346
      %v2381 = vmul.f32 %v1235, %v2348
      %v2382 = vmul.f32 %v1240, %v2350
      %2383 = vst.msk [vmem:[%s376] sm:$0xff] %vm422, %v2351
      %2384 = vst.msk [vmem:[%s376 + $0x8] sm:$0xff] %vm422, %v2352
      %2385 = vst.msk [vmem:[%s376 + $0x10] sm:$0xff] %vm422, %v2353
      %2386 = vst.msk [vmem:[%s376 + $0x18] sm:$0xff] %vm422, %v2354
      %2387 = vst.msk [vmem:[%s376 + $0x20] sm:$0xff] %vm422, %v2355
      %2388 = vst.msk [vmem:[%s376 + $0x28] sm:$0xff] %vm422, %v2356
      %2389 = vst.msk [vmem:[%s376 + $0x30] sm:$0xff] %vm422, %v2357
      %2390 = vst.msk [vmem:[%s376 + $0x38] sm:$0xff] %vm422, %v2358
      %2391 = vst.msk [vmem:[%s376 + $0x40] sm:$0xff] %vm422, %v2359
      %2392 = vst.msk [vmem:[%s376 + $0x48] sm:$0xff] %vm422, %v2360
      %2393 = vst.msk [vmem:[%s376 + $0x50] sm:$0xff] %vm422, %v2361
      %2394 = vst.msk [vmem:[%s376 + $0x58] sm:$0xff] %vm422, %v2362
      %2395 = vst.msk [vmem:[%s376 + $0x60] sm:$0xff] %vm422, %v2363
      %2396 = vst.msk [vmem:[%s376 + $0x68] sm:$0xff] %vm422, %v2364
      %2397 = vst.msk [vmem:[%s376 + $0x70] sm:$0xff] %vm422, %v2365
      %2398 = vst.msk [vmem:[%s376 + $0x78] sm:$0xff] %vm422, %v2366
      %2399 = vst.msk [vmem:[%s376 + $0x80] sm:$0xff] %vm422, %v2367
      %2400 = vst.msk [vmem:[%s376 + $0x88] sm:$0xff] %vm422, %v2368
      %2401 = vst.msk [vmem:[%s376 + $0x90] sm:$0xff] %vm422, %v2369
      %2402 = vst.msk [vmem:[%s376 + $0x98] sm:$0xff] %vm422, %v2370
      %2403 = vst.msk [vmem:[%s376 + $0xa0] sm:$0xff] %vm422, %v2371
      %2404 = vst.msk [vmem:[%s376 + $0xa8] sm:$0xff] %vm422, %v2372
      %2405 = vst.msk [vmem:[%s376 + $0xb0] sm:$0xff] %vm422, %v2373
      %2406 = vst.msk [vmem:[%s376 + $0xb8] sm:$0xff] %vm422, %v2374
      %2407 = vst.msk [vmem:[%s376 + $0xc0] sm:$0xff] %vm422, %v2375
      %2408 = vst.msk [vmem:[%s376 + $0xc8] sm:$0xff] %vm422, %v2376
      %2409 = vst.msk [vmem:[%s376 + $0xd0] sm:$0xff] %vm422, %v2377
      %2410 = vst.msk [vmem:[%s376 + $0xd8] sm:$0xff] %vm422, %v2378
      %2411 = vst.msk [vmem:[%s376 + $0xe0] sm:$0xff] %vm422, %v2379
      %2412 = vst.msk [vmem:[%s376 + $0xe8] sm:$0xff] %vm422, %v2380
      %2413 = vst.msk [vmem:[%s376 + $0xf0] sm:$0xff] %vm422, %v2381
      %2414 = vst.msk [vmem:[%s376 + $0xf8] sm:$0xff] %vm422, %v2382
      %v2415 = vxor.u32 %v1772, 2147483648
      %v2416 = vxor.u32 %v1777, 2147483648
      %v2417 = vxor.u32 %v1782, 2147483648
      %v2418 = vxor.u32 %v1787, 2147483648
      %v2419 = vxor.u32 %v1792, 2147483648
      %v2420 = vxor.u32 %v1797, 2147483648
      %v2421 = vxor.u32 %v1802, 2147483648
      %v2422 = vxor.u32 %v1807, 2147483648
      %v2423 = vxor.u32 %v1812, 2147483648
      %v2424 = vxor.u32 %v1817, 2147483648
      %v2425 = vxor.u32 %v1822, 2147483648
      %v2426 = vxor.u32 %v1827, 2147483648
      %v2427 = vxor.u32 %v1832, 2147483648
      %v2428 = vxor.u32 %v1837, 2147483648
      %v2429 = vxor.u32 %v1842, 2147483648
      %v2430 = vxor.u32 %v1847, 2147483648
      %v2431 = vxor.u32 %v1852, 2147483648
      %v2432 = vxor.u32 %v1857, 2147483648
      %v2433 = vxor.u32 %v1862, 2147483648
      %v2434 = vxor.u32 %v1867, 2147483648
      %v2435 = vxor.u32 %v1872, 2147483648
      %v2436 = vxor.u32 %v1877, 2147483648
      %v2437 = vxor.u32 %v1882, 2147483648
      %v2438 = vxor.u32 %v1887, 2147483648
      %v2439 = vxor.u32 %v1892, 2147483648
      %v2440 = vxor.u32 %v1897, 2147483648
      %v2441 = vxor.u32 %v1902, 2147483648
      %v2442 = vxor.u32 %v1907, 2147483648
      %v2443 = vxor.u32 %v1912, 2147483648
      %v2444 = vxor.u32 %v1917, 2147483648
      %v2445 = vxor.u32 %v1922, 2147483648
      %v2446 = vxor.u32 %v1927, 2147483648
      %v2447 = vmul.f32 %v2415, 1.442695
      %v2448 = vpow.pop %v2447
      %v2449 = vmul.f32 %v2416, 1.442695
      %v2450 = vpow.pop %v2449
      %v2451 = vmul.f32 %v2417, 1.442695
      %v2452 = vpow.pop %v2451
      %v2453 = vmul.f32 %v2418, 1.442695
      %v2454 = vpow.pop %v2453
      %v2455 = vmul.f32 %v2419, 1.442695
      %v2456 = vpow.pop %v2455
      %v2457 = vmul.f32 %v2420, 1.442695
      %v2458 = vpow.pop %v2457
      %v2459 = vmul.f32 %v2421, 1.442695
      %v2460 = vpow.pop %v2459
      %v2461 = vmul.f32 %v2422, 1.442695
      %v2462 = vpow.pop %v2461
      %v2463 = vmul.f32 %v2423, 1.442695
      %v2464 = vpow.pop %v2463
      %v2465 = vmul.f32 %v2424, 1.442695
      %v2466 = vpow.pop %v2465
      %v2467 = vmul.f32 %v2425, 1.442695
      %v2468 = vpow.pop %v2467
      %v2469 = vmul.f32 %v2426, 1.442695
      %v2470 = vpow.pop %v2469
      %v2471 = vmul.f32 %v2427, 1.442695
      %v2472 = vpow.pop %v2471
      %v2473 = vmul.f32 %v2428, 1.442695
      %v2474 = vpow.pop %v2473
      %v2475 = vmul.f32 %v2429, 1.442695
      %v2476 = vpow.pop %v2475
      %v2477 = vmul.f32 %v2430, 1.442695
      %v2478 = vpow.pop %v2477
      %v2479 = vmul.f32 %v2431, 1.442695
      %v2480 = vpow.pop %v2479
      %v2481 = vmul.f32 %v2432, 1.442695
      %v2482 = vpow.pop %v2481
      %v2483 = vmul.f32 %v2433, 1.442695
      %v2484 = vpow.pop %v2483
      %v2485 = vmul.f32 %v2434, 1.442695
      %v2486 = vpow.pop %v2485
      %v2487 = vmul.f32 %v2435, 1.442695
      %v2488 = vpow.pop %v2487
      %v2489 = vmul.f32 %v2436, 1.442695
      %v2490 = vpow.pop %v2489
      %v2491 = vmul.f32 %v2437, 1.442695
      %v2492 = vpow.pop %v2491
      %v2493 = vmul.f32 %v2438, 1.442695
      %v2494 = vpow.pop %v2493
      %v2495 = vmul.f32 %v2439, 1.442695
      %v2496 = vpow.pop %v2495
      %v2497 = vmul.f32 %v2440, 1.442695
      %v2498 = vpow.pop %v2497
      %v2499 = vmul.f32 %v2441, 1.442695
      %v2500 = vpow.pop %v2499
      %v2501 = vmul.f32 %v2442, 1.442695
      %v2502 = vpow.pop %v2501
      %v2503 = vmul.f32 %v2443, 1.442695
      %v2504 = vpow.pop %v2503
      %v2505 = vmul.f32 %v2444, 1.442695
      %v2506 = vpow.pop %v2505
      %v2507 = vmul.f32 %v2445, 1.442695
      %v2508 = vpow.pop %v2507
      %v2509 = vmul.f32 %v2446, 1.442695
      %v2510 = vpow.pop %v2509
      %v2511 = vadd.f32 %v2448, 1.0
      %v2512 = vadd.f32 %v2450, 1.0
      %v2513 = vadd.f32 %v2452, 1.0
      %v2514 = vadd.f32 %v2454, 1.0
      %v2515 = vadd.f32 %v2456, 1.0
      %v2516 = vadd.f32 %v2458, 1.0
      %v2517 = vadd.f32 %v2460, 1.0
      %v2518 = vadd.f32 %v2462, 1.0
      %v2519 = vadd.f32 %v2464, 1.0
      %v2520 = vadd.f32 %v2466, 1.0
      %v2521 = vadd.f32 %v2468, 1.0
      %v2522 = vadd.f32 %v2470, 1.0
      %v2523 = vadd.f32 %v2472, 1.0
      %v2524 = vadd.f32 %v2474, 1.0
      %v2525 = vadd.f32 %v2476, 1.0
      %v2526 = vadd.f32 %v2478, 1.0
      %v2527 = vadd.f32 %v2480, 1.0
      %v2528 = vadd.f32 %v2482, 1.0
      %v2529 = vadd.f32 %v2484, 1.0
      %v2530 = vadd.f32 %v2486, 1.0
      %v2531 = vadd.f32 %v2488, 1.0
      %v2532 = vadd.f32 %v2490, 1.0
      %v2533 = vadd.f32 %v2492, 1.0
      %v2534 = vadd.f32 %v2494, 1.0
      %v2535 = vadd.f32 %v2496, 1.0
      %v2536 = vadd.f32 %v2498, 1.0
      %v2537 = vadd.f32 %v2500, 1.0
      %v2538 = vadd.f32 %v2502, 1.0
      %v2539 = vadd.f32 %v2504, 1.0
      %v2540 = vadd.f32 %v2506, 1.0
      %v2541 = vadd.f32 %v2508, 1.0
      %v2542 = vadd.f32 %v2510, 1.0
      %v2543 = vrcp.pop %v2511
      %v2544 = vmul.f32 1.0, %v2543
      %v2545 = vrcp.pop %v2512
      %v2546 = vmul.f32 1.0, %v2545
      %v2547 = vrcp.pop %v2513
      %v2548 = vmul.f32 1.0, %v2547
      %v2549 = vrcp.pop %v2514
      %v2550 = vmul.f32 1.0, %v2549
      %v2551 = vrcp.pop %v2515
      %v2552 = vmul.f32 1.0, %v2551
      %v2553 = vrcp.pop %v2516
      %v2554 = vmul.f32 1.0, %v2553
      %v2555 = vrcp.pop %v2517
      %v2556 = vmul.f32 1.0, %v2555
      %v2557 = vrcp.pop %v2518
      %v2558 = vmul.f32 1.0, %v2557
      %v2559 = vrcp.pop %v2519
      %v2560 = vmul.f32 1.0, %v2559
      %v2561 = vrcp.pop %v2520
      %v2562 = vmul.f32 1.0, %v2561
      %v2563 = vrcp.pop %v2521
      %v2564 = vmul.f32 1.0, %v2563
      %v2565 = vrcp.pop %v2522
      %v2566 = vmul.f32 1.0, %v2565
      %v2567 = vrcp.pop %v2523
      %v2568 = vmul.f32 1.0, %v2567
      %v2569 = vrcp.pop %v2524
      %v2570 = vmul.f32 1.0, %v2569
      %v2571 = vrcp.pop %v2525
      %v2572 = vmul.f32 1.0, %v2571
      %v2573 = vrcp.pop %v2526
      %v2574 = vmul.f32 1.0, %v2573
      %v2575 = vrcp.pop %v2527
      %v2576 = vmul.f32 1.0, %v2575
      %v2577 = vrcp.pop %v2528
      %v2578 = vmul.f32 1.0, %v2577
      %v2579 = vrcp.pop %v2529
      %v2580 = vmul.f32 1.0, %v2579
      %v2581 = vrcp.pop %v2530
      %v2582 = vmul.f32 1.0, %v2581
      %v2583 = vrcp.pop %v2531
      %v2584 = vmul.f32 1.0, %v2583
      %v2585 = vrcp.pop %v2532
      %v2586 = vmul.f32 1.0, %v2585
      %v2587 = vrcp.pop %v2533
      %v2588 = vmul.f32 1.0, %v2587
      %v2589 = vrcp.pop %v2534
      %v2590 = vmul.f32 1.0, %v2589
      %v2591 = vrcp.pop %v2535
      %v2592 = vmul.f32 1.0, %v2591
      %v2593 = vrcp.pop %v2536
      %v2594 = vmul.f32 1.0, %v2593
      %v2595 = vrcp.pop %v2537
      %v2596 = vmul.f32 1.0, %v2595
      %v2597 = vrcp.pop %v2538
      %v2598 = vmul.f32 1.0, %v2597
      %v2599 = vrcp.pop %v2539
      %v2600 = vmul.f32 1.0, %v2599
      %v2601 = vrcp.pop %v2540
      %v2602 = vmul.f32 1.0, %v2601
      %v2603 = vrcp.pop %v2541
      %v2604 = vmul.f32 1.0, %v2603
      %v2605 = vrcp.pop %v2542
      %v2606 = vmul.f32 1.0, %v2605
      %v2607 = vmul.f32 %v1314, %v2544
      %v2608 = vmul.f32 %v1319, %v2546
      %v2609 = vmul.f32 %v1324, %v2548
      %v2610 = vmul.f32 %v1329, %v2550
      %v2611 = vmul.f32 %v1334, %v2552
      %v2612 = vmul.f32 %v1339, %v2554
      %v2613 = vmul.f32 %v1344, %v2556
      %v2614 = vmul.f32 %v1349, %v2558
      %v2615 = vmul.f32 %v1354, %v2560
      %v2616 = vmul.f32 %v1359, %v2562
      %v2617 = vmul.f32 %v1364, %v2564
      %v2618 = vmul.f32 %v1369, %v2566
      %v2619 = vmul.f32 %v1374, %v2568
      %v2620 = vmul.f32 %v1379, %v2570
      %v2621 = vmul.f32 %v1384, %v2572
      %v2622 = vmul.f32 %v1389, %v2574
      %v2623 = vmul.f32 %v1394, %v2576
      %v2624 = vmul.f32 %v1399, %v2578
      %v2625 = vmul.f32 %v1404, %v2580
      %v2626 = vmul.f32 %v1409, %v2582
      %v2627 = vmul.f32 %v1414, %v2584
      %v2628 = vmul.f32 %v1419, %v2586
      %v2629 = vmul.f32 %v1424, %v2588
      %v2630 = vmul.f32 %v1429, %v2590
      %v2631 = vmul.f32 %v1434, %v2592
      %v2632 = vmul.f32 %v1439, %v2594
      %v2633 = vmul.f32 %v1444, %v2596
      %v2634 = vmul.f32 %v1449, %v2598
      %v2635 = vmul.f32 %v1454, %v2600
      %v2636 = vmul.f32 %v1459, %v2602
      %v2637 = vmul.f32 %v1464, %v2604
      %v2638 = vmul.f32 %v1469, %v2606
      %2639 = vst.msk [vmem:[%s382] sm:$0xff] %vm422, %v2607
      %2640 = vst.msk [vmem:[%s382 + $0x8] sm:$0xff] %vm422, %v2608
      %2641 = vst.msk [vmem:[%s382 + $0x10] sm:$0xff] %vm422, %v2609
      %2642 = vst.msk [vmem:[%s382 + $0x18] sm:$0xff] %vm422, %v2610
      %2643 = vst.msk [vmem:[%s382 + $0x20] sm:$0xff] %vm422, %v2611
      %2644 = vst.msk [vmem:[%s382 + $0x28] sm:$0xff] %vm422, %v2612
      %2645 = vst.msk [vmem:[%s382 + $0x30] sm:$0xff] %vm422, %v2613
      %2646 = vst.msk [vmem:[%s382 + $0x38] sm:$0xff] %vm422, %v2614
      %2647 = vst.msk [vmem:[%s382 + $0x40] sm:$0xff] %vm422, %v2615
      %2648 = vst.msk [vmem:[%s382 + $0x48] sm:$0xff] %vm422, %v2616
      %2649 = vst.msk [vmem:[%s382 + $0x50] sm:$0xff] %vm422, %v2617
      %2650 = vst.msk [vmem:[%s382 + $0x58] sm:$0xff] %vm422, %v2618
      %2651 = vst.msk [vmem:[%s382 + $0x60] sm:$0xff] %vm422, %v2619
      %2652 = vst.msk [vmem:[%s382 + $0x68] sm:$0xff] %vm422, %v2620
      %2653 = vst.msk [vmem:[%s382 + $0x70] sm:$0xff] %vm422, %v2621
      %2654 = vst.msk [vmem:[%s382 + $0x78] sm:$0xff] %vm422, %v2622
      %2655 = vst.msk [vmem:[%s382 + $0x80] sm:$0xff] %vm422, %v2623
      %2656 = vst.msk [vmem:[%s382 + $0x88] sm:$0xff] %vm422, %v2624
      %2657 = vst.msk [vmem:[%s382 + $0x90] sm:$0xff] %vm422, %v2625
      %2658 = vst.msk [vmem:[%s382 + $0x98] sm:$0xff] %vm422, %v2626
      %2659 = vst.msk [vmem:[%s382 + $0xa0] sm:$0xff] %vm422, %v2627
      %2660 = vst.msk [vmem:[%s382 + $0xa8] sm:$0xff] %vm422, %v2628
      %2661 = vst.msk [vmem:[%s382 + $0xb0] sm:$0xff] %vm422, %v2629
      %2662 = vst.msk [vmem:[%s382 + $0xb8] sm:$0xff] %vm422, %v2630
      %2663 = vst.msk [vmem:[%s382 + $0xc0] sm:$0xff] %vm422, %v2631
      %2664 = vst.msk [vmem:[%s382 + $0xc8] sm:$0xff] %vm422, %v2632
      %2665 = vst.msk [vmem:[%s382 + $0xd0] sm:$0xff] %vm422, %v2633
      %2666 = vst.msk [vmem:[%s382 + $0xd8] sm:$0xff] %vm422, %v2634
      %2667 = vst.msk [vmem:[%s382 + $0xe0] sm:$0xff] %vm422, %v2635
      %2668 = vst.msk [vmem:[%s382 + $0xe8] sm:$0xff] %vm422, %v2636
      %2669 = vst.msk [vmem:[%s382 + $0xf0] sm:$0xff] %vm422, %v2637
      %2670 = vst.msk [vmem:[%s382 + $0xf8] sm:$0xff] %vm422, %v2638
      %v2671 = vxor.u32 %v2001, 2147483648
      %v2672 = vxor.u32 %v2006, 2147483648
      %v2673 = vxor.u32 %v2011, 2147483648
      %v2674 = vxor.u32 %v2016, 2147483648
      %v2675 = vxor.u32 %v2021, 2147483648
      %v2676 = vxor.u32 %v2026, 2147483648
      %v2677 = vxor.u32 %v2031, 2147483648
      %v2678 = vxor.u32 %v2036, 2147483648
      %v2679 = vxor.u32 %v2041, 2147483648
      %v2680 = vxor.u32 %v2046, 2147483648
      %v2681 = vxor.u32 %v2051, 2147483648
      %v2682 = vxor.u32 %v2056, 2147483648
      %v2683 = vxor.u32 %v2061, 2147483648
      %v2684 = vxor.u32 %v2066, 2147483648
      %v2685 = vxor.u32 %v2071, 2147483648
      %v2686 = vxor.u32 %v2076, 2147483648
      %v2687 = vxor.u32 %v2081, 2147483648
      %v2688 = vxor.u32 %v2086, 2147483648
      %v2689 = vxor.u32 %v2091, 2147483648
      %v2690 = vxor.u32 %v2096, 2147483648
      %v2691 = vxor.u32 %v2101, 2147483648
      %v2692 = vxor.u32 %v2106, 2147483648
      %v2693 = vxor.u32 %v2111, 2147483648
      %v2694 = vxor.u32 %v2116, 2147483648
      %v2695 = vxor.u32 %v2121, 2147483648
      %v2696 = vxor.u32 %v2126, 2147483648
      %v2697 = vxor.u32 %v2131, 2147483648
      %v2698 = vxor.u32 %v2136, 2147483648
      %v2699 = vxor.u32 %v2141, 2147483648
      %v2700 = vxor.u32 %v2146, 2147483648
      %v2701 = vxor.u32 %v2151, 2147483648
      %v2702 = vxor.u32 %v2156, 2147483648
      %v2703 = vmul.f32 %v2671, 1.442695
      %v2704 = vpow.pop %v2703
      %v2705 = vmul.f32 %v2672, 1.442695
      %v2706 = vpow.pop %v2705
      %v2707 = vmul.f32 %v2673, 1.442695
      %v2708 = vpow.pop %v2707
      %v2709 = vmul.f32 %v2674, 1.442695
      %v2710 = vpow.pop %v2709
      %v2711 = vmul.f32 %v2675, 1.442695
      %v2712 = vpow.pop %v2711
      %v2713 = vmul.f32 %v2676, 1.442695
      %v2714 = vpow.pop %v2713
      %v2715 = vmul.f32 %v2677, 1.442695
      %v2716 = vpow.pop %v2715
      %v2717 = vmul.f32 %v2678, 1.442695
      %v2718 = vpow.pop %v2717
      %v2719 = vmul.f32 %v2679, 1.442695
      %v2720 = vpow.pop %v2719
      %v2721 = vmul.f32 %v2680, 1.442695
      %v2722 = vpow.pop %v2721
      %v2723 = vmul.f32 %v2681, 1.442695
      %v2724 = vpow.pop %v2723
      %v2725 = vmul.f32 %v2682, 1.442695
      %v2726 = vpow.pop %v2725
      %v2727 = vmul.f32 %v2683, 1.442695
      %v2728 = vpow.pop %v2727
      %v2729 = vmul.f32 %v2684, 1.442695
      %v2730 = vpow.pop %v2729
      %v2731 = vmul.f32 %v2685, 1.442695
      %v2732 = vpow.pop %v2731
      %v2733 = vmul.f32 %v2686, 1.442695
      %v2734 = vpow.pop %v2733
      %v2735 = vmul.f32 %v2687, 1.442695
      %v2736 = vpow.pop %v2735
      %v2737 = vmul.f32 %v2688, 1.442695
      %v2738 = vpow.pop %v2737
      %v2739 = vmul.f32 %v2689, 1.442695
      %v2740 = vpow.pop %v2739
      %v2741 = vmul.f32 %v2690, 1.442695
      %v2742 = vpow.pop %v2741
      %v2743 = vmul.f32 %v2691, 1.442695
      %v2744 = vpow.pop %v2743
      %v2745 = vmul.f32 %v2692, 1.442695
      %v2746 = vpow.pop %v2745
      %v2747 = vmul.f32 %v2693, 1.442695
      %v2748 = vpow.pop %v2747
      %v2749 = vmul.f32 %v2694, 1.442695
      %v2750 = vpow.pop %v2749
      %v2751 = vmul.f32 %v2695, 1.442695
      %v2752 = vpow.pop %v2751
      %v2753 = vmul.f32 %v2696, 1.442695
      %v2754 = vpow.pop %v2753
      %v2755 = vmul.f32 %v2697, 1.442695
      %v2756 = vpow.pop %v2755
      %v2757 = vmul.f32 %v2698, 1.442695
      %v2758 = vpow.pop %v2757
      %v2759 = vmul.f32 %v2699, 1.442695
      %v2760 = vpow.pop %v2759
      %v2761 = vmul.f32 %v2700, 1.442695
      %v2762 = vpow.pop %v2761
      %v2763 = vmul.f32 %v2701, 1.442695
      %v2764 = vpow.pop %v2763
      %v2765 = vmul.f32 %v2702, 1.442695
      %v2766 = vpow.pop %v2765
      %v2767 = vadd.f32 %v2704, 1.0
      %v2768 = vadd.f32 %v2706, 1.0
      %v2769 = vadd.f32 %v2708, 1.0
      %v2770 = vadd.f32 %v2710, 1.0
      %v2771 = vadd.f32 %v2712, 1.0
      %v2772 = vadd.f32 %v2714, 1.0
      %v2773 = vadd.f32 %v2716, 1.0
      %v2774 = vadd.f32 %v2718, 1.0
      %v2775 = vadd.f32 %v2720, 1.0
      %v2776 = vadd.f32 %v2722, 1.0
      %v2777 = vadd.f32 %v2724, 1.0
      %v2778 = vadd.f32 %v2726, 1.0
      %v2779 = vadd.f32 %v2728, 1.0
      %v2780 = vadd.f32 %v2730, 1.0
      %v2781 = vadd.f32 %v2732, 1.0
      %v2782 = vadd.f32 %v2734, 1.0
      %v2783 = vadd.f32 %v2736, 1.0
      %v2784 = vadd.f32 %v2738, 1.0
      %v2785 = vadd.f32 %v2740, 1.0
      %v2786 = vadd.f32 %v2742, 1.0
      %v2787 = vadd.f32 %v2744, 1.0
      %v2788 = vadd.f32 %v2746, 1.0
      %v2789 = vadd.f32 %v2748, 1.0
      %v2790 = vadd.f32 %v2750, 1.0
      %v2791 = vadd.f32 %v2752, 1.0
      %v2792 = vadd.f32 %v2754, 1.0
      %v2793 = vadd.f32 %v2756, 1.0
      %v2794 = vadd.f32 %v2758, 1.0
      %v2795 = vadd.f32 %v2760, 1.0
      %v2796 = vadd.f32 %v2762, 1.0
      %v2797 = vadd.f32 %v2764, 1.0
      %v2798 = vadd.f32 %v2766, 1.0
      %v2799 = vrcp.pop %v2767
      %v2800 = vmul.f32 1.0, %v2799
      %v2801 = vrcp.pop %v2768
      %v2802 = vmul.f32 1.0, %v2801
      %v2803 = vrcp.pop %v2769
      %v2804 = vmul.f32 1.0, %v2803
      %v2805 = vrcp.pop %v2770
      %v2806 = vmul.f32 1.0, %v2805
      %v2807 = vrcp.pop %v2771
      %v2808 = vmul.f32 1.0, %v2807
      %v2809 = vrcp.pop %v2772
      %v2810 = vmul.f32 1.0, %v2809
      %v2811 = vrcp.pop %v2773
      %v2812 = vmul.f32 1.0, %v2811
      %v2813 = vrcp.pop %v2774
      %v2814 = vmul.f32 1.0, %v2813
      %v2815 = vrcp.pop %v2775
      %v2816 = vmul.f32 1.0, %v2815
      %v2817 = vrcp.pop %v2776
      %v2818 = vmul.f32 1.0, %v2817
      %v2819 = vrcp.pop %v2777
      %v2820 = vmul.f32 1.0, %v2819
      %v2821 = vrcp.pop %v2778
      %v2822 = vmul.f32 1.0, %v2821
      %v2823 = vrcp.pop %v2779
      %v2824 = vmul.f32 1.0, %v2823
      %v2825 = vrcp.pop %v2780
      %v2826 = vmul.f32 1.0, %v2825
      %v2827 = vrcp.pop %v2781
      %v2828 = vmul.f32 1.0, %v2827
      %v2829 = vrcp.pop %v2782
      %v2830 = vmul.f32 1.0, %v2829
      %v2831 = vrcp.pop %v2783
      %v2832 = vmul.f32 1.0, %v2831
      %v2833 = vrcp.pop %v2784
      %v2834 = vmul.f32 1.0, %v2833
      %v2835 = vrcp.pop %v2785
      %v2836 = vmul.f32 1.0, %v2835
      %v2837 = vrcp.pop %v2786
      %v2838 = vmul.f32 1.0, %v2837
      %v2839 = vrcp.pop %v2787
      %v2840 = vmul.f32 1.0, %v2839
      %v2841 = vrcp.pop %v2788
      %v2842 = vmul.f32 1.0, %v2841
      %v2843 = vrcp.pop %v2789
      %v2844 = vmul.f32 1.0, %v2843
      %v2845 = vrcp.pop %v2790
      %v2846 = vmul.f32 1.0, %v2845
      %v2847 = vrcp.pop %v2791
      %v2848 = vmul.f32 1.0, %v2847
      %v2849 = vrcp.pop %v2792
      %v2850 = vmul.f32 1.0, %v2849
      %v2851 = vrcp.pop %v2793
      %v2852 = vmul.f32 1.0, %v2851
      %v2853 = vrcp.pop %v2794
      %v2854 = vmul.f32 1.0, %v2853
      %v2855 = vrcp.pop %v2795
      %v2856 = vmul.f32 1.0, %v2855
      %v2857 = vrcp.pop %v2796
      %v2858 = vmul.f32 1.0, %v2857
      %v2859 = vrcp.pop %v2797
      %v2860 = vmul.f32 1.0, %v2859
      %v2861 = vrcp.pop %v2798
      %v2862 = vmul.f32 1.0, %v2861
      %2863 = vst.msk [vmem:[%s388] sm:$0xff] %vm422, %v2800
      %2864 = vst.msk [vmem:[%s388 + $0x8] sm:$0xff] %vm422, %v2802
      %2865 = vst.msk [vmem:[%s388 + $0x10] sm:$0xff] %vm422, %v2804
      %2866 = vst.msk [vmem:[%s388 + $0x18] sm:$0xff] %vm422, %v2806
      %2867 = vst.msk [vmem:[%s388 + $0x20] sm:$0xff] %vm422, %v2808
      %2868 = vst.msk [vmem:[%s388 + $0x28] sm:$0xff] %vm422, %v2810
      %2869 = vst.msk [vmem:[%s388 + $0x30] sm:$0xff] %vm422, %v2812
      %2870 = vst.msk [vmem:[%s388 + $0x38] sm:$0xff] %vm422, %v2814
      %2871 = vst.msk [vmem:[%s388 + $0x40] sm:$0xff] %vm422, %v2816
      %2872 = vst.msk [vmem:[%s388 + $0x48] sm:$0xff] %vm422, %v2818
      %2873 = vst.msk [vmem:[%s388 + $0x50] sm:$0xff] %vm422, %v2820
      %2874 = vst.msk [vmem:[%s388 + $0x58] sm:$0xff] %vm422, %v2822
      %2875 = vst.msk [vmem:[%s388 + $0x60] sm:$0xff] %vm422, %v2824
      %2876 = vst.msk [vmem:[%s388 + $0x68] sm:$0xff] %vm422, %v2826
      %2877 = vst.msk [vmem:[%s388 + $0x70] sm:$0xff] %vm422, %v2828
      %2878 = vst.msk [vmem:[%s388 + $0x78] sm:$0xff] %vm422, %v2830
      %2879 = vst.msk [vmem:[%s388 + $0x80] sm:$0xff] %vm422, %v2832
      %2880 = vst.msk [vmem:[%s388 + $0x88] sm:$0xff] %vm422, %v2834
      %2881 = vst.msk [vmem:[%s388 + $0x90] sm:$0xff] %vm422, %v2836
      %2882 = vst.msk [vmem:[%s388 + $0x98] sm:$0xff] %vm422, %v2838
      %2883 = vst.msk [vmem:[%s388 + $0xa0] sm:$0xff] %vm422, %v2840
      %2884 = vst.msk [vmem:[%s388 + $0xa8] sm:$0xff] %vm422, %v2842
      %2885 = vst.msk [vmem:[%s388 + $0xb0] sm:$0xff] %vm422, %v2844
      %2886 = vst.msk [vmem:[%s388 + $0xb8] sm:$0xff] %vm422, %v2846
      %2887 = vst.msk [vmem:[%s388 + $0xc0] sm:$0xff] %vm422, %v2848
      %2888 = vst.msk [vmem:[%s388 + $0xc8] sm:$0xff] %vm422, %v2850
      %2889 = vst.msk [vmem:[%s388 + $0xd0] sm:$0xff] %vm422, %v2852
      %2890 = vst.msk [vmem:[%s388 + $0xd8] sm:$0xff] %vm422, %v2854
      %2891 = vst.msk [vmem:[%s388 + $0xe0] sm:$0xff] %vm422, %v2856
      %2892 = vst.msk [vmem:[%s388 + $0xe8] sm:$0xff] %vm422, %v2858
      %2893 = vst.msk [vmem:[%s388 + $0xf0] sm:$0xff] %vm422, %v2860
      %2894 = vst.msk [vmem:[%s388 + $0xf8] sm:$0xff] %vm422, %v2862
      %s2895 = smul.u32 32, %s22
      %p2896 = scmp.lt.s32.totalorder %s2895, 63
      %s2897 = scalar_select %p2896, %s2895, 63
      %s2898 = smul.addr %s2897, 8
      %s2899 = scalar_lea.vmem %s8, %s2898
      %s2900 = smul.u32 32, %s22
      %p2901 = scmp.lt.s32.totalorder %s2900, 63
      %s2902 = scalar_select %p2901, %s2900, 63
      %s2903 = smul.addr %s2902, 8
      %s2904 = scalar_lea.vmem %s9, %s2903
      %s2905 = smul.u32 32, %s22
      %p2906 = scmp.lt.s32.totalorder %s2905, 63
      %s2907 = scalar_select %p2906, %s2905, 63
      %s2908 = smul.addr %s2907, 8
      %s2909 = scalar_lea.vmem %s10, %s2908
      // Predicated region
      $region53: #{tpu_custom_call.1} parent=51 // pred_check
        %p2910 = pneg %p213
      $region54: #{tpu_custom_call.1} parent=51 // pred_check_branch
        %2912 = sbr.rel (%p2910) target = $region56
      $region55: #{tpu_custom_call.1} parent=51 // pred_region
        %s2913 = smul.u32 32, %s22
      $region56: #{tpu_custom_call.1} parent=51 // pred_fallthru
        _
      // Predicated region
      $region57: #{tpu_custom_call.1} parent=51 // pred_check
        %p2914 = pneg %p239
      $region58: #{tpu_custom_call.1} parent=51 // pred_check_branch
        %2916 = sbr.rel (%p2914) target = $region60
      $region59: #{tpu_custom_call.1} parent=51 // pred_region
        %s2917 = smul.u32 32, %s22
      $region60: #{tpu_custom_call.1} parent=51 // pred_fallthru
        _
      // Predicated region
      $region61: #{tpu_custom_call.1} parent=51 // pred_check
        %p2918 = pneg %p265
      $region62: #{tpu_custom_call.1} parent=51 // pred_check_branch
        %2920 = sbr.rel (%p2918) target = $region64
      $region63: #{tpu_custom_call.1} parent=51 // pred_region
        %s2921 = smul.u32 32, %s22
      $region64: #{tpu_custom_call.1} parent=51 // pred_fallthru
        _
    $region52: #{tpu_custom_call.1} parent=5 // pred_fallthru
      _
    %p2922 = scmp.le.s32.totalorder 2, %s17
    // Predicated region
    $region65: #{tpu_custom_call.1} parent=5 // pred_check
      %p2923 = pneg %p2922
    $region66: #{tpu_custom_call.1} parent=5 // pred_check_branch
      %2925 = sbr.rel (%p2923) target = $region68
    $region67: #{tpu_custom_call.1} parent=5 // pred_region
      %s2926 = ssub.s32 %s17, 2
      // Predicated region
      $region69: #{tpu_custom_call.1} parent=67 // pred_check
        %p2927 = pneg %p219
      $region70: #{tpu_custom_call.1} parent=67 // pred_check_branch
        %2929 = sbr.rel (%p2927) target = $region72
      $region71: #{tpu_custom_call.1} parent=67 // pred_region
        %s2930 = smul.u32 32, %s23
        %p2931 = scmp.lt.s32.totalorder %s2930, 63
        %s2932 = scalar_select %p2931, %s2930, 63
        %s2933 = smul.addr %s2932, 8
        %s2934 = scalar_lea.vmem %s8, %s2933
      $region72: #{tpu_custom_call.1} parent=67 // pred_fallthru
        _
      // Predicated region
      $region73: #{tpu_custom_call.1} parent=67 // pred_check
        %p2935 = pneg %p245
      $region74: #{tpu_custom_call.1} parent=67 // pred_check_branch
        %2937 = sbr.rel (%p2935) target = $region76
      $region75: #{tpu_custom_call.1} parent=67 // pred_region
        %s2938 = smul.u32 32, %s23
        %p2939 = scmp.lt.s32.totalorder %s2938, 63
        %s2940 = scalar_select %p2939, %s2938, 63
        %s2941 = smul.addr %s2940, 8
        %s2942 = scalar_lea.vmem %s9, %s2941
      $region76: #{tpu_custom_call.1} parent=67 // pred_fallthru
        _
      // Predicated region
      $region77: #{tpu_custom_call.1} parent=67 // pred_check
        %p2943 = pneg %p271
      $region78: #{tpu_custom_call.1} parent=67 // pred_check_branch
        %2945 = sbr.rel (%p2943) target = $region80
      $region79: #{tpu_custom_call.1} parent=67 // pred_region
        %s2946 = smul.u32 32, %s23
        %p2947 = scmp.lt.s32.totalorder %s2946, 63
        %s2948 = scalar_select %p2947, %s2946, 63
        %s2949 = smul.addr %s2948, 8
        %s2950 = scalar_lea.vmem %s10, %s2949
      $region80: #{tpu_custom_call.1} parent=67 // pred_fallthru
        _
    $region68: #{tpu_custom_call.1} parent=5 // pred_fallthru
      _
  $region6: #{tpu_custom_call.1} parent=0 // loop_footer
    %s21 = sadd.s32 1, %s17
  $region7: #{tpu_custom_call.1} parent=0 // loop_footer_branch
    %16 = sbr.rel target = $region3
  $region8: #{tpu_custom_call.1} parent=0 // loop_exit
    _

</llo_original>
